<compile_context>
chip_gen: v5e
topology: v5e:2x2
jax: 0.10.0
libtpu: 0.0.40
codegen_flags: <defaults>
</compile_context>

<pallas_src>
import math
import jax
import jax.numpy as jnp
from jax import lax
from jax.experimental import pallas as pl
from jax.experimental.pallas import tpu as pltpu

# ---------------- small synthetic config ----------------
B = 2                      # batch
C = 4                      # channels (n_channels)
T = 64                     # time samples per channel
EMB = 32                   # emb_size
HEADS = 4
DEPTH = 2
TOKEN = 16                 # token_size == n_fft
OVERLAP = 0.5
HOP = int(TOKEN * OVERLAP)             # 8  (hop_length = token_size * overlap)
NFREQ = TOKEN // 2 + 1                 # 9  (onesided rFFT bins)
NFRAMES = (T - TOKEN) // HOP + 1       # 7  (center=False)
SEQ = C * NFRAMES                      # 28 tokens per batch
BC = B * C                             # 8 signal rows
M = B * SEQ                            # 56 tokens total (single fused block)
DH = EMB // HEADS
FF = 4 * EMB                           # 128
NCLS = 6                               # n_classes
LN_EPS = 1e-5
LANE = 128                             # lane-aligned padding for freq / real-imag


def _erf(z):
    # Abramowitz & Stegun 7.1.26 polynomial erf (|abs err| < 1.5e-7): f32-exact
    # parity with torch's erf GELU, built only from exp/mul/add/where so it
    # lowers on all TPU generations.
    a1, a2, a3, a4, a5 = 0.254829592, -0.284496736, 1.421413741, -1.453152027, 1.061405429
    p = 0.3275911
    sgn = jnp.where(z >= 0.0, 1.0, -1.0)
    az = jnp.abs(z)
    t = 1.0 / (1.0 + p * az)
    poly = ((((a5 * t + a4) * t + a3) * t + a2) * t + a1) * t
    return sgn * (1.0 - poly * jnp.exp(-az * az))


# ---------------- the single fused kernel (one grid step, everything VMEM) ----------------
def _biot_kernel(x_ref, dft_ref, mats_ref, tokb_ref, seg_ref, pool_ref,
                 wattn_ref, wff1_ref, wff2_ref, vec_ref, out_ref, frames_scr):
    # ---- in-kernel STFT framing (center=False, hop=HOP, rectangular window) ----
    # Frame-major token rows r = f*BC + b*C + c; per-token bias / segment / pool
    # tables are built on the host in the same order, and the transformer +
    # mean-pool are permutation invariant per batch, so this matches the torch
    # channel-major concatenation numerically.
    for f in range(NFRAMES):
        frames_scr[f * BC:(f + 1) * BC, :] = x_ref[:, f * HOP:f * HOP + TOKEN]
    frames = frames_scr[...]                                              # (M, TOKEN)

    # ---- |STFT| via one DFT matmul with lane-aligned real/imag halves ----
    ri = jnp.dot(frames, dft_ref[...], preferred_element_type=jnp.float32)  # (M, 2*LANE)
    real = ri[:, :LANE]
    imag = ri[:, LANE:]
    mag = jnp.sqrt(real * real + imag * imag)          # (M, LANE); lanes >= NFREQ are 0

    # ---- PatchFrequencyEmbedding projection + fused per-token bias ----
    w_proj = mats_ref[0:LANE, :]                       # (LANE, EMB), rows >= NFREQ zero
    x = jnp.dot(mag, w_proj, preferred_element_type=jnp.float32) + tokb_ref[...]

    mask2 = mats_ref[LANE:LANE + B * EMB, :]           # (B*EMB, EMB) batch-stacked head mask
    mask = mask2[0:EMB, :]                             # (EMB, EMB) block-diag head mask
    seg = seg_ref[...]                                 # (M, B*EMB) batch one-hot (expanded)
    scale = DH ** -0.5

    def layer_norm(v, g, b):
        mu = jnp.mean(v, axis=-1, keepdims=True)
        var = jnp.mean((v - mu) ** 2, axis=-1, keepdims=True)
        return (v - mu) * lax.rsqrt(var + LN_EPS) * g + b

    # ---- DEPTH transformer layers, statically unrolled ----
    for d in range(DEPTH):
        vec = vec_ref[d]                               # (8, FF) per-layer gain/bias table
        g1, b1 = vec[0:1, :EMB], vec[1:2, :EMB]
        bo = vec[2:3, :EMB]
        g2, b2 = vec[3:4, :EMB], vec[4:5, :EMB]
        bff1 = vec[5:6, :]
        bff2 = vec[6:7, :EMB]

        # global linear self-attention, batched over all 56 tokens via segment masks
        xn = layer_norm(x, g1, b1)
        q = jnp.dot(xn, wattn_ref[d, 0], preferred_element_type=jnp.float32)
        k = jnp.dot(xn, wattn_ref[d, 1], preferred_element_type=jnp.float32)
        v = jnp.dot(xn, wattn_ref[d, 2], preferred_element_type=jnp.float32)

        # softmax(q) per head over features: row-wide max is constant within every
        # head slice, so it is a valid shift; per-head sums via the block-diag mask.
        q_exp = jnp.exp(q - jnp.max(q, axis=-1, keepdims=True))
        q_den = jnp.dot(q_exp, mask, preferred_element_type=jnp.float32)
        q_sm = q_exp * pl.reciprocal(q_den, approx=True) * scale

        # softmax(k) over each batch's sequence: global column max is a valid shift;
        # per-batch denominators / contexts via the segment one-hot widening.
        k_exp = jnp.exp(k - jnp.max(k, axis=0, keepdims=True))
        k_wide = jnp.concatenate([k_exp] * B, axis=1) * seg              # (M, B*EMB)
        den = jnp.sum(k_wide, axis=0, keepdims=True)                     # (1, B*EMB)
        k_sm = k_wide * pl.reciprocal(den, approx=True)

        # per-batch per-head context, stacked along rows: (B*EMB, EMB)
        ctx = lax.dot_general(k_sm, v, (((0,), (0,)), ((), ())),
                              preferred_element_type=jnp.float32)
        q_wide = jnp.concatenate([q_sm] * B, axis=1) * seg               # (M, B*EMB)
        attn = jnp.dot(q_wide, ctx * mask2, preferred_element_type=jnp.float32)
        attn = jnp.dot(attn, wattn_ref[d, 3], preferred_element_type=jnp.float32) + bo
        x = x + attn

        # feed-forward (mult = 4), exact erf GELU
        xn2 = layer_norm(x, g2, b2)
        h1 = jnp.dot(xn2, wff1_ref[d], preferred_element_type=jnp.float32) + bff1
        h1 = 0.5 * h1 * (1.0 + _erf(h1 * (1.0 / math.sqrt(2.0))))
        x = x + jnp.dot(h1, wff2_ref[d], preferred_element_type=jnp.float32) + bff2

    # ---- per-batch mean pool (one pooling matmul) + ELU + classification head ----
    pooled = jnp.dot(pool_ref[...], x, preferred_element_type=jnp.float32)   # (B, EMB)
    act = jnp.where(pooled > 0, pooled,
                    jnp.exp(jnp.minimum(pooled, 0.0)) - 1.0)                 # ELU(alpha=1)
    w_cls = mats_ref[LANE + B * EMB:LANE + B * EMB + EMB, :]                 # (EMB, EMB), cols >= NCLS zero
    logits = jnp.dot(act, w_cls, preferred_element_type=jnp.float32)         # (B, EMB)
    bcls = vec_ref[0][7:8, :NCLS]
    out_ref[...] = logits[:, :NCLS] + bcls                                   # single (B, NCLS) store


def _fullspec(shape):
    zeros = (0,) * len(shape)
    return pl.BlockSpec(shape, lambda i, _z=zeros: _z)


def biot_classifier(x, p):
    """x: (B, C, T) float32 -> class logits (B, NCLS)."""
    x_sig = x.reshape(BC, T)   # leading-dim collapse only; no gather / data movement

    out = pl.pallas_call(
        _biot_kernel,
        out_shape=jax.ShapeDtypeStruct((B, NCLS), jnp.float32),
        grid_spec=pltpu.PrefetchScalarGridSpec(
            num_scalar_prefetch=0,
            grid=(1,),                                           # single fused step
            in_specs=[
                _fullspec((BC, T)),                              # raw signal
                _fullspec((TOKEN, 2 * LANE)),                    # DFT basis [cos | pad | -sin | pad]
                _fullspec((LANE + B * EMB + EMB, EMB)),          # [w_proj_pad; stacked head mask; w_cls_pad]
                _fullspec((M, EMB)),                             # fused per-token bias
                _fullspec((M, B * EMB)),                         # segment one-hot (lane-expanded)
                _fullspec((B, M)),                               # mean-pool matrix
                _fullspec((DEPTH, 4, EMB, EMB)),                 # Wq, Wk, Wv, Wo
                _fullspec((DEPTH, EMB, FF)),                     # FF W1
                _fullspec((DEPTH, FF, EMB)),                     # FF W2
                _fullspec((DEPTH, 8, FF)),                       # per-layer gains/biases (+ b_cls)
            ],
            out_specs=_fullspec((B, NCLS)),
            scratch_shapes=[pltpu.VMEM((M, TOKEN), jnp.float32)],
        ),
        compiler_params=pltpu.CompilerParams(dimension_semantics=("arbitrary",)),
    )(x_sig, p["dft"], p["mats32"], p["tok_bias"], p["seg"], p["pool"],
      p["w_attn"], p["w_ff1"], p["w_ff2"], p["vec"])
    return out


# ---------------- parameter / constant construction (deterministic) ----------------
def make_params():
    key = jax.random.PRNGKey(42)
    keys = iter(jax.random.split(key, 64))

    def nrm(shape, scale=0.05):
        return (scale * jax.random.normal(next(keys), shape)).astype(jnp.float32)

    # DFT basis for onesided STFT (rect window, center=False): real at lanes
    # [0, NFREQ), imag at [LANE, LANE+NFREQ), zeros elsewhere (lane-aligned halves).
    n = jnp.arange(TOKEN, dtype=jnp.float32)[:, None]
    kk = jnp.arange(NFREQ, dtype=jnp.float32)[None, :]
    ang = 2.0 * math.pi * n * kk / TOKEN
    dft = jnp.zeros((TOKEN, 2 * LANE), jnp.float32)
    dft = dft.at[:, :NFREQ].set(jnp.cos(ang))
    dft = dft.at[:, LANE:LANE + NFREQ].set(-jnp.sin(ang))

    # PatchFrequencyEmbedding projection, zero-padded to LANE input rows
    w_proj = nrm((NFREQ, EMB))
    w_proj_pad = jnp.zeros((LANE, EMB), jnp.float32).at[:NFREQ].set(w_proj)

    # block-diagonal head mask, tiled over batches (rows 0..EMB-1 == plain head mask)
    head_mask = jnp.kron(jnp.eye(HEADS, dtype=jnp.float32),
                         jnp.ones((DH, DH), jnp.float32))                 # (EMB, EMB)
    mask2 = jnp.tile(head_mask, (B, 1))                                   # (B*EMB, EMB)

    # classification head weight, lane-padded to EMB columns
    w_cls = nrm((EMB, NCLS))
    w_cls_pad = jnp.zeros((EMB, EMB), jnp.float32).at[:, :NCLS].set(w_cls)

    mats32 = jnp.concatenate([w_proj_pad, mask2, w_cls_pad], axis=0)      # (224, EMB)

    # sinusoidal positional encoding (per channel sequence, positions 0..NFRAMES-1)
    position = jnp.arange(NFRAMES, dtype=jnp.float32)[:, None]
    div_term = jnp.exp(jnp.arange(0, EMB, 2, dtype=jnp.float32) * (-(math.log(10000.0) / EMB)))
    pe = jnp.zeros((NFRAMES, EMB), jnp.float32)
    pe = pe.at[:, 0::2].set(jnp.sin(position * div_term))
    pe = pe.at[:, 1::2].set(jnp.cos(position * div_term))

    b_proj = nrm((1, EMB))                         # PatchFrequencyEmbedding bias
    ch_tok = nrm((C, EMB))                         # channel_tokens rows 0..C-1
    # fused per-token bias in frame-major row order r = f*B*C + b*C + c
    tok_bias = jnp.broadcast_to(
        b_proj[None, None, :, :] + pe[:, None, None, :] + ch_tok[None, None, :, :],
        (NFRAMES, B, C, EMB)).reshape(M, EMB).astype(jnp.float32)

    # batch segment tables in the same frame-major row order
    batch_ids = (jnp.arange(M) % (B * C)) // C
    S = jax.nn.one_hot(batch_ids, B, dtype=jnp.float32)                   # (M, B)
    seg = jnp.repeat(S, EMB, axis=1)                                      # (M, B*EMB)
    pool = (S.T / float(SEQ)).astype(jnp.float32)                         # (B, M)

    def stack(make_one):
        return jnp.stack([make_one() for _ in range(DEPTH)], axis=0)

    w_attn = stack(lambda: jnp.stack([nrm((EMB, EMB)) for _ in range(4)], axis=0))  # q,k,v,o
    w_ff1 = stack(lambda: nrm((EMB, FF)))
    w_ff2 = stack(lambda: nrm((FF, EMB)))

    # per-layer gain/bias table: rows [ln1_g, ln1_b, b_o, ln2_g, ln2_b, b_ff1, b_ff2, b_cls]
    vec = jnp.zeros((DEPTH, 8, FF), jnp.float32)
    vec = vec.at[:, 0, :EMB].set(1.0)   # ln1 gamma
    vec = vec.at[:, 3, :EMB].set(1.0)   # ln2 gamma
    # (attention/FF/classifier biases initialized to zero, as in the reference setup)

    return {
        "dft": dft, "mats32": mats32, "tok_bias": tok_bias, "seg": seg, "pool": pool,
        "w_attn": w_attn, "w_ff1": w_ff1, "w_ff2": w_ff2, "vec": vec,
    }


if __name__ == "__main__":
    params = make_params()
    x = jax.random.normal(jax.random.PRNGKey(0), (B, C, T), dtype=jnp.float32)

    fwd = jax.jit(biot_classifier)
    out = fwd(x, params)
    out = jax.block_until_ready(out)

    assert out.shape == (B, NCLS), out.shape
    assert bool(jnp.all(jnp.isfinite(out)))
    print("KERNEL_OK")
</pallas_src>

<mosaic_0001>
module attributes {stable_mosaic.version = 11 : i64} {
  func.func @_biot_kernel(%arg0: i32, %arg1: memref<8x64xf32, #tpu.memory_space<vmem>>, %arg2: memref<16x256xf32, #tpu.memory_space<vmem>>, %arg3: memref<224x32xf32, #tpu.memory_space<vmem>>, %arg4: memref<56x32xf32, #tpu.memory_space<vmem>>, %arg5: memref<56x64xf32, #tpu.memory_space<vmem>>, %arg6: memref<2x56xf32, #tpu.memory_space<vmem>>, %arg7: memref<2x4x32x32xf32, #tpu.memory_space<vmem>>, %arg8: memref<2x32x128xf32, #tpu.memory_space<vmem>>, %arg9: memref<2x128x32xf32, #tpu.memory_space<vmem>>, %arg10: memref<2x8x128xf32, #tpu.memory_space<vmem>>, %arg11: memref<2x6xf32, #tpu.memory_space<vmem>>, %arg12: memref<56x16xf32, #tpu.memory_space<vmem>>) attributes {dimension_semantics = [#tpu.dimension_semantics<arbitrary>], iteration_bounds = array<i64: 1>, scalar_prefetch = 0 : i64, scratch_operands = 1 : i64, tpu.core_type = #tpu.core_type<tc>, window_params = [{pipeline_mode = #tpu.pipeline_mode<synchronous>, transform_indices = @transform_0, window_bounds = array<i64: 8, 64>}, {pipeline_mode = #tpu.pipeline_mode<synchronous>, transform_indices = @transform_1, window_bounds = array<i64: 16, 256>}, {pipeline_mode = #tpu.pipeline_mode<synchronous>, transform_indices = @transform_2, window_bounds = array<i64: 224, 32>}, {pipeline_mode = #tpu.pipeline_mode<synchronous>, transform_indices = @transform_3, window_bounds = array<i64: 56, 32>}, {pipeline_mode = #tpu.pipeline_mode<synchronous>, transform_indices = @transform_4, window_bounds = array<i64: 56, 64>}, {pipeline_mode = #tpu.pipeline_mode<synchronous>, transform_indices = @transform_5, window_bounds = array<i64: 2, 56>}, {pipeline_mode = #tpu.pipeline_mode<synchronous>, transform_indices = @transform_6, window_bounds = array<i64: 2, 4, 32, 32>}, {pipeline_mode = #tpu.pipeline_mode<synchronous>, transform_indices = @transform_7, window_bounds = array<i64: 2, 32, 128>}, {pipeline_mode = #tpu.pipeline_mode<synchronous>, transform_indices = @transform_8, window_bounds = array<i64: 2, 128, 32>}, {pipeline_mode = #tpu.pipeline_mode<synchronous>, transform_indices = @transform_9, window_bounds = array<i64: 2, 8, 128>}, {pipeline_mode = #tpu.pipeline_mode<synchronous>, transform_indices = @transform_10, window_bounds = array<i64: 2, 6>}]} {
    %c0 = arith.constant 0 : index
    %c0_0 = arith.constant 0 : index
    %0 = vector.load %arg1[%c0, %c0_0] : memref<8x64xf32, #tpu.memory_space<vmem>>, vector<8x16xf32>
    %c0_1 = arith.constant 0 : index
    %c0_2 = arith.constant 0 : index
    %1 = vector.load %arg12[%c0_1, %c0_2] : memref<56x16xf32, #tpu.memory_space<vmem>>, vector<8x16xf32>
    tpu.vector_store %arg12[%c0_1, %c0_2], %0 {strides = array<i32>} : memref<56x16xf32, #tpu.memory_space<vmem>>, vector<8x16xf32>,
    %c0_3 = arith.constant 0 : index
    %c8 = arith.constant 8 : index
    %2 = vector.load %arg1[%c0_3, %c8] : memref<8x64xf32, #tpu.memory_space<vmem>>, vector<8x16xf32>
    %c8_4 = arith.constant 8 : index
    %c0_5 = arith.constant 0 : index
    %3 = vector.load %arg12[%c8_4, %c0_5] : memref<56x16xf32, #tpu.memory_space<vmem>>, vector<8x16xf32>
    tpu.vector_store %arg12[%c8_4, %c0_5], %2 {strides = array<i32>} : memref<56x16xf32, #tpu.memory_space<vmem>>, vector<8x16xf32>,
    %c0_6 = arith.constant 0 : index
    %c16 = arith.constant 16 : index
    %4 = vector.load %arg1[%c0_6, %c16] : memref<8x64xf32, #tpu.memory_space<vmem>>, vector<8x16xf32>
    %c16_7 = arith.constant 16 : index
    %c0_8 = arith.constant 0 : index
    %5 = vector.load %arg12[%c16_7, %c0_8] : memref<56x16xf32, #tpu.memory_space<vmem>>, vector<8x16xf32>
    tpu.vector_store %arg12[%c16_7, %c0_8], %4 {strides = array<i32>} : memref<56x16xf32, #tpu.memory_space<vmem>>, vector<8x16xf32>,
    %c0_9 = arith.constant 0 : index
    %c24 = arith.constant 24 : index
    %6 = vector.load %arg1[%c0_9, %c24] : memref<8x64xf32, #tpu.memory_space<vmem>>, vector<8x16xf32>
    %c24_10 = arith.constant 24 : index
    %c0_11 = arith.constant 0 : index
    %7 = vector.load %arg12[%c24_10, %c0_11] : memref<56x16xf32, #tpu.memory_space<vmem>>, vector<8x16xf32>
    tpu.vector_store %arg12[%c24_10, %c0_11], %6 {strides = array<i32>} : memref<56x16xf32, #tpu.memory_space<vmem>>, vector<8x16xf32>,
    %c0_12 = arith.constant 0 : index
    %c32 = arith.constant 32 : index
    %8 = vector.load %arg1[%c0_12, %c32] : memref<8x64xf32, #tpu.memory_space<vmem>>, vector<8x16xf32>
    %c32_13 = arith.constant 32 : index
    %c0_14 = arith.constant 0 : index
    %9 = vector.load %arg12[%c32_13, %c0_14] : memref<56x16xf32, #tpu.memory_space<vmem>>, vector<8x16xf32>
    tpu.vector_store %arg12[%c32_13, %c0_14], %8 {strides = array<i32>} : memref<56x16xf32, #tpu.memory_space<vmem>>, vector<8x16xf32>,
    %c0_15 = arith.constant 0 : index
    %c40 = arith.constant 40 : index
    %10 = vector.load %arg1[%c0_15, %c40] : memref<8x64xf32, #tpu.memory_space<vmem>>, vector<8x16xf32>
    %c40_16 = arith.constant 40 : index
    %c0_17 = arith.constant 0 : index
    %11 = vector.load %arg12[%c40_16, %c0_17] : memref<56x16xf32, #tpu.memory_space<vmem>>, vector<8x16xf32>
    tpu.vector_store %arg12[%c40_16, %c0_17], %10 {strides = array<i32>} : memref<56x16xf32, #tpu.memory_space<vmem>>, vector<8x16xf32>,
    %c0_18 = arith.constant 0 : index
    %c48 = arith.constant 48 : index
    %12 = vector.load %arg1[%c0_18, %c48] : memref<8x64xf32, #tpu.memory_space<vmem>>, vector<8x16xf32>
    %c48_19 = arith.constant 48 : index
    %c0_20 = arith.constant 0 : index
    %13 = vector.load %arg12[%c48_19, %c0_20] : memref<56x16xf32, #tpu.memory_space<vmem>>, vector<8x16xf32>
    tpu.vector_store %arg12[%c48_19, %c0_20], %12 {strides = array<i32>} : memref<56x16xf32, #tpu.memory_space<vmem>>, vector<8x16xf32>,
    %c0_21 = arith.constant 0 : index
    %c0_22 = arith.constant 0 : index
    %14 = vector.load %arg12[%c0_21, %c0_22] : memref<56x16xf32, #tpu.memory_space<vmem>>, vector<56x16xf32>
    %c0_23 = arith.constant 0 : index
    %c0_24 = arith.constant 0 : index
    %15 = vector.load %arg2[%c0_23, %c0_24] : memref<16x256xf32, #tpu.memory_space<vmem>>, vector<16x256xf32>
    %cst = arith.constant dense<0.000000e+00> : vector<56x256xf32>
    %16 = tpu.matmul %14, %15, %cst {dimension_numbers = #tpu.dot_dimension_numbers<[1], [0], [0], [1], [0, 0, 1, 1], [], []>} : vector<56x16xf32>, vector<16x256xf32>, vector<56x256xf32> -> vector<56x256xf32>
    %17 = vector.extract_strided_slice %16 {offsets = [0, 0], sizes = [56, 128], strides = [1, 1]} : vector<56x256xf32> to vector<56x128xf32>
    %18 = vector.extract_strided_slice %16 {offsets = [0, 128], sizes = [56, 128], strides = [1, 1]} : vector<56x256xf32> to vector<56x128xf32>
    %19 = arith.mulf %17, %17 : vector<56x128xf32>
    %20 = arith.mulf %18, %18 : vector<56x128xf32>
    %21 = arith.addf %19, %20 : vector<56x128xf32>
    %22 = math.sqrt %21 : vector<56x128xf32>
    %c0_25 = arith.constant 0 : index
    %c0_26 = arith.constant 0 : index
    %23 = vector.load %arg3[%c0_25, %c0_26] : memref<224x32xf32, #tpu.memory_space<vmem>>, vector<128x32xf32>
    %cst_27 = arith.constant dense<0.000000e+00> : vector<56x32xf32>
    %24 = tpu.matmul %22, %23, %cst_27 {dimension_numbers = #tpu.dot_dimension_numbers<[1], [0], [0], [1], [0, 0, 1, 1], [], []>} : vector<56x128xf32>, vector<128x32xf32>, vector<56x32xf32> -> vector<56x32xf32>
    %c0_28 = arith.constant 0 : index
    %c0_29 = arith.constant 0 : index
    %25 = vector.load %arg4[%c0_28, %c0_29] : memref<56x32xf32, #tpu.memory_space<vmem>>, vector<56x32xf32>
    %26 = arith.addf %24, %25 : vector<56x32xf32>
    %c128 = arith.constant 128 : index
    %c0_30 = arith.constant 0 : index
    %27 = vector.load %arg3[%c128, %c0_30] : memref<224x32xf32, #tpu.memory_space<vmem>>, vector<64x32xf32>
    %28 = vector.extract_strided_slice %27 {offsets = [0, 0], sizes = [32, 32], strides = [1, 1]} : vector<64x32xf32> to vector<32x32xf32>
    %c0_31 = arith.constant 0 : index
    %c0_32 = arith.constant 0 : index
    %29 = vector.load %arg5[%c0_31, %c0_32] : memref<56x64xf32, #tpu.memory_space<vmem>>, vector<56x64xf32>
    %c0_33 = arith.constant 0 : index
    %c0_34 = arith.constant 0 : index
    %c0_35 = arith.constant 0 : index
    %30 = vector.load %arg10[%c0_33, %c0_34, %c0_35] : memref<2x8x128xf32, #tpu.memory_space<vmem>>, vector<1x8x128xf32>
    %31 = vector.shape_cast %30 : vector<1x8x128xf32> to vector<8x128xf32>
    %32 = vector.extract_strided_slice %31 {offsets = [0, 0], sizes = [1, 32], strides = [1, 1]} : vector<8x128xf32> to vector<1x32xf32>
    %33 = vector.extract_strided_slice %31 {offsets = [1, 0], sizes = [1, 32], strides = [1, 1]} : vector<8x128xf32> to vector<1x32xf32>
    %34 = vector.extract_strided_slice %31 {offsets = [2, 0], sizes = [1, 32], strides = [1, 1]} : vector<8x128xf32> to vector<1x32xf32>
    %35 = vector.extract_strided_slice %31 {offsets = [3, 0], sizes = [1, 32], strides = [1, 1]} : vector<8x128xf32> to vector<1x32xf32>
    %36 = vector.extract_strided_slice %31 {offsets = [4, 0], sizes = [1, 32], strides = [1, 1]} : vector<8x128xf32> to vector<1x32xf32>
    %37 = vector.extract_strided_slice %31 {offsets = [5, 0], sizes = [1, 128], strides = [1, 1]} : vector<8x128xf32> to vector<1x128xf32>
    %38 = vector.extract_strided_slice %31 {offsets = [6, 0], sizes = [1, 32], strides = [1, 1]} : vector<8x128xf32> to vector<1x32xf32>
    %cst_36 = arith.constant dense<0.000000e+00> : vector<56xf32>
    %39 = vector.multi_reduction <add>, %26, %cst_36 [1] : vector<56x32xf32> to vector<56xf32>
    %40 = vector.shape_cast %39 : vector<56xf32> to vector<56x1xf32>
    %cst_37 = arith.constant 3.200000e+01 : f32
    %41 = vector.broadcast %cst_37 : f32 to vector<56x1xf32>
    %42 = arith.divf %40, %41 : vector<56x1xf32>
    %43 = vector.broadcast %42 : vector<56x1xf32> to vector<56x32xf32>
    %44 = arith.subf %26, %43 : vector<56x32xf32>
    %45 = arith.mulf %44, %44 : vector<56x32xf32>
    %cst_38 = arith.constant dense<0.000000e+00> : vector<56xf32>
    %46 = vector.multi_reduction <add>, %45, %cst_38 [1] : vector<56x32xf32> to vector<56xf32>
    %47 = vector.shape_cast %46 : vector<56xf32> to vector<56x1xf32>
    %cst_39 = arith.constant 3.200000e+01 : f32
    %48 = vector.broadcast %cst_39 : f32 to vector<56x1xf32>
    %49 = arith.divf %47, %48 : vector<56x1xf32>
    %50 = vector.broadcast %42 : vector<56x1xf32> to vector<56x32xf32>
    %51 = arith.subf %26, %50 : vector<56x32xf32>
    %cst_40 = arith.constant 9.99999974E-6 : f32
    %52 = vector.broadcast %cst_40 : f32 to vector<56x1xf32>
    %53 = arith.addf %49, %52 : vector<56x1xf32>
    %54 = math.rsqrt %53 : vector<56x1xf32>
    %55 = vector.broadcast %54 : vector<56x1xf32> to vector<56x32xf32>
    %56 = arith.mulf %51, %55 : vector<56x32xf32>
    %57 = vector.broadcast %32 : vector<1x32xf32> to vector<56x32xf32>
    %58 = arith.mulf %56, %57 : vector<56x32xf32>
    %59 = vector.broadcast %33 : vector<1x32xf32> to vector<56x32xf32>
    %60 = arith.addf %58, %59 : vector<56x32xf32>
    %c0_41 = arith.constant 0 : index
    %c0_42 = arith.constant 0 : index
    %c0_43 = arith.constant 0 : index
    %c0_44 = arith.constant 0 : index
    %61 = vector.load %arg7[%c0_41, %c0_42, %c0_43, %c0_44] : memref<2x4x32x32xf32, #tpu.memory_space<vmem>>, vector<1x1x32x32xf32>
    %62 = vector.shape_cast %61 : vector<1x1x32x32xf32> to vector<32x32xf32>
    %cst_45 = arith.constant dense<0.000000e+00> : vector<56x32xf32>
    %63 = tpu.matmul %60, %62, %cst_45 {dimension_numbers = #tpu.dot_dimension_numbers<[1], [0], [0], [1], [0, 0, 1, 1], [], []>} : vector<56x32xf32>, vector<32x32xf32>, vector<56x32xf32> -> vector<56x32xf32>
    %c0_46 = arith.constant 0 : index
    %c1 = arith.constant 1 : index
    %c0_47 = arith.constant 0 : index
    %c0_48 = arith.constant 0 : index
    %64 = vector.load %arg7[%c0_46, %c1, %c0_47, %c0_48] : memref<2x4x32x32xf32, #tpu.memory_space<vmem>>, vector<1x1x32x32xf32>
    %65 = vector.shape_cast %64 : vector<1x1x32x32xf32> to vector<32x32xf32>
    %cst_49 = arith.constant dense<0.000000e+00> : vector<56x32xf32>
    %66 = tpu.matmul %60, %65, %cst_49 {dimension_numbers = #tpu.dot_dimension_numbers<[1], [0], [0], [1], [0, 0, 1, 1], [], []>} : vector<56x32xf32>, vector<32x32xf32>, vector<56x32xf32> -> vector<56x32xf32>
    %c0_50 = arith.constant 0 : index
    %c2 = arith.constant 2 : index
    %c0_51 = arith.constant 0 : index
    %c0_52 = arith.constant 0 : index
    %67 = vector.load %arg7[%c0_50, %c2, %c0_51, %c0_52] : memref<2x4x32x32xf32, #tpu.memory_space<vmem>>, vector<1x1x32x32xf32>
    %68 = vector.shape_cast %67 : vector<1x1x32x32xf32> to vector<32x32xf32>
    %cst_53 = arith.constant dense<0.000000e+00> : vector<56x32xf32>
    %69 = tpu.matmul %60, %68, %cst_53 {dimension_numbers = #tpu.dot_dimension_numbers<[1], [0], [0], [1], [0, 0, 1, 1], [], []>} : vector<56x32xf32>, vector<32x32xf32>, vector<56x32xf32> -> vector<56x32xf32>
    %cst_54 = arith.constant dense<0xFF800000> : vector<56xf32>
    %70 = vector.multi_reduction <maximumf>, %63, %cst_54 [1] : vector<56x32xf32> to vector<56xf32>
    %71 = vector.shape_cast %70 : vector<56xf32> to vector<56x1xf32>
    %72 = vector.broadcast %71 : vector<56x1xf32> to vector<56x32xf32>
    %73 = arith.subf %63, %72 : vector<56x32xf32>
    %74 = math.exp %73 : vector<56x32xf32>
    %cst_55 = arith.constant dense<0.000000e+00> : vector<56x32xf32>
    %75 = tpu.matmul %74, %28, %cst_55 {dimension_numbers = #tpu.dot_dimension_numbers<[1], [0], [0], [1], [0, 0, 1, 1], [], []>} : vector<56x32xf32>, vector<32x32xf32>, vector<56x32xf32> -> vector<56x32xf32>
    %76 = tpu.reciprocal %75 {approx = true} : vector<56x32xf32> -> vector<56x32xf32>
    %77 = arith.mulf %74, %76 : vector<56x32xf32>
    %cst_56 = arith.constant 0.353553385 : f32
    %78 = vector.broadcast %cst_56 : f32 to vector<56x32xf32>
    %79 = arith.mulf %77, %78 : vector<56x32xf32>
    %cst_57 = arith.constant dense<0xFF800000> : vector<32xf32>
    %80 = vector.multi_reduction <maximumf>, %66, %cst_57 [0] : vector<56x32xf32> to vector<32xf32>
    %81 = vector.shape_cast %80 : vector<32xf32> to vector<1x32xf32>
    %82 = vector.broadcast %81 : vector<1x32xf32> to vector<56x32xf32>
    %83 = arith.subf %66, %82 : vector<56x32xf32>
    %84 = math.exp %83 : vector<56x32xf32>
    %85 = tpu.concatenate %84, %84 in 1 : vector<56x32xf32>, vector<56x32xf32> -> vector<56x64xf32>
    %86 = arith.mulf %85, %29 : vector<56x64xf32>
    %cst_58 = arith.constant dense<0.000000e+00> : vector<64xf32>
    %87 = vector.multi_reduction <add>, %86, %cst_58 [0] : vector<56x64xf32> to vector<64xf32>
    %88 = vector.shape_cast %87 : vector<64xf32> to vector<1x64xf32>
    %89 = tpu.reciprocal %88 {approx = true} : vector<1x64xf32> -> vector<1x64xf32>
    %90 = vector.broadcast %89 : vector<1x64xf32> to vector<56x64xf32>
    %91 = arith.mulf %86, %90 : vector<56x64xf32>
    %cst_59 = arith.constant dense<0.000000e+00> : vector<64x32xf32>
    %92 = tpu.matmul %91, %69, %cst_59 {dimension_numbers = #tpu.dot_dimension_numbers<[0], [0], [1], [1], [0, 1, 1, 1], [], []>} : vector<56x64xf32>, vector<56x32xf32>, vector<64x32xf32> -> vector<64x32xf32>
    %93 = tpu.concatenate %79, %79 in 1 : vector<56x32xf32>, vector<56x32xf32> -> vector<56x64xf32>
    %94 = arith.mulf %93, %29 : vector<56x64xf32>
    %95 = arith.mulf %92, %27 : vector<64x32xf32>
    %cst_60 = arith.constant dense<0.000000e+00> : vector<56x32xf32>
    %96 = tpu.matmul %94, %95, %cst_60 {dimension_numbers = #tpu.dot_dimension_numbers<[1], [0], [0], [1], [0, 0, 1, 1], [], []>} : vector<56x64xf32>, vector<64x32xf32>, vector<56x32xf32> -> vector<56x32xf32>
    %c0_61 = arith.constant 0 : index
    %c3 = arith.constant 3 : index
    %c0_62 = arith.constant 0 : index
    %c0_63 = arith.constant 0 : index
    %97 = vector.load %arg7[%c0_61, %c3, %c0_62, %c0_63] : memref<2x4x32x32xf32, #tpu.memory_space<vmem>>, vector<1x1x32x32xf32>
    %98 = vector.shape_cast %97 : vector<1x1x32x32xf32> to vector<32x32xf32>
    %cst_64 = arith.constant dense<0.000000e+00> : vector<56x32xf32>
    %99 = tpu.matmul %96, %98, %cst_64 {dimension_numbers = #tpu.dot_dimension_numbers<[1], [0], [0], [1], [0, 0, 1, 1], [], []>} : vector<56x32xf32>, vector<32x32xf32>, vector<56x32xf32> -> vector<56x32xf32>
    %100 = vector.broadcast %34 : vector<1x32xf32> to vector<56x32xf32>
    %101 = arith.addf %99, %100 : vector<56x32xf32>
    %102 = arith.addf %26, %101 : vector<56x32xf32>
    %cst_65 = arith.constant dense<0.000000e+00> : vector<56xf32>
    %103 = vector.multi_reduction <add>, %102, %cst_65 [1] : vector<56x32xf32> to vector<56xf32>
    %104 = vector.shape_cast %103 : vector<56xf32> to vector<56x1xf32>
    %cst_66 = arith.constant 3.200000e+01 : f32
    %105 = vector.broadcast %cst_66 : f32 to vector<56x1xf32>
    %106 = arith.divf %104, %105 : vector<56x1xf32>
    %107 = vector.broadcast %106 : vector<56x1xf32> to vector<56x32xf32>
    %108 = arith.subf %102, %107 : vector<56x32xf32>
    %109 = arith.mulf %108, %108 : vector<56x32xf32>
    %cst_67 = arith.constant dense<0.000000e+00> : vector<56xf32>
    %110 = vector.multi_reduction <add>, %109, %cst_67 [1] : vector<56x32xf32> to vector<56xf32>
    %111 = vector.shape_cast %110 : vector<56xf32> to vector<56x1xf32>
    %cst_68 = arith.constant 3.200000e+01 : f32
    %112 = vector.broadcast %cst_68 : f32 to vector<56x1xf32>
    %113 = arith.divf %111, %112 : vector<56x1xf32>
    %114 = vector.broadcast %106 : vector<56x1xf32> to vector<56x32xf32>
    %115 = arith.subf %102, %114 : vector<56x32xf32>
    %cst_69 = arith.constant 9.99999974E-6 : f32
    %116 = vector.broadcast %cst_69 : f32 to vector<56x1xf32>
    %117 = arith.addf %113, %116 : vector<56x1xf32>
    %118 = math.rsqrt %117 : vector<56x1xf32>
    %119 = vector.broadcast %118 : vector<56x1xf32> to vector<56x32xf32>
    %120 = arith.mulf %115, %119 : vector<56x32xf32>
    %121 = vector.broadcast %35 : vector<1x32xf32> to vector<56x32xf32>
    %122 = arith.mulf %120, %121 : vector<56x32xf32>
    %123 = vector.broadcast %36 : vector<1x32xf32> to vector<56x32xf32>
    %124 = arith.addf %122, %123 : vector<56x32xf32>
    %c0_70 = arith.constant 0 : index
    %c0_71 = arith.constant 0 : index
    %c0_72 = arith.constant 0 : index
    %125 = vector.load %arg8[%c0_70, %c0_71, %c0_72] : memref<2x32x128xf32, #tpu.memory_space<vmem>>, vector<1x32x128xf32>
    %126 = vector.shape_cast %125 : vector<1x32x128xf32> to vector<32x128xf32>
    %cst_73 = arith.constant dense<0.000000e+00> : vector<56x128xf32>
    %127 = tpu.matmul %124, %126, %cst_73 {dimension_numbers = #tpu.dot_dimension_numbers<[1], [0], [0], [1], [0, 0, 1, 1], [], []>} : vector<56x32xf32>, vector<32x128xf32>, vector<56x128xf32> -> vector<56x128xf32>
    %128 = vector.broadcast %37 : vector<1x128xf32> to vector<56x128xf32>
    %129 = arith.addf %127, %128 : vector<56x128xf32>
    %cst_74 = arith.constant 5.000000e-01 : f32
    %130 = vector.broadcast %cst_74 : f32 to vector<56x128xf32>
    %131 = arith.mulf %130, %129 : vector<56x128xf32>
    %cst_75 = arith.constant 0.707106769 : f32
    %132 = vector.broadcast %cst_75 : f32 to vector<56x128xf32>
    %133 = arith.mulf %129, %132 : vector<56x128xf32>
    %cst_76 = arith.constant 0.000000e+00 : f32
    %134 = vector.broadcast %cst_76 : f32 to vector<56x128xf32>
    %135 = arith.cmpf oge, %133, %134 : vector<56x128xf32>
    %cst_77 = arith.constant 1.000000e+00 : f32
    %cst_78 = arith.constant -1.000000e+00 : f32
    %136 = vector.broadcast %cst_77 : f32 to vector<56x128xf32>
    %137 = vector.broadcast %cst_78 : f32 to vector<56x128xf32>
    %138 = arith.select %135, %136, %137 : vector<56x128xi1>, vector<56x128xf32>
    %139 = math.absf %133 : vector<56x128xf32>
    %cst_79 = arith.constant 0.327591091 : f32
    %140 = vector.broadcast %cst_79 : f32 to vector<56x128xf32>
    %141 = arith.mulf %140, %139 : vector<56x128xf32>
    %cst_80 = arith.constant 1.000000e+00 : f32
    %142 = vector.broadcast %cst_80 : f32 to vector<56x128xf32>
    %143 = arith.addf %142, %141 : vector<56x128xf32>
    %cst_81 = arith.constant 1.000000e+00 : f32
    %144 = vector.broadcast %cst_81 : f32 to vector<56x128xf32>
    %145 = arith.divf %144, %143 : vector<56x128xf32>
    %cst_82 = arith.constant 1.06140542 : f32
    %146 = vector.broadcast %cst_82 : f32 to vector<56x128xf32>
    %147 = arith.mulf %146, %145 : vector<56x128xf32>
    %cst_83 = arith.constant -1.45315206 : f32
    %148 = vector.broadcast %cst_83 : f32 to vector<56x128xf32>
    %149 = arith.addf %147, %148 : vector<56x128xf32>
    %150 = arith.mulf %149, %145 : vector<56x128xf32>
    %cst_84 = arith.constant 1.42141378 : f32
    %151 = vector.broadcast %cst_84 : f32 to vector<56x128xf32>
    %152 = arith.addf %150, %151 : vector<56x128xf32>
    %153 = arith.mulf %152, %145 : vector<56x128xf32>
    %cst_85 = arith.constant -0.284496725 : f32
    %154 = vector.broadcast %cst_85 : f32 to vector<56x128xf32>
    %155 = arith.addf %153, %154 : vector<56x128xf32>
    %156 = arith.mulf %155, %145 : vector<56x128xf32>
    %cst_86 = arith.constant 0.254829586 : f32
    %157 = vector.broadcast %cst_86 : f32 to vector<56x128xf32>
    %158 = arith.addf %156, %157 : vector<56x128xf32>
    %159 = arith.mulf %158, %145 : vector<56x128xf32>
    %cst_87 = arith.constant 0.000000e+00 : f32
    %160 = vector.broadcast %cst_87 : f32 to vector<56x128xf32>
    %161 = arith.subf %160, %139 : vector<56x128xf32>
    %162 = arith.mulf %161, %139 : vector<56x128xf32>
    %163 = math.exp %162 : vector<56x128xf32>
    %164 = arith.mulf %159, %163 : vector<56x128xf32>
    %cst_88 = arith.constant 1.000000e+00 : f32
    %165 = vector.broadcast %cst_88 : f32 to vector<56x128xf32>
    %166 = arith.subf %165, %164 : vector<56x128xf32>
    %167 = arith.mulf %138, %166 : vector<56x128xf32>
    %cst_89 = arith.constant 1.000000e+00 : f32
    %168 = vector.broadcast %cst_89 : f32 to vector<56x128xf32>
    %169 = arith.addf %168, %167 : vector<56x128xf32>
    %170 = arith.mulf %131, %169 : vector<56x128xf32>
    %c0_90 = arith.constant 0 : index
    %c0_91 = arith.constant 0 : index
    %c0_92 = arith.constant 0 : index
    %171 = vector.load %arg9[%c0_90, %c0_91, %c0_92] : memref<2x128x32xf32, #tpu.memory_space<vmem>>, vector<1x128x32xf32>
    %172 = vector.shape_cast %171 : vector<1x128x32xf32> to vector<128x32xf32>
    %cst_93 = arith.constant dense<0.000000e+00> : vector<56x32xf32>
    %173 = tpu.matmul %170, %172, %cst_93 {dimension_numbers = #tpu.dot_dimension_numbers<[1], [0], [0], [1], [0, 0, 1, 1], [], []>} : vector<56x128xf32>, vector<128x32xf32>, vector<56x32xf32> -> vector<56x32xf32>
    %174 = arith.addf %102, %173 : vector<56x32xf32>
    %175 = vector.broadcast %38 : vector<1x32xf32> to vector<56x32xf32>
    %176 = arith.addf %174, %175 : vector<56x32xf32>
    %c1_94 = arith.constant 1 : index
    %c0_95 = arith.constant 0 : index
    %c0_96 = arith.constant 0 : index
    %177 = vector.load %arg10[%c1_94, %c0_95, %c0_96] : memref<2x8x128xf32, #tpu.memory_space<vmem>>, vector<1x8x128xf32>
    %178 = vector.shape_cast %177 : vector<1x8x128xf32> to vector<8x128xf32>
    %179 = vector.extract_strided_slice %178 {offsets = [0, 0], sizes = [1, 32], strides = [1, 1]} : vector<8x128xf32> to vector<1x32xf32>
    %180 = vector.extract_strided_slice %178 {offsets = [1, 0], sizes = [1, 32], strides = [1, 1]} : vector<8x128xf32> to vector<1x32xf32>
    %181 = vector.extract_strided_slice %178 {offsets = [2, 0], sizes = [1, 32], strides = [1, 1]} : vector<8x128xf32> to vector<1x32xf32>
    %182 = vector.extract_strided_slice %178 {offsets = [3, 0], sizes = [1, 32], strides = [1, 1]} : vector<8x128xf32> to vector<1x32xf32>
    %183 = vector.extract_strided_slice %178 {offsets = [4, 0], sizes = [1, 32], strides = [1, 1]} : vector<8x128xf32> to vector<1x32xf32>
    %184 = vector.extract_strided_slice %178 {offsets = [5, 0], sizes = [1, 128], strides = [1, 1]} : vector<8x128xf32> to vector<1x128xf32>
    %185 = vector.extract_strided_slice %178 {offsets = [6, 0], sizes = [1, 32], strides = [1, 1]} : vector<8x128xf32> to vector<1x32xf32>
    %cst_97 = arith.constant dense<0.000000e+00> : vector<56xf32>
    %186 = vector.multi_reduction <add>, %176, %cst_97 [1] : vector<56x32xf32> to vector<56xf32>
    %187 = vector.shape_cast %186 : vector<56xf32> to vector<56x1xf32>
    %cst_98 = arith.constant 3.200000e+01 : f32
    %188 = vector.broadcast %cst_98 : f32 to vector<56x1xf32>
    %189 = arith.divf %187, %188 : vector<56x1xf32>
    %190 = vector.broadcast %189 : vector<56x1xf32> to vector<56x32xf32>
    %191 = arith.subf %176, %190 : vector<56x32xf32>
    %192 = arith.mulf %191, %191 : vector<56x32xf32>
    %cst_99 = arith.constant dense<0.000000e+00> : vector<56xf32>
    %193 = vector.multi_reduction <add>, %192, %cst_99 [1] : vector<56x32xf32> to vector<56xf32>
    %194 = vector.shape_cast %193 : vector<56xf32> to vector<56x1xf32>
    %cst_100 = arith.constant 3.200000e+01 : f32
    %195 = vector.broadcast %cst_100 : f32 to vector<56x1xf32>
    %196 = arith.divf %194, %195 : vector<56x1xf32>
    %197 = vector.broadcast %189 : vector<56x1xf32> to vector<56x32xf32>
    %198 = arith.subf %176, %197 : vector<56x32xf32>
    %cst_101 = arith.constant 9.99999974E-6 : f32
    %199 = vector.broadcast %cst_101 : f32 to vector<56x1xf32>
    %200 = arith.addf %196, %199 : vector<56x1xf32>
    %201 = math.rsqrt %200 : vector<56x1xf32>
    %202 = vector.broadcast %201 : vector<56x1xf32> to vector<56x32xf32>
    %203 = arith.mulf %198, %202 : vector<56x32xf32>
    %204 = vector.broadcast %179 : vector<1x32xf32> to vector<56x32xf32>
    %205 = arith.mulf %203, %204 : vector<56x32xf32>
    %206 = vector.broadcast %180 : vector<1x32xf32> to vector<56x32xf32>
    %207 = arith.addf %205, %206 : vector<56x32xf32>
    %c1_102 = arith.constant 1 : index
    %c0_103 = arith.constant 0 : index
    %c0_104 = arith.constant 0 : index
    %c0_105 = arith.constant 0 : index
    %208 = vector.load %arg7[%c1_102, %c0_103, %c0_104, %c0_105] : memref<2x4x32x32xf32, #tpu.memory_space<vmem>>, vector<1x1x32x32xf32>
    %209 = vector.shape_cast %208 : vector<1x1x32x32xf32> to vector<32x32xf32>
    %cst_106 = arith.constant dense<0.000000e+00> : vector<56x32xf32>
    %210 = tpu.matmul %207, %209, %cst_106 {dimension_numbers = #tpu.dot_dimension_numbers<[1], [0], [0], [1], [0, 0, 1, 1], [], []>} : vector<56x32xf32>, vector<32x32xf32>, vector<56x32xf32> -> vector<56x32xf32>
    %c1_107 = arith.constant 1 : index
    %c1_108 = arith.constant 1 : index
    %c0_109 = arith.constant 0 : index
    %c0_110 = arith.constant 0 : index
    %211 = vector.load %arg7[%c1_107, %c1_108, %c0_109, %c0_110] : memref<2x4x32x32xf32, #tpu.memory_space<vmem>>, vector<1x1x32x32xf32>
    %212 = vector.shape_cast %211 : vector<1x1x32x32xf32> to vector<32x32xf32>
    %cst_111 = arith.constant dense<0.000000e+00> : vector<56x32xf32>
    %213 = tpu.matmul %207, %212, %cst_111 {dimension_numbers = #tpu.dot_dimension_numbers<[1], [0], [0], [1], [0, 0, 1, 1], [], []>} : vector<56x32xf32>, vector<32x32xf32>, vector<56x32xf32> -> vector<56x32xf32>
    %c1_112 = arith.constant 1 : index
    %c2_113 = arith.constant 2 : index
    %c0_114 = arith.constant 0 : index
    %c0_115 = arith.constant 0 : index
    %214 = vector.load %arg7[%c1_112, %c2_113, %c0_114, %c0_115] : memref<2x4x32x32xf32, #tpu.memory_space<vmem>>, vector<1x1x32x32xf32>
    %215 = vector.shape_cast %214 : vector<1x1x32x32xf32> to vector<32x32xf32>
    %cst_116 = arith.constant dense<0.000000e+00> : vector<56x32xf32>
    %216 = tpu.matmul %207, %215, %cst_116 {dimension_numbers = #tpu.dot_dimension_numbers<[1], [0], [0], [1], [0, 0, 1, 1], [], []>} : vector<56x32xf32>, vector<32x32xf32>, vector<56x32xf32> -> vector<56x32xf32>
    %cst_117 = arith.constant dense<0xFF800000> : vector<56xf32>
    %217 = vector.multi_reduction <maximumf>, %210, %cst_117 [1] : vector<56x32xf32> to vector<56xf32>
    %218 = vector.shape_cast %217 : vector<56xf32> to vector<56x1xf32>
    %219 = vector.broadcast %218 : vector<56x1xf32> to vector<56x32xf32>
    %220 = arith.subf %210, %219 : vector<56x32xf32>
    %221 = math.exp %220 : vector<56x32xf32>
    %cst_118 = arith.constant dense<0.000000e+00> : vector<56x32xf32>
    %222 = tpu.matmul %221, %28, %cst_118 {dimension_numbers = #tpu.dot_dimension_numbers<[1], [0], [0], [1], [0, 0, 1, 1], [], []>} : vector<56x32xf32>, vector<32x32xf32>, vector<56x32xf32> -> vector<56x32xf32>
    %223 = tpu.reciprocal %222 {approx = true} : vector<56x32xf32> -> vector<56x32xf32>
    %224 = arith.mulf %221, %223 : vector<56x32xf32>
    %cst_119 = arith.constant 0.353553385 : f32
    %225 = vector.broadcast %cst_119 : f32 to vector<56x32xf32>
    %226 = arith.mulf %224, %225 : vector<56x32xf32>
    %cst_120 = arith.constant dense<0xFF800000> : vector<32xf32>
    %227 = vector.multi_reduction <maximumf>, %213, %cst_120 [0] : vector<56x32xf32> to vector<32xf32>
    %228 = vector.shape_cast %227 : vector<32xf32> to vector<1x32xf32>
    %229 = vector.broadcast %228 : vector<1x32xf32> to vector<56x32xf32>
    %230 = arith.subf %213, %229 : vector<56x32xf32>
    %231 = math.exp %230 : vector<56x32xf32>
    %232 = tpu.concatenate %231, %231 in 1 : vector<56x32xf32>, vector<56x32xf32> -> vector<56x64xf32>
    %233 = arith.mulf %232, %29 : vector<56x64xf32>
    %cst_121 = arith.constant dense<0.000000e+00> : vector<64xf32>
    %234 = vector.multi_reduction <add>, %233, %cst_121 [0] : vector<56x64xf32> to vector<64xf32>
    %235 = vector.shape_cast %234 : vector<64xf32> to vector<1x64xf32>
    %236 = tpu.reciprocal %235 {approx = true} : vector<1x64xf32> -> vector<1x64xf32>
    %237 = vector.broadcast %236 : vector<1x64xf32> to vector<56x64xf32>
    %238 = arith.mulf %233, %237 : vector<56x64xf32>
    %cst_122 = arith.constant dense<0.000000e+00> : vector<64x32xf32>
    %239 = tpu.matmul %238, %216, %cst_122 {dimension_numbers = #tpu.dot_dimension_numbers<[0], [0], [1], [1], [0, 1, 1, 1], [], []>} : vector<56x64xf32>, vector<56x32xf32>, vector<64x32xf32> -> vector<64x32xf32>
    %240 = tpu.concatenate %226, %226 in 1 : vector<56x32xf32>, vector<56x32xf32> -> vector<56x64xf32>
    %241 = arith.mulf %240, %29 : vector<56x64xf32>
    %242 = arith.mulf %239, %27 : vector<64x32xf32>
    %cst_123 = arith.constant dense<0.000000e+00> : vector<56x32xf32>
    %243 = tpu.matmul %241, %242, %cst_123 {dimension_numbers = #tpu.dot_dimension_numbers<[1], [0], [0], [1], [0, 0, 1, 1], [], []>} : vector<56x64xf32>, vector<64x32xf32>, vector<56x32xf32> -> vector<56x32xf32>
    %c1_124 = arith.constant 1 : index
    %c3_125 = arith.constant 3 : index
    %c0_126 = arith.constant 0 : index
    %c0_127 = arith.constant 0 : index
    %244 = vector.load %arg7[%c1_124, %c3_125, %c0_126, %c0_127] : memref<2x4x32x32xf32, #tpu.memory_space<vmem>>, vector<1x1x32x32xf32>
    %245 = vector.shape_cast %244 : vector<1x1x32x32xf32> to vector<32x32xf32>
    %cst_128 = arith.constant dense<0.000000e+00> : vector<56x32xf32>
    %246 = tpu.matmul %243, %245, %cst_128 {dimension_numbers = #tpu.dot_dimension_numbers<[1], [0], [0], [1], [0, 0, 1, 1], [], []>} : vector<56x32xf32>, vector<32x32xf32>, vector<56x32xf32> -> vector<56x32xf32>
    %247 = vector.broadcast %181 : vector<1x32xf32> to vector<56x32xf32>
    %248 = arith.addf %246, %247 : vector<56x32xf32>
    %249 = arith.addf %176, %248 : vector<56x32xf32>
    %cst_129 = arith.constant dense<0.000000e+00> : vector<56xf32>
    %250 = vector.multi_reduction <add>, %249, %cst_129 [1] : vector<56x32xf32> to vector<56xf32>
    %251 = vector.shape_cast %250 : vector<56xf32> to vector<56x1xf32>
    %cst_130 = arith.constant 3.200000e+01 : f32
    %252 = vector.broadcast %cst_130 : f32 to vector<56x1xf32>
    %253 = arith.divf %251, %252 : vector<56x1xf32>
    %254 = vector.broadcast %253 : vector<56x1xf32> to vector<56x32xf32>
    %255 = arith.subf %249, %254 : vector<56x32xf32>
    %256 = arith.mulf %255, %255 : vector<56x32xf32>
    %cst_131 = arith.constant dense<0.000000e+00> : vector<56xf32>
    %257 = vector.multi_reduction <add>, %256, %cst_131 [1] : vector<56x32xf32> to vector<56xf32>
    %258 = vector.shape_cast %257 : vector<56xf32> to vector<56x1xf32>
    %cst_132 = arith.constant 3.200000e+01 : f32
    %259 = vector.broadcast %cst_132 : f32 to vector<56x1xf32>
    %260 = arith.divf %258, %259 : vector<56x1xf32>
    %261 = vector.broadcast %253 : vector<56x1xf32> to vector<56x32xf32>
    %262 = arith.subf %249, %261 : vector<56x32xf32>
    %cst_133 = arith.constant 9.99999974E-6 : f32
    %263 = vector.broadcast %cst_133 : f32 to vector<56x1xf32>
    %264 = arith.addf %260, %263 : vector<56x1xf32>
    %265 = math.rsqrt %264 : vector<56x1xf32>
    %266 = vector.broadcast %265 : vector<56x1xf32> to vector<56x32xf32>
    %267 = arith.mulf %262, %266 : vector<56x32xf32>
    %268 = vector.broadcast %182 : vector<1x32xf32> to vector<56x32xf32>
    %269 = arith.mulf %267, %268 : vector<56x32xf32>
    %270 = vector.broadcast %183 : vector<1x32xf32> to vector<56x32xf32>
    %271 = arith.addf %269, %270 : vector<56x32xf32>
    %c1_134 = arith.constant 1 : index
    %c0_135 = arith.constant 0 : index
    %c0_136 = arith.constant 0 : index
    %272 = vector.load %arg8[%c1_134, %c0_135, %c0_136] : memref<2x32x128xf32, #tpu.memory_space<vmem>>, vector<1x32x128xf32>
    %273 = vector.shape_cast %272 : vector<1x32x128xf32> to vector<32x128xf32>
    %cst_137 = arith.constant dense<0.000000e+00> : vector<56x128xf32>
    %274 = tpu.matmul %271, %273, %cst_137 {dimension_numbers = #tpu.dot_dimension_numbers<[1], [0], [0], [1], [0, 0, 1, 1], [], []>} : vector<56x32xf32>, vector<32x128xf32>, vector<56x128xf32> -> vector<56x128xf32>
    %275 = vector.broadcast %184 : vector<1x128xf32> to vector<56x128xf32>
    %276 = arith.addf %274, %275 : vector<56x128xf32>
    %cst_138 = arith.constant 5.000000e-01 : f32
    %277 = vector.broadcast %cst_138 : f32 to vector<56x128xf32>
    %278 = arith.mulf %277, %276 : vector<56x128xf32>
    %cst_139 = arith.constant 0.707106769 : f32
    %279 = vector.broadcast %cst_139 : f32 to vector<56x128xf32>
    %280 = arith.mulf %276, %279 : vector<56x128xf32>
    %cst_140 = arith.constant 0.000000e+00 : f32
    %281 = vector.broadcast %cst_140 : f32 to vector<56x128xf32>
    %282 = arith.cmpf oge, %280, %281 : vector<56x128xf32>
    %cst_141 = arith.constant 1.000000e+00 : f32
    %cst_142 = arith.constant -1.000000e+00 : f32
    %283 = vector.broadcast %cst_141 : f32 to vector<56x128xf32>
    %284 = vector.broadcast %cst_142 : f32 to vector<56x128xf32>
    %285 = arith.select %282, %283, %284 : vector<56x128xi1>, vector<56x128xf32>
    %286 = math.absf %280 : vector<56x128xf32>
    %cst_143 = arith.constant 0.327591091 : f32
    %287 = vector.broadcast %cst_143 : f32 to vector<56x128xf32>
    %288 = arith.mulf %287, %286 : vector<56x128xf32>
    %cst_144 = arith.constant 1.000000e+00 : f32
    %289 = vector.broadcast %cst_144 : f32 to vector<56x128xf32>
    %290 = arith.addf %289, %288 : vector<56x128xf32>
    %cst_145 = arith.constant 1.000000e+00 : f32
    %291 = vector.broadcast %cst_145 : f32 to vector<56x128xf32>
    %292 = arith.divf %291, %290 : vector<56x128xf32>
    %cst_146 = arith.constant 1.06140542 : f32
    %293 = vector.broadcast %cst_146 : f32 to vector<56x128xf32>
    %294 = arith.mulf %293, %292 : vector<56x128xf32>
    %cst_147 = arith.constant -1.45315206 : f32
    %295 = vector.broadcast %cst_147 : f32 to vector<56x128xf32>
    %296 = arith.addf %294, %295 : vector<56x128xf32>
    %297 = arith.mulf %296, %292 : vector<56x128xf32>
    %cst_148 = arith.constant 1.42141378 : f32
    %298 = vector.broadcast %cst_148 : f32 to vector<56x128xf32>
    %299 = arith.addf %297, %298 : vector<56x128xf32>
    %300 = arith.mulf %299, %292 : vector<56x128xf32>
    %cst_149 = arith.constant -0.284496725 : f32
    %301 = vector.broadcast %cst_149 : f32 to vector<56x128xf32>
    %302 = arith.addf %300, %301 : vector<56x128xf32>
    %303 = arith.mulf %302, %292 : vector<56x128xf32>
    %cst_150 = arith.constant 0.254829586 : f32
    %304 = vector.broadcast %cst_150 : f32 to vector<56x128xf32>
    %305 = arith.addf %303, %304 : vector<56x128xf32>
    %306 = arith.mulf %305, %292 : vector<56x128xf32>
    %cst_151 = arith.constant 0.000000e+00 : f32
    %307 = vector.broadcast %cst_151 : f32 to vector<56x128xf32>
    %308 = arith.subf %307, %286 : vector<56x128xf32>
    %309 = arith.mulf %308, %286 : vector<56x128xf32>
    %310 = math.exp %309 : vector<56x128xf32>
    %311 = arith.mulf %306, %310 : vector<56x128xf32>
    %cst_152 = arith.constant 1.000000e+00 : f32
    %312 = vector.broadcast %cst_152 : f32 to vector<56x128xf32>
    %313 = arith.subf %312, %311 : vector<56x128xf32>
    %314 = arith.mulf %285, %313 : vector<56x128xf32>
    %cst_153 = arith.constant 1.000000e+00 : f32
    %315 = vector.broadcast %cst_153 : f32 to vector<56x128xf32>
    %316 = arith.addf %315, %314 : vector<56x128xf32>
    %317 = arith.mulf %278, %316 : vector<56x128xf32>
    %c1_154 = arith.constant 1 : index
    %c0_155 = arith.constant 0 : index
    %c0_156 = arith.constant 0 : index
    %318 = vector.load %arg9[%c1_154, %c0_155, %c0_156] : memref<2x128x32xf32, #tpu.memory_space<vmem>>, vector<1x128x32xf32>
    %319 = vector.shape_cast %318 : vector<1x128x32xf32> to vector<128x32xf32>
    %cst_157 = arith.constant dense<0.000000e+00> : vector<56x32xf32>
    %320 = tpu.matmul %317, %319, %cst_157 {dimension_numbers = #tpu.dot_dimension_numbers<[1], [0], [0], [1], [0, 0, 1, 1], [], []>} : vector<56x128xf32>, vector<128x32xf32>, vector<56x32xf32> -> vector<56x32xf32>
    %321 = arith.addf %249, %320 : vector<56x32xf32>
    %322 = vector.broadcast %185 : vector<1x32xf32> to vector<56x32xf32>
    %323 = arith.addf %321, %322 : vector<56x32xf32>
    %c0_158 = arith.constant 0 : index
    %c0_159 = arith.constant 0 : index
    %324 = vector.load %arg6[%c0_158, %c0_159] : memref<2x56xf32, #tpu.memory_space<vmem>>, vector<2x56xf32>
    %cst_160 = arith.constant dense<0.000000e+00> : vector<2x32xf32>
    %325 = tpu.matmul %324, %323, %cst_160 {dimension_numbers = #tpu.dot_dimension_numbers<[1], [0], [0], [1], [0, 0, 1, 1], [], []>} : vector<2x56xf32>, vector<56x32xf32>, vector<2x32xf32> -> vector<2x32xf32>
    %cst_161 = arith.constant 0.000000e+00 : f32
    %326 = vector.broadcast %cst_161 : f32 to vector<2x32xf32>
    %327 = arith.cmpf ogt, %325, %326 : vector<2x32xf32>
    %cst_162 = arith.constant 0.000000e+00 : f32
    %328 = vector.broadcast %cst_162 : f32 to vector<2x32xf32>
    %329 = arith.minimumf %325, %328 : vector<2x32xf32>
    %330 = math.exp %329 : vector<2x32xf32>
    %cst_163 = arith.constant 1.000000e+00 : f32
    %331 = vector.broadcast %cst_163 : f32 to vector<2x32xf32>
    %332 = arith.subf %330, %331 : vector<2x32xf32>
    %333 = arith.select %327, %325, %332 : vector<2x32xi1>, vector<2x32xf32>
    %c192 = arith.constant 192 : index
    %c0_164 = arith.constant 0 : index
    %334 = vector.load %arg3[%c192, %c0_164] : memref<224x32xf32, #tpu.memory_space<vmem>>, vector<32x32xf32>
    %cst_165 = arith.constant dense<0.000000e+00> : vector<2x32xf32>
    %335 = tpu.matmul %333, %334, %cst_165 {dimension_numbers = #tpu.dot_dimension_numbers<[1], [0], [0], [1], [0, 0, 1, 1], [], []>} : vector<2x32xf32>, vector<32x32xf32>, vector<2x32xf32> -> vector<2x32xf32>
    %c0_166 = arith.constant 0 : index
    %c0_167 = arith.constant 0 : index
    %c0_168 = arith.constant 0 : index
    %336 = vector.load %arg10[%c0_166, %c0_167, %c0_168] : memref<2x8x128xf32, #tpu.memory_space<vmem>>, vector<1x8x128xf32>
    %337 = vector.shape_cast %336 : vector<1x8x128xf32> to vector<8x128xf32>
    %338 = vector.extract_strided_slice %337 {offsets = [7, 0], sizes = [1, 6], strides = [1, 1]} : vector<8x128xf32> to vector<1x6xf32>
    %339 = vector.extract_strided_slice %335 {offsets = [0, 0], sizes = [2, 6], strides = [1, 1]} : vector<2x32xf32> to vector<2x6xf32>
    %340 = vector.broadcast %338 : vector<1x6xf32> to vector<2x6xf32>
    %341 = arith.addf %339, %340 : vector<2x6xf32>
    %c0_169 = arith.constant 0 : index
    %c0_170 = arith.constant 0 : index
    %342 = vector.load %arg11[%c0_169, %c0_170] : memref<2x6xf32, #tpu.memory_space<vmem>>, vector<2x6xf32>
    tpu.vector_store %arg11[%c0_169, %c0_170], %341 {strides = array<i32>} : memref<2x6xf32, #tpu.memory_space<vmem>>, vector<2x6xf32>,
    return
  }
  func.func @transform_0(%arg0: i32) -> (i32, i32) {
    %c0_i32 = arith.constant 0 : i32
    %c0_i32_0 = arith.constant 0 : i32
    %c0_i32_1 = arith.constant 0 : i32
    return %c0_i32, %c0_i32_0 : i32, i32
  }
  func.func @transform_1(%arg0: i32) -> (i32, i32) {
    %c0_i32 = arith.constant 0 : i32
    %c0_i32_0 = arith.constant 0 : i32
    %c0_i32_1 = arith.constant 0 : i32
    return %c0_i32, %c0_i32_0 : i32, i32
  }
  func.func @transform_2(%arg0: i32) -> (i32, i32) {
    %c0_i32 = arith.constant 0 : i32
    %c0_i32_0 = arith.constant 0 : i32
    %c0_i32_1 = arith.constant 0 : i32
    return %c0_i32, %c0_i32_0 : i32, i32
  }
  func.func @transform_3(%arg0: i32) -> (i32, i32) {
    %c0_i32 = arith.constant 0 : i32
    %c0_i32_0 = arith.constant 0 : i32
    %c0_i32_1 = arith.constant 0 : i32
    return %c0_i32, %c0_i32_0 : i32, i32
  }
  func.func @transform_4(%arg0: i32) -> (i32, i32) {
    %c0_i32 = arith.constant 0 : i32
    %c0_i32_0 = arith.constant 0 : i32
    %c0_i32_1 = arith.constant 0 : i32
    return %c0_i32, %c0_i32_0 : i32, i32
  }
  func.func @transform_5(%arg0: i32) -> (i32, i32) {
    %c0_i32 = arith.constant 0 : i32
    %c0_i32_0 = arith.constant 0 : i32
    %c0_i32_1 = arith.constant 0 : i32
    return %c0_i32, %c0_i32_0 : i32, i32
  }
  func.func @transform_6(%arg0: i32) -> (i32, i32, i32, i32) {
    %c0_i32 = arith.constant 0 : i32
    %c0_i32_0 = arith.constant 0 : i32
    %c0_i32_1 = arith.constant 0 : i32
    %c0_i32_2 = arith.constant 0 : i32
    %c0_i32_3 = arith.constant 0 : i32
    return %c0_i32, %c0_i32_0, %c0_i32_1, %c0_i32_2 : i32, i32, i32, i32
  }
  func.func @transform_7(%arg0: i32) -> (i32, i32, i32) {
    %c0_i32 = arith.constant 0 : i32
    %c0_i32_0 = arith.constant 0 : i32
    %c0_i32_1 = arith.constant 0 : i32
    %c0_i32_2 = arith.constant 0 : i32
    return %c0_i32, %c0_i32_0, %c0_i32_1 : i32, i32, i32
  }
  func.func @transform_8(%arg0: i32) -> (i32, i32, i32) {
    %c0_i32 = arith.constant 0 : i32
    %c0_i32_0 = arith.constant 0 : i32
    %c0_i32_1 = arith.constant 0 : i32
    %c0_i32_2 = arith.constant 0 : i32
    return %c0_i32, %c0_i32_0, %c0_i32_1 : i32, i32, i32
  }
  func.func @transform_9(%arg0: i32) -> (i32, i32, i32) {
    %c0_i32 = arith.constant 0 : i32
    %c0_i32_0 = arith.constant 0 : i32
    %c0_i32_1 = arith.constant 0 : i32
    %c0_i32_2 = arith.constant 0 : i32
    return %c0_i32, %c0_i32_0, %c0_i32_1 : i32, i32, i32
  }
  func.func @transform_10(%arg0: i32) -> (i32, i32) {
    %c0_i32 = arith.constant 0 : i32
    %c0_i32_0 = arith.constant 0 : i32
    %c0_i32_1 = arith.constant 0 : i32
    return %c0_i32, %c0_i32_0 : i32, i32
  }
}

</mosaic_0001>

<llo_original>
// kernel: biot_classifier.1
$region0: #{biot_classifier.1}
  #allocation0 [shape = 'u32[]', space=smem, size = 0x4, offset = 0x4, fixed_abs, tag = 'smem constant byte address 0x4 - core index']
  #allocation1 [shape = 'u32[72,128]{1,0:T(1,128)}', space=vmem, size = 0x9000, scoped, tag = 'internal scratch']
  #allocation2 [shape = 'f32[56,16]{1,0:T(8,128)}', space=vmem, size = 0x7000, scoped, tag = 'scratch operand']
  %s0 = inlined_call_operand.vmem [shape: f32[8,64], index: 0, kind: input, shape index: {}]
  %s1 = inlined_call_operand.vmem [shape: f32[16,256], index: 1, kind: input, shape index: {}]
  %s2 = inlined_call_operand.vmem [shape: f32[224,32], index: 2, kind: input, shape index: {}]
  %s3 = inlined_call_operand.vmem [shape: f32[56,32], index: 3, kind: input, shape index: {}]
  %s4 = inlined_call_operand.vmem [shape: f32[56,64], index: 4, kind: input, shape index: {}]
  %s5 = inlined_call_operand.vmem [shape: f32[2,56], index: 5, kind: input, shape index: {}]
  %s6 = inlined_call_operand.vmem [shape: f32[2,4,32,32], index: 6, kind: input, shape index: {}]
  %s7 = inlined_call_operand.vmem [shape: f32[2,32,128], index: 7, kind: input, shape index: {}]
  %s8 = inlined_call_operand.vmem [shape: f32[2,128,32], index: 8, kind: input, shape index: {}]
  %s9 = inlined_call_operand.vmem [shape: f32[2,8,128], index: 9, kind: input, shape index: {}]
  %s10 = inlined_call_operand.hbm [shape: f32[2,6], index: 10, kind: output, shape index: {}]
  %s11 = sld [smem:[#allocation0]]
  $region50: #{biot_classifier.1} parent=0
    _
  %s13 = ssub.s32 1, %s11
  %s14 = scalar_select 0, %s13, %s11
  $region1: #{biot_classifier.1} parent=0
    #allocation3 [shape = 'u8[1024]{0}', space=vmem, size = 0x400, scoped, tag = 'output window, operand 0, single buffered']
    #allocation4 [shape = 's32[1]{0}', space=sflag, size = 0x4, scoped, tag = 'scoped memory for biot_classifier.1']
    %15 = vsyncpa [#allocation4], 0
    // Predicated region
    $region2: #{biot_classifier.1} parent=1 // pred_check
      _
    $region3: #{biot_classifier.1} parent=1 // pred_check_branch
      %17 = sbr.rel (0) target = $region5
    $region4: #{biot_classifier.1} parent=1 // pred_region
      _
    $region5: #{biot_classifier.1} parent=1 // pred_fallthru
      _
    // Predicated region
    $region6: #{biot_classifier.1} parent=1 // pred_check
      _
    $region7: #{biot_classifier.1} parent=1 // pred_check_branch
      %19 = sbr.rel (0) target = $region9
    $region8: #{biot_classifier.1} parent=1 // pred_region
      _
    $region9: #{biot_classifier.1} parent=1 // pred_fallthru
      _
    // Predicated region
    $region10: #{biot_classifier.1} parent=1 // pred_check
      _
    $region11: #{biot_classifier.1} parent=1 // pred_check_branch
      %21 = sbr.rel (0) target = $region13
    $region12: #{biot_classifier.1} parent=1 // pred_region
      _
    $region13: #{biot_classifier.1} parent=1 // pred_fallthru
      _
    // Predicated region
    $region14: #{biot_classifier.1} parent=1 // pred_check
      _
    $region15: #{biot_classifier.1} parent=1 // pred_check_branch
      %23 = sbr.rel (0) target = $region17
    $region16: #{biot_classifier.1} parent=1 // pred_region
      _
    $region17: #{biot_classifier.1} parent=1 // pred_fallthru
      _
    // Predicated region
    $region18: #{biot_classifier.1} parent=1 // pred_check
      _
    $region19: #{biot_classifier.1} parent=1 // pred_check_branch
      %25 = sbr.rel (0) target = $region21
    $region20: #{biot_classifier.1} parent=1 // pred_region
      _
    $region21: #{biot_classifier.1} parent=1 // pred_fallthru
      _
    // Predicated region
    $region22: #{biot_classifier.1} parent=1 // pred_check
      _
    $region23: #{biot_classifier.1} parent=1 // pred_check_branch
      %27 = sbr.rel (0) target = $region25
    $region24: #{biot_classifier.1} parent=1 // pred_region
      _
    $region25: #{biot_classifier.1} parent=1 // pred_fallthru
      _
    // Predicated region
    $region26: #{biot_classifier.1} parent=1 // pred_check
      _
    $region27: #{biot_classifier.1} parent=1 // pred_check_branch
      %29 = sbr.rel (0) target = $region29
    $region28: #{biot_classifier.1} parent=1 // pred_region
      _
    $region29: #{biot_classifier.1} parent=1 // pred_fallthru
      _
    // Predicated region
    $region30: #{biot_classifier.1} parent=1 // pred_check
      _
    $region31: #{biot_classifier.1} parent=1 // pred_check_branch
      %31 = sbr.rel (0) target = $region33
    $region32: #{biot_classifier.1} parent=1 // pred_region
      _
    $region33: #{biot_classifier.1} parent=1 // pred_fallthru
      _
    // Predicated region
    $region34: #{biot_classifier.1} parent=1 // pred_check
      _
    $region35: #{biot_classifier.1} parent=1 // pred_check_branch
      %33 = sbr.rel (0) target = $region37
    $region36: #{biot_classifier.1} parent=1 // pred_region
      _
    $region37: #{biot_classifier.1} parent=1 // pred_fallthru
      _
    // Predicated region
    $region38: #{biot_classifier.1} parent=1 // pred_check
      _
    $region39: #{biot_classifier.1} parent=1 // pred_check_branch
      %35 = sbr.rel (0) target = $region41
    $region40: #{biot_classifier.1} parent=1 // pred_region
      _
    $region41: #{biot_classifier.1} parent=1 // pred_fallthru
      _
    %v36 = vld [vmem:[%s0] sm:$0xff]
    %vm37 = vcmask 130048
    %38 = vst.msk [vmem:[#allocation2] sm:$0xff] %vm37, %v36
    %v39 = vld [vmem:[%s0] sm:$0xff]
    %41 = vrot.lane.b32.xlu0 %v39, 120
    %v42 = vpop.permute.xlu0 %41
    %44 = vst.msk [vmem:[#allocation2 + $0x8] sm:$0xff] %vm37, %v42
    %v45 = vld [vmem:[%s0] sm:$0xff]
    %47 = vrot.lane.b32.xlu0 %v45, 112
    %v48 = vpop.permute.xlu0 %47
    %50 = vst.msk [vmem:[#allocation2 + $0x10] sm:$0xff] %vm37, %v48
    %v51 = vld [vmem:[%s0] sm:$0xff]
    %53 = vrot.lane.b32.xlu0 %v51, 104
    %v54 = vpop.permute.xlu0 %53
    %56 = vst.msk [vmem:[#allocation2 + $0x18] sm:$0xff] %vm37, %v54
    %v57 = vld [vmem:[%s0] sm:$0xff]
    %59 = vrot.lane.b32.xlu0 %v57, 96
    %v60 = vpop.permute.xlu0 %59
    %62 = vst.msk [vmem:[#allocation2 + $0x20] sm:$0xff] %vm37, %v60
    %v63 = vld [vmem:[%s0] sm:$0xff]
    %65 = vrot.lane.b32.xlu0 %v63, 88
    %v66 = vpop.permute.xlu0 %65
    %68 = vst.msk [vmem:[#allocation2 + $0x28] sm:$0xff] %vm37, %v66
    %v69 = vld [vmem:[%s0] sm:$0xff]
    %71 = vrot.lane.b32.xlu0 %v69, 80
    %v72 = vpop.permute.xlu0 %71
    %74 = vst.msk [vmem:[#allocation2 + $0x30] sm:$0xff] %vm37, %v72
    %v75 = vld [vmem:[#allocation2] sm:$0xff]
    %v76 = vld [vmem:[#allocation2 + $0x8] sm:$0xff]
    %v77 = vld [vmem:[#allocation2 + $0x10] sm:$0xff]
    %v78 = vld [vmem:[#allocation2 + $0x18] sm:$0xff]
    %v79 = vld [vmem:[#allocation2 + $0x20] sm:$0xff]
    %v80 = vld [vmem:[#allocation2 + $0x28] sm:$0xff]
    %v81 = vld [vmem:[#allocation2 + $0x30] sm:$0xff]
    %v82 = vld [vmem:[%s1] sm:$0xff]
    %v83 = vld [vmem:[%s1 + $0x8] sm:$0xff]
    %v84 = vld [vmem:[%s1 + $0x10] sm:$0xff]
    %v85 = vld [vmem:[%s1 + $0x18] sm:$0xff]
    %v87 = vsel %vm37, %v75, 0
    %v90 = vsel %vm37, %v76, 0
    %v93 = vsel %vm37, %v77, 0
    %v96 = vsel %vm37, %v78, 0
    %v99 = vsel %vm37, %v79, 0
    %v102 = vsel %vm37, %v80, 0
    %v105 = vsel %vm37, %v81, 0
    %107 = vmatpush.msra.mxu0 0.0
    %108 = vmatpush.msra.mxu0 0.0
    %109 = vmatpush.msra.mxu0 0.0
    %110 = vmatpush.msra.mxu0 0.0
    %111 = vmatpush.msra.mxu0 0.0
    %112 = vmatpush.msra.mxu0 0.0
    %113 = vmatpush.msra.mxu0 0.0
    %114 = vmatpush.msra.mxu0 0.0
    %115 = vmatpush.msra.mxu0 0.0
    %116 = vmatpush.msra.mxu0 0.0
    %117 = vmatpush.msra.mxu0 0.0
    %118 = vmatpush.msra.mxu0 0.0
    %119 = vmatpush.msra.mxu0 0.0
    %120 = vmatpush.msra.mxu0 0.0
    %121 = vmatpush.msra.mxu0 %v84
    %122 = vmatpush.msra.mxu0 %v82
    %123 = vmatmul.f32.gmra.mxu0 %v87
    %v124 = vpop.f32.mrf.mxu0
    %v125 = vadd.f32 0.0, %v124
    %126 = vmatmul.f32.gmra.mxu0 %v90
    %v127 = vpop.f32.mrf.mxu0
    %v128 = vadd.f32 0.0, %v127
    %129 = vmatmul.f32.gmra.mxu0 %v93
    %v130 = vpop.f32.mrf.mxu0
    %v131 = vadd.f32 0.0, %v130
    %132 = vmatmul.f32.gmra.mxu0 %v96
    %v133 = vpop.f32.mrf.mxu0
    %v134 = vadd.f32 0.0, %v133
    %135 = vmatmul.f32.gmra.mxu0 %v99
    %v136 = vpop.f32.mrf.mxu0
    %v137 = vadd.f32 0.0, %v136
    %138 = vmatmul.f32.gmra.mxu0 %v102
    %v139 = vpop.f32.mrf.mxu0
    %v140 = vadd.f32 0.0, %v139
    %141 = vmatmul.f32.gmra.mxu0 %v105
    %v142 = vpop.f32.mrf.mxu0
    %v143 = vadd.f32 0.0, %v142
    %144 = vdwg.mxu0
    %145 = vmatpush.msra.mxu0 0.0
    %146 = vmatpush.msra.mxu0 0.0
    %147 = vmatpush.msra.mxu0 0.0
    %148 = vmatpush.msra.mxu0 0.0
    %149 = vmatpush.msra.mxu0 0.0
    %150 = vmatpush.msra.mxu0 0.0
    %151 = vmatpush.msra.mxu0 0.0
    %152 = vmatpush.msra.mxu0 0.0
    %153 = vmatpush.msra.mxu0 0.0
    %154 = vmatpush.msra.mxu0 0.0
    %155 = vmatpush.msra.mxu0 0.0
    %156 = vmatpush.msra.mxu0 0.0
    %157 = vmatpush.msra.mxu0 0.0
    %158 = vmatpush.msra.mxu0 0.0
    %159 = vmatpush.msra.mxu0 %v85
    %160 = vmatpush.msra.mxu0 %v83
    %161 = vmatmul.f32.gmra.mxu0 %v87
    %v162 = vpop.f32.mrf.mxu0
    %v163 = vadd.f32 0.0, %v162
    %164 = vmatmul.f32.gmra.mxu0 %v90
    %v165 = vpop.f32.mrf.mxu0
    %v166 = vadd.f32 0.0, %v165
    %167 = vmatmul.f32.gmra.mxu0 %v93
    %v168 = vpop.f32.mrf.mxu0
    %v169 = vadd.f32 0.0, %v168
    %170 = vmatmul.f32.gmra.mxu0 %v96
    %v171 = vpop.f32.mrf.mxu0
    %v172 = vadd.f32 0.0, %v171
    %173 = vmatmul.f32.gmra.mxu0 %v99
    %v174 = vpop.f32.mrf.mxu0
    %v175 = vadd.f32 0.0, %v174
    %176 = vmatmul.f32.gmra.mxu0 %v102
    %v177 = vpop.f32.mrf.mxu0
    %v178 = vadd.f32 0.0, %v177
    %179 = vmatmul.f32.gmra.mxu0 %v105
    %v180 = vpop.f32.mrf.mxu0
    %v181 = vadd.f32 0.0, %v180
    %182 = vdwg.mxu0
    %v183 = vmul.f32 %v125, %v125
    %v184 = vmul.f32 %v128, %v128
    %v185 = vmul.f32 %v131, %v131
    %v186 = vmul.f32 %v134, %v134
    %v187 = vmul.f32 %v137, %v137
    %v188 = vmul.f32 %v140, %v140
    %v189 = vmul.f32 %v143, %v143
    %v190 = vmul.f32 %v163, %v163
    %v191 = vmul.f32 %v166, %v166
    %v192 = vmul.f32 %v169, %v169
    %v193 = vmul.f32 %v172, %v172
    %v194 = vmul.f32 %v175, %v175
    %v195 = vmul.f32 %v178, %v178
    %v196 = vmul.f32 %v181, %v181
    %v197 = vadd.f32 %v183, %v190
    %v198 = vadd.f32 %v184, %v191
    %v199 = vadd.f32 %v185, %v192
    %v200 = vadd.f32 %v186, %v193
    %v201 = vadd.f32 %v187, %v194
    %v202 = vadd.f32 %v188, %v195
    %v203 = vadd.f32 %v189, %v196
    %v204 = vrsqrt.pop %v197
    %v205 = vmul.f32 %v204, %v197
    %v206 = vmul.f32 %v205, %v204
    %v207 = vmul.f32 0.5, %v206
    %v208 = vsub.f32 1.5, %v207
    %v209 = vmul.f32 %v204, %v208
    %v210 = vmul.f32 %v197, %v209
    %vm211 = vcmp.eq.f32.partialorder %v197, inf
    %v212 = vsel %vm211, %v197, %v210
    %vm213 = vcmp.eq.f32.partialorder %v197, 0.0
    %v214 = vand.u32 %v197, 2147483648
    %v215 = vsel %vm213, %v214, %v212
    %v216 = vrsqrt.pop %v198
    %v217 = vmul.f32 %v216, %v198
    %v218 = vmul.f32 %v217, %v216
    %v219 = vmul.f32 0.5, %v218
    %v220 = vsub.f32 1.5, %v219
    %v221 = vmul.f32 %v216, %v220
    %v222 = vmul.f32 %v198, %v221
    %vm223 = vcmp.eq.f32.partialorder %v198, inf
    %v224 = vsel %vm223, %v198, %v222
    %vm225 = vcmp.eq.f32.partialorder %v198, 0.0
    %v226 = vand.u32 %v198, 2147483648
    %v227 = vsel %vm225, %v226, %v224
    %v228 = vrsqrt.pop %v199
    %v229 = vmul.f32 %v228, %v199
    %v230 = vmul.f32 %v229, %v228
    %v231 = vmul.f32 0.5, %v230
    %v232 = vsub.f32 1.5, %v231
    %v233 = vmul.f32 %v228, %v232
    %v234 = vmul.f32 %v199, %v233
    %vm235 = vcmp.eq.f32.partialorder %v199, inf
    %v236 = vsel %vm235, %v199, %v234
    %vm237 = vcmp.eq.f32.partialorder %v199, 0.0
    %v238 = vand.u32 %v199, 2147483648
    %v239 = vsel %vm237, %v238, %v236
    %v240 = vrsqrt.pop %v200
    %v241 = vmul.f32 %v240, %v200
    %v242 = vmul.f32 %v241, %v240
    %v243 = vmul.f32 0.5, %v242
    %v244 = vsub.f32 1.5, %v243
    %v245 = vmul.f32 %v240, %v244
    %v246 = vmul.f32 %v200, %v245
    %vm247 = vcmp.eq.f32.partialorder %v200, inf
    %v248 = vsel %vm247, %v200, %v246
    %vm249 = vcmp.eq.f32.partialorder %v200, 0.0
    %v250 = vand.u32 %v200, 2147483648
    %v251 = vsel %vm249, %v250, %v248
    %v252 = vrsqrt.pop %v201
    %v253 = vmul.f32 %v252, %v201
    %v254 = vmul.f32 %v253, %v252
    %v255 = vmul.f32 0.5, %v254
    %v256 = vsub.f32 1.5, %v255
    %v257 = vmul.f32 %v252, %v256
    %v258 = vmul.f32 %v201, %v257
    %vm259 = vcmp.eq.f32.partialorder %v201, inf
    %v260 = vsel %vm259, %v201, %v258
    %vm261 = vcmp.eq.f32.partialorder %v201, 0.0
    %v262 = vand.u32 %v201, 2147483648
    %v263 = vsel %vm261, %v262, %v260
    %v264 = vrsqrt.pop %v202
    %v265 = vmul.f32 %v264, %v202
    %v266 = vmul.f32 %v265, %v264
    %v267 = vmul.f32 0.5, %v266
    %v268 = vsub.f32 1.5, %v267
    %v269 = vmul.f32 %v264, %v268
    %v270 = vmul.f32 %v202, %v269
    %vm271 = vcmp.eq.f32.partialorder %v202, inf
    %v272 = vsel %vm271, %v202, %v270
    %vm273 = vcmp.eq.f32.partialorder %v202, 0.0
    %v274 = vand.u32 %v202, 2147483648
    %v275 = vsel %vm273, %v274, %v272
    %v276 = vrsqrt.pop %v203
    %v277 = vmul.f32 %v276, %v203
    %v278 = vmul.f32 %v277, %v276
    %v279 = vmul.f32 0.5, %v278
    %v280 = vsub.f32 1.5, %v279
    %v281 = vmul.f32 %v276, %v280
    %v282 = vmul.f32 %v203, %v281
    %vm283 = vcmp.eq.f32.partialorder %v203, inf
    %v284 = vsel %vm283, %v203, %v282
    %vm285 = vcmp.eq.f32.partialorder %v203, 0.0
    %v286 = vand.u32 %v203, 2147483648
    %v287 = vsel %vm285, %v286, %v284
    %v288 = vld [vmem:[%s2] sm:$0xff]
    %v289 = vld [vmem:[%s2 + $0x8] sm:$0xff]
    %v290 = vld [vmem:[%s2 + $0x10] sm:$0xff]
    %v291 = vld [vmem:[%s2 + $0x18] sm:$0xff]
    %v292 = vld [vmem:[%s2 + $0x20] sm:$0xff]
    %v293 = vld [vmem:[%s2 + $0x28] sm:$0xff]
    %v294 = vld [vmem:[%s2 + $0x30] sm:$0xff]
    %v295 = vld [vmem:[%s2 + $0x38] sm:$0xff]
    %v296 = vld [vmem:[%s2 + $0x40] sm:$0xff]
    %v297 = vld [vmem:[%s2 + $0x48] sm:$0xff]
    %v298 = vld [vmem:[%s2 + $0x50] sm:$0xff]
    %v299 = vld [vmem:[%s2 + $0x58] sm:$0xff]
    %v300 = vld [vmem:[%s2 + $0x60] sm:$0xff]
    %v301 = vld [vmem:[%s2 + $0x68] sm:$0xff]
    %v302 = vld [vmem:[%s2 + $0x70] sm:$0xff]
    %v303 = vld [vmem:[%s2 + $0x78] sm:$0xff]
    %v304 = vld [vmem:[%s3] sm:$0xff]
    %v305 = vld [vmem:[%s3 + $0x8] sm:$0xff]
    %v306 = vld [vmem:[%s3 + $0x10] sm:$0xff]
    %v307 = vld [vmem:[%s3 + $0x18] sm:$0xff]
    %v308 = vld [vmem:[%s3 + $0x20] sm:$0xff]
    %v309 = vld [vmem:[%s3 + $0x28] sm:$0xff]
    %v310 = vld [vmem:[%s3 + $0x30] sm:$0xff]
    %311 = vmatpush.msra.mxu0 %v303
    %312 = vmatpush.msra.mxu0 %v302
    %313 = vmatpush.msra.mxu0 %v301
    %314 = vmatpush.msra.mxu0 %v300
    %315 = vmatpush.msra.mxu0 %v299
    %316 = vmatpush.msra.mxu0 %v298
    %317 = vmatpush.msra.mxu0 %v297
    %318 = vmatpush.msra.mxu0 %v296
    %319 = vmatpush.msra.mxu0 %v295
    %320 = vmatpush.msra.mxu0 %v294
    %321 = vmatpush.msra.mxu0 %v293
    %322 = vmatpush.msra.mxu0 %v292
    %323 = vmatpush.msra.mxu0 %v291
    %324 = vmatpush.msra.mxu0 %v290
    %325 = vmatpush.msra.mxu0 %v289
    %326 = vmatpush.msra.mxu0 %v288
    %327 = vmatmul.f32.gmra.mxu0 %v215
    %v328 = vpop.f32.mrf.mxu0
    %v329 = vadd.f32 %v304, %v328
    %330 = vmatmul.f32.gmra.mxu0 %v227
    %v331 = vpop.f32.mrf.mxu0
    %v332 = vadd.f32 %v305, %v331
    %333 = vmatmul.f32.gmra.mxu0 %v239
    %v334 = vpop.f32.mrf.mxu0
    %v335 = vadd.f32 %v306, %v334
    %336 = vmatmul.f32.gmra.mxu0 %v251
    %v337 = vpop.f32.mrf.mxu0
    %v338 = vadd.f32 %v307, %v337
    %339 = vmatmul.f32.gmra.mxu0 %v263
    %v340 = vpop.f32.mrf.mxu0
    %v341 = vadd.f32 %v308, %v340
    %342 = vmatmul.f32.gmra.mxu0 %v275
    %v343 = vpop.f32.mrf.mxu0
    %v344 = vadd.f32 %v309, %v343
    %345 = vmatmul.f32.gmra.mxu0 %v287
    %v346 = vpop.f32.mrf.mxu0
    %v347 = vadd.f32 %v310, %v346
    %348 = vdwg.mxu0
    %v349 = vld [vmem:[%s2 + $0x80] sm:$0xff]
    %v350 = vld [vmem:[%s2 + $0x88] sm:$0xff]
    %v351 = vld [vmem:[%s2 + $0x90] sm:$0xff]
    %v352 = vld [vmem:[%s2 + $0x98] sm:$0xff]
    %v353 = vld [vmem:[%s2 + $0xa0] sm:$0xff]
    %v354 = vld [vmem:[%s2 + $0xa8] sm:$0xff]
    %v355 = vld [vmem:[%s2 + $0xb0] sm:$0xff]
    %v356 = vld [vmem:[%s2 + $0xb8] sm:$0xff]
    %v357 = vld [vmem:[%s4] sm:$0xff]
    %v358 = vld [vmem:[%s4 + $0x8] sm:$0xff]
    %v359 = vld [vmem:[%s4 + $0x10] sm:$0xff]
    %v360 = vld [vmem:[%s4 + $0x18] sm:$0xff]
    %v361 = vld [vmem:[%s4 + $0x20] sm:$0xff]
    %v362 = vld [vmem:[%s4 + $0x28] sm:$0xff]
    %v363 = vld [vmem:[%s4 + $0x30] sm:$0xff]
    %v364 = vld [vmem:[%s9] sm:$0xff]
    %vm365 = vcmask 261120
    %v366 = vsel %vm365, %v329, 0.0
    %367 = vadd.xlane.f32.xlu0 %v366
    %v368 = vpop.xlane.xlu0 %367
    %v369 = vsel %vm365, %v332, 0.0
    %370 = vadd.xlane.f32.xlu0 %v369
    %v371 = vpop.xlane.xlu0 %370
    %v372 = vsel %vm365, %v335, 0.0
    %373 = vadd.xlane.f32.xlu0 %v372
    %v374 = vpop.xlane.xlu0 %373
    %v375 = vsel %vm365, %v338, 0.0
    %376 = vadd.xlane.f32.xlu0 %v375
    %v377 = vpop.xlane.xlu0 %376
    %v378 = vsel %vm365, %v341, 0.0
    %379 = vadd.xlane.f32.xlu0 %v378
    %v380 = vpop.xlane.xlu0 %379
    %v381 = vsel %vm365, %v344, 0.0
    %382 = vadd.xlane.f32.xlu0 %v381
    %v383 = vpop.xlane.xlu0 %382
    %v384 = vsel %vm365, %v347, 0.0
    %385 = vadd.xlane.f32.xlu0 %v384
    %v386 = vpop.xlane.xlu0 %385
    %v387 = vrcp.pop 32.0
    %v388 = vmul.f32 32.0, %v387
    %v389 = vsub.f32 1.0, %v388
    %v390 = vmul.f32 %v387, %v389
    %v391 = vadd.f32 %v387, %v390
    %vm392 = vweird.f32 %v387
    %v393 = vsel %vm392, %v387, %v391
    %v394 = vmul.f32 %v368, %v393
    %v395 = vmul.f32 %v371, %v393
    %v396 = vmul.f32 %v374, %v393
    %v397 = vmul.f32 %v377, %v393
    %v398 = vmul.f32 %v380, %v393
    %v399 = vmul.f32 %v383, %v393
    %v400 = vmul.f32 %v386, %v393
    %v401 = vsub.f32 %v329, %v394
    %v402 = vsub.f32 %v332, %v395
    %v403 = vsub.f32 %v335, %v396
    %v404 = vsub.f32 %v338, %v397
    %v405 = vsub.f32 %v341, %v398
    %v406 = vsub.f32 %v344, %v399
    %v407 = vsub.f32 %v347, %v400
    %v408 = vmul.f32 %v401, %v401
    %v409 = vmul.f32 %v402, %v402
    %v410 = vmul.f32 %v403, %v403
    %v411 = vmul.f32 %v404, %v404
    %v412 = vmul.f32 %v405, %v405
    %v413 = vmul.f32 %v406, %v406
    %v414 = vmul.f32 %v407, %v407
    %v415 = vsel %vm365, %v408, 0.0
    %416 = vadd.xlane.f32.xlu0 %v415
    %v417 = vpop.xlane.xlu0 %416
    %v418 = vsel %vm365, %v409, 0.0
    %419 = vadd.xlane.f32.xlu0 %v418
    %v420 = vpop.xlane.xlu0 %419
    %v421 = vsel %vm365, %v410, 0.0
    %422 = vadd.xlane.f32.xlu0 %v421
    %v423 = vpop.xlane.xlu0 %422
    %v424 = vsel %vm365, %v411, 0.0
    %425 = vadd.xlane.f32.xlu0 %v424
    %v426 = vpop.xlane.xlu0 %425
    %v427 = vsel %vm365, %v412, 0.0
    %428 = vadd.xlane.f32.xlu0 %v427
    %v429 = vpop.xlane.xlu0 %428
    %v430 = vsel %vm365, %v413, 0.0
    %431 = vadd.xlane.f32.xlu0 %v430
    %v432 = vpop.xlane.xlu0 %431
    %v433 = vsel %vm365, %v414, 0.0
    %434 = vadd.xlane.f32.xlu0 %v433
    %v435 = vpop.xlane.xlu0 %434
    %v436 = vmul.f32 %v417, %v393
    %v437 = vmul.f32 %v420, %v393
    %v438 = vmul.f32 %v423, %v393
    %v439 = vmul.f32 %v426, %v393
    %v440 = vmul.f32 %v429, %v393
    %v441 = vmul.f32 %v432, %v393
    %v442 = vmul.f32 %v435, %v393
    %v443 = vadd.f32 %v436, 1e-05
    %v444 = vadd.f32 %v437, 1e-05
    %v445 = vadd.f32 %v438, 1e-05
    %v446 = vadd.f32 %v439, 1e-05
    %v447 = vadd.f32 %v440, 1e-05
    %v448 = vadd.f32 %v441, 1e-05
    %v449 = vadd.f32 %v442, 1e-05
    %v450 = vrsqrt.pop %v443
    %v451 = vmul.f32 %v450, %v443
    %v452 = vmul.f32 %v451, %v450
    %v453 = vmul.f32 0.5, %v452
    %v454 = vsub.f32 1.5, %v453
    %v455 = vmul.f32 %v450, %v454
    %vm456 = vweird.f32 %v443
    %vm457 = vweird.f32 %v450
    %vm458 = vmor %vm456, %vm457
    %v459 = vsel %vm458, %v450, %v455
    %v460 = vrsqrt.pop %v444
    %v461 = vmul.f32 %v460, %v444
    %v462 = vmul.f32 %v461, %v460
    %v463 = vmul.f32 0.5, %v462
    %v464 = vsub.f32 1.5, %v463
    %v465 = vmul.f32 %v460, %v464
    %vm466 = vweird.f32 %v444
    %vm467 = vweird.f32 %v460
    %vm468 = vmor %vm466, %vm467
    %v469 = vsel %vm468, %v460, %v465
    %v470 = vrsqrt.pop %v445
    %v471 = vmul.f32 %v470, %v445
    %v472 = vmul.f32 %v471, %v470
    %v473 = vmul.f32 0.5, %v472
    %v474 = vsub.f32 1.5, %v473
    %v475 = vmul.f32 %v470, %v474
    %vm476 = vweird.f32 %v445
    %vm477 = vweird.f32 %v470
    %vm478 = vmor %vm476, %vm477
    %v479 = vsel %vm478, %v470, %v475
    %v480 = vrsqrt.pop %v446
    %v481 = vmul.f32 %v480, %v446
    %v482 = vmul.f32 %v481, %v480
    %v483 = vmul.f32 0.5, %v482
    %v484 = vsub.f32 1.5, %v483
    %v485 = vmul.f32 %v480, %v484
    %vm486 = vweird.f32 %v446
    %vm487 = vweird.f32 %v480
    %vm488 = vmor %vm486, %vm487
    %v489 = vsel %vm488, %v480, %v485
    %v490 = vrsqrt.pop %v447
    %v491 = vmul.f32 %v490, %v447
    %v492 = vmul.f32 %v491, %v490
    %v493 = vmul.f32 0.5, %v492
    %v494 = vsub.f32 1.5, %v493
    %v495 = vmul.f32 %v490, %v494
    %vm496 = vweird.f32 %v447
    %vm497 = vweird.f32 %v490
    %vm498 = vmor %vm496, %vm497
    %v499 = vsel %vm498, %v490, %v495
    %v500 = vrsqrt.pop %v448
    %v501 = vmul.f32 %v500, %v448
    %v502 = vmul.f32 %v501, %v500
    %v503 = vmul.f32 0.5, %v502
    %v504 = vsub.f32 1.5, %v503
    %v505 = vmul.f32 %v500, %v504
    %vm506 = vweird.f32 %v448
    %vm507 = vweird.f32 %v500
    %vm508 = vmor %vm506, %vm507
    %v509 = vsel %vm508, %v500, %v505
    %v510 = vrsqrt.pop %v449
    %v511 = vmul.f32 %v510, %v449
    %v512 = vmul.f32 %v511, %v510
    %v513 = vmul.f32 0.5, %v512
    %v514 = vsub.f32 1.5, %v513
    %v515 = vmul.f32 %v510, %v514
    %vm516 = vweird.f32 %v449
    %vm517 = vweird.f32 %v510
    %vm518 = vmor %vm516, %vm517
    %v519 = vsel %vm518, %v510, %v515
    %v520 = vmul.f32 %v401, %v459
    %v521 = vmul.f32 %v402, %v469
    %v522 = vmul.f32 %v403, %v479
    %v523 = vmul.f32 %v404, %v489
    %v524 = vmul.f32 %v405, %v499
    %v525 = vmul.f32 %v406, %v509
    %v526 = vmul.f32 %v407, %v519
    %v527 = vperm.slane %v364, 0
    %v528 = vmul.f32 %v520, %v527
    %v529 = vmul.f32 %v521, %v527
    %v530 = vmul.f32 %v522, %v527
    %v531 = vmul.f32 %v523, %v527
    %v532 = vmul.f32 %v524, %v527
    %v533 = vmul.f32 %v525, %v527
    %v534 = vmul.f32 %v526, %v527
    %v535 = vperm.slane %v364, 1
    %v536 = vadd.f32 %v528, %v535
    %v537 = vadd.f32 %v529, %v535
    %v538 = vadd.f32 %v530, %v535
    %v539 = vadd.f32 %v531, %v535
    %v540 = vadd.f32 %v532, %v535
    %v541 = vadd.f32 %v533, %v535
    %v542 = vadd.f32 %v534, %v535
    %v543 = vld [vmem:[%s6] sm:$0xff]
    %v544 = vld [vmem:[%s6 + $0x8] sm:$0xff]
    %v545 = vld [vmem:[%s6 + $0x10] sm:$0xff]
    %v546 = vld [vmem:[%s6 + $0x18] sm:$0xff]
    %v548 = vsel %vm365, %v536, 0
    %v551 = vsel %vm365, %v537, 0
    %v554 = vsel %vm365, %v538, 0
    %v557 = vsel %vm365, %v539, 0
    %v560 = vsel %vm365, %v540, 0
    %v563 = vsel %vm365, %v541, 0
    %v566 = vsel %vm365, %v542, 0
    %568 = vmatpush.msra.mxu0 0.0
    %569 = vmatpush.msra.mxu0 0.0
    %570 = vmatpush.msra.mxu0 0.0
    %571 = vmatpush.msra.mxu0 0.0
    %572 = vmatpush.msra.mxu0 0.0
    %573 = vmatpush.msra.mxu0 0.0
    %574 = vmatpush.msra.mxu0 0.0
    %575 = vmatpush.msra.mxu0 0.0
    %576 = vmatpush.msra.mxu0 0.0
    %577 = vmatpush.msra.mxu0 0.0
    %578 = vmatpush.msra.mxu0 0.0
    %579 = vmatpush.msra.mxu0 0.0
    %580 = vmatpush.msra.mxu0 %v546
    %581 = vmatpush.msra.mxu0 %v545
    %582 = vmatpush.msra.mxu0 %v544
    %583 = vmatpush.msra.mxu0 %v543
    %584 = vmatmul.f32.gmra.mxu0 %v548
    %v585 = vpop.f32.mrf.mxu0
    %v586 = vadd.f32 0.0, %v585
    %587 = vmatmul.f32.gmra.mxu0 %v551
    %v588 = vpop.f32.mrf.mxu0
    %v589 = vadd.f32 0.0, %v588
    %590 = vmatmul.f32.gmra.mxu0 %v554
    %v591 = vpop.f32.mrf.mxu0
    %v592 = vadd.f32 0.0, %v591
    %593 = vmatmul.f32.gmra.mxu0 %v557
    %v594 = vpop.f32.mrf.mxu0
    %v595 = vadd.f32 0.0, %v594
    %596 = vmatmul.f32.gmra.mxu0 %v560
    %v597 = vpop.f32.mrf.mxu0
    %v598 = vadd.f32 0.0, %v597
    %599 = vmatmul.f32.gmra.mxu0 %v563
    %v600 = vpop.f32.mrf.mxu0
    %v601 = vadd.f32 0.0, %v600
    %602 = vmatmul.f32.gmra.mxu0 %v566
    %v603 = vpop.f32.mrf.mxu0
    %v604 = vadd.f32 0.0, %v603
    %605 = vdwg.mxu0
    %s606 = scalar_lea.vmem %s6, 32
    %v607 = vld [vmem:[%s606] sm:$0xff]
    %v608 = vld [vmem:[%s606 + $0x8] sm:$0xff]
    %v609 = vld [vmem:[%s606 + $0x10] sm:$0xff]
    %v610 = vld [vmem:[%s606 + $0x18] sm:$0xff]
    %611 = vmatpush.msra.mxu0 0.0
    %612 = vmatpush.msra.mxu0 0.0
    %613 = vmatpush.msra.mxu0 0.0
    %614 = vmatpush.msra.mxu0 0.0
    %615 = vmatpush.msra.mxu0 0.0
    %616 = vmatpush.msra.mxu0 0.0
    %617 = vmatpush.msra.mxu0 0.0
    %618 = vmatpush.msra.mxu0 0.0
    %619 = vmatpush.msra.mxu0 0.0
    %620 = vmatpush.msra.mxu0 0.0
    %621 = vmatpush.msra.mxu0 0.0
    %622 = vmatpush.msra.mxu0 0.0
    %623 = vmatpush.msra.mxu0 %v610
    %624 = vmatpush.msra.mxu0 %v609
    %625 = vmatpush.msra.mxu0 %v608
    %626 = vmatpush.msra.mxu0 %v607
    %627 = vmatmul.f32.gmra.mxu0 %v548
    %v628 = vpop.f32.mrf.mxu0
    %v629 = vadd.f32 0.0, %v628
    %630 = vmatmul.f32.gmra.mxu0 %v551
    %v631 = vpop.f32.mrf.mxu0
    %v632 = vadd.f32 0.0, %v631
    %633 = vmatmul.f32.gmra.mxu0 %v554
    %v634 = vpop.f32.mrf.mxu0
    %v635 = vadd.f32 0.0, %v634
    %636 = vmatmul.f32.gmra.mxu0 %v557
    %v637 = vpop.f32.mrf.mxu0
    %v638 = vadd.f32 0.0, %v637
    %639 = vmatmul.f32.gmra.mxu0 %v560
    %v640 = vpop.f32.mrf.mxu0
    %v641 = vadd.f32 0.0, %v640
    %642 = vmatmul.f32.gmra.mxu0 %v563
    %v643 = vpop.f32.mrf.mxu0
    %v644 = vadd.f32 0.0, %v643
    %645 = vmatmul.f32.gmra.mxu0 %v566
    %v646 = vpop.f32.mrf.mxu0
    %v647 = vadd.f32 0.0, %v646
    %648 = vdwg.mxu0
    %s649 = scalar_lea.vmem %s6, 64
    %v650 = vld [vmem:[%s649] sm:$0xff]
    %v651 = vld [vmem:[%s649 + $0x8] sm:$0xff]
    %v652 = vld [vmem:[%s649 + $0x10] sm:$0xff]
    %v653 = vld [vmem:[%s649 + $0x18] sm:$0xff]
    %654 = vmatpush.msra.mxu0 0.0
    %655 = vmatpush.msra.mxu0 0.0
    %656 = vmatpush.msra.mxu0 0.0
    %657 = vmatpush.msra.mxu0 0.0
    %658 = vmatpush.msra.mxu0 0.0
    %659 = vmatpush.msra.mxu0 0.0
    %660 = vmatpush.msra.mxu0 0.0
    %661 = vmatpush.msra.mxu0 0.0
    %662 = vmatpush.msra.mxu0 0.0
    %663 = vmatpush.msra.mxu0 0.0
    %664 = vmatpush.msra.mxu0 0.0
    %665 = vmatpush.msra.mxu0 0.0
    %666 = vmatpush.msra.mxu0 %v653
    %667 = vmatpush.msra.mxu0 %v652
    %668 = vmatpush.msra.mxu0 %v651
    %669 = vmatpush.msra.mxu0 %v650
    %670 = vmatmul.f32.gmra.mxu0 %v548
    %v671 = vpop.f32.mrf.mxu0
    %v672 = vadd.f32 0.0, %v671
    %673 = vmatmul.f32.gmra.mxu0 %v551
    %v674 = vpop.f32.mrf.mxu0
    %v675 = vadd.f32 0.0, %v674
    %676 = vmatmul.f32.gmra.mxu0 %v554
    %v677 = vpop.f32.mrf.mxu0
    %v678 = vadd.f32 0.0, %v677
    %679 = vmatmul.f32.gmra.mxu0 %v557
    %v680 = vpop.f32.mrf.mxu0
    %v681 = vadd.f32 0.0, %v680
    %682 = vmatmul.f32.gmra.mxu0 %v560
    %v683 = vpop.f32.mrf.mxu0
    %v684 = vadd.f32 0.0, %v683
    %685 = vmatmul.f32.gmra.mxu0 %v563
    %v686 = vpop.f32.mrf.mxu0
    %v687 = vadd.f32 0.0, %v686
    %688 = vmatmul.f32.gmra.mxu0 %v566
    %v689 = vpop.f32.mrf.mxu0
    %v690 = vadd.f32 0.0, %v689
    %691 = vdwg.mxu0
    %v692 = vsel %vm365, %v586, -inf
    %693 = vmax.xlane.f32.xlu0 %v692
    %v694 = vpop.xlane.xlu0 %693
    %v695 = vsel %vm365, %v589, -inf
    %696 = vmax.xlane.f32.xlu0 %v695
    %v697 = vpop.xlane.xlu0 %696
    %v698 = vsel %vm365, %v592, -inf
    %699 = vmax.xlane.f32.xlu0 %v698
    %v700 = vpop.xlane.xlu0 %699
    %v701 = vsel %vm365, %v595, -inf
    %702 = vmax.xlane.f32.xlu0 %v701
    %v703 = vpop.xlane.xlu0 %702
    %v704 = vsel %vm365, %v598, -inf
    %705 = vmax.xlane.f32.xlu0 %v704
    %v706 = vpop.xlane.xlu0 %705
    %v707 = vsel %vm365, %v601, -inf
    %708 = vmax.xlane.f32.xlu0 %v707
    %v709 = vpop.xlane.xlu0 %708
    %v710 = vsel %vm365, %v604, -inf
    %711 = vmax.xlane.f32.xlu0 %v710
    %v712 = vpop.xlane.xlu0 %711
    %v713 = vsub.f32 %v586, %v694
    %v714 = vsub.f32 %v589, %v697
    %v715 = vsub.f32 %v592, %v700
    %v716 = vsub.f32 %v595, %v703
    %v717 = vsub.f32 %v598, %v706
    %v718 = vsub.f32 %v601, %v709
    %v719 = vsub.f32 %v604, %v712
    %v720 = vmul.f32 %v713, 1.442695
    %v721 = vpow.pop %v720
    %v722 = vmul.f32 %v714, 1.442695
    %v723 = vpow.pop %v722
    %v724 = vmul.f32 %v715, 1.442695
    %v725 = vpow.pop %v724
    %v726 = vmul.f32 %v716, 1.442695
    %v727 = vpow.pop %v726
    %v728 = vmul.f32 %v717, 1.442695
    %v729 = vpow.pop %v728
    %v730 = vmul.f32 %v718, 1.442695
    %v731 = vpow.pop %v730
    %v732 = vmul.f32 %v719, 1.442695
    %v733 = vpow.pop %v732
    %v735 = vsel %vm365, %v721, 0
    %v738 = vsel %vm365, %v723, 0
    %v741 = vsel %vm365, %v725, 0
    %v744 = vsel %vm365, %v727, 0
    %v747 = vsel %vm365, %v729, 0
    %v750 = vsel %vm365, %v731, 0
    %v753 = vsel %vm365, %v733, 0
    %755 = vmatpush.msra.mxu0 0.0
    %756 = vmatpush.msra.mxu0 0.0
    %757 = vmatpush.msra.mxu0 0.0
    %758 = vmatpush.msra.mxu0 0.0
    %759 = vmatpush.msra.mxu0 0.0
    %760 = vmatpush.msra.mxu0 0.0
    %761 = vmatpush.msra.mxu0 0.0
    %762 = vmatpush.msra.mxu0 0.0
    %763 = vmatpush.msra.mxu0 0.0
    %764 = vmatpush.msra.mxu0 0.0
    %765 = vmatpush.msra.mxu0 0.0
    %766 = vmatpush.msra.mxu0 0.0
    %767 = vmatpush.msra.mxu0 %v352
    %768 = vmatpush.msra.mxu0 %v351
    %769 = vmatpush.msra.mxu0 %v350
    %770 = vmatpush.msra.mxu0 %v349
    %771 = vmatmul.f32.gmra.mxu0 %v735
    %v772 = vpop.f32.mrf.mxu0
    %v773 = vadd.f32 0.0, %v772
    %774 = vmatmul.f32.gmra.mxu0 %v738
    %v775 = vpop.f32.mrf.mxu0
    %v776 = vadd.f32 0.0, %v775
    %777 = vmatmul.f32.gmra.mxu0 %v741
    %v778 = vpop.f32.mrf.mxu0
    %v779 = vadd.f32 0.0, %v778
    %780 = vmatmul.f32.gmra.mxu0 %v744
    %v781 = vpop.f32.mrf.mxu0
    %v782 = vadd.f32 0.0, %v781
    %783 = vmatmul.f32.gmra.mxu0 %v747
    %v784 = vpop.f32.mrf.mxu0
    %v785 = vadd.f32 0.0, %v784
    %786 = vmatmul.f32.gmra.mxu0 %v750
    %v787 = vpop.f32.mrf.mxu0
    %v788 = vadd.f32 0.0, %v787
    %789 = vmatmul.f32.gmra.mxu0 %v753
    %v790 = vpop.f32.mrf.mxu0
    %v791 = vadd.f32 0.0, %v790
    %792 = vdwg.mxu0
    %v793 = vrcp.pop %v773
    %v794 = vrcp.pop %v776
    %v795 = vrcp.pop %v779
    %v796 = vrcp.pop %v782
    %v797 = vrcp.pop %v785
    %v798 = vrcp.pop %v788
    %v799 = vrcp.pop %v791
    %v800 = vmul.f32 %v721, %v793
    %v801 = vmul.f32 %v723, %v794
    %v802 = vmul.f32 %v725, %v795
    %v803 = vmul.f32 %v727, %v796
    %v804 = vmul.f32 %v729, %v797
    %v805 = vmul.f32 %v731, %v798
    %v806 = vmul.f32 %v733, %v799
    %v807 = vmul.f32 %v800, 0.35355338
    %v808 = vmul.f32 %v801, 0.35355338
    %v809 = vmul.f32 %v802, 0.35355338
    %v810 = vmul.f32 %v803, 0.35355338
    %v811 = vmul.f32 %v804, 0.35355338
    %v812 = vmul.f32 %v805, 0.35355338
    %v813 = vmul.f32 %v806, 0.35355338
    %v814 = vsel %vm365, %v629, -inf
    %v815 = vsel %vm365, %v632, -inf
    %v816 = vsel %vm365, %v635, -inf
    %v817 = vsel %vm365, %v638, -inf
    %v818 = vsel %vm365, %v641, -inf
    %v819 = vmax.f32 %v814, %v818
    %v820 = vsel %vm365, %v644, -inf
    %v821 = vmax.f32 %v815, %v820
    %v822 = vsel %vm365, %v647, -inf
    %v823 = vmax.f32 %v816, %v822
    %v824 = vmax.f32 %v819, %v821
    %v825 = vmax.f32 %v823, %v817
    %v826 = vmax.f32 %v824, %v825
    %v827 = vrot.slane %v826, 4
    %v828 = vmax.f32 %v826, %v827
    %v829 = vrot.slane %v828, 2
    %v830 = vmax.f32 %v828, %v829
    %v831 = vrot.slane %v830, 1
    %v832 = vmax.f32 %v830, %v831
    %v833 = vsub.f32 %v629, %v832
    %v834 = vsub.f32 %v632, %v832
    %v835 = vsub.f32 %v635, %v832
    %v836 = vsub.f32 %v638, %v832
    %v837 = vsub.f32 %v641, %v832
    %v838 = vsub.f32 %v644, %v832
    %v839 = vsub.f32 %v647, %v832
    %v840 = vmul.f32 %v833, 1.442695
    %v841 = vpow.pop %v840
    %v842 = vmul.f32 %v834, 1.442695
    %v843 = vpow.pop %v842
    %v844 = vmul.f32 %v835, 1.442695
    %v845 = vpow.pop %v844
    %v846 = vmul.f32 %v836, 1.442695
    %v847 = vpow.pop %v846
    %v848 = vmul.f32 %v837, 1.442695
    %v849 = vpow.pop %v848
    %v850 = vmul.f32 %v838, 1.442695
    %v851 = vpow.pop %v850
    %v852 = vmul.f32 %v839, 1.442695
    %v853 = vpow.pop %v852
    %861 = vrot.lane.b32.xlu0 %v841, 32
    %v862 = vpop.permute.xlu0 %861
    %863 = vrot.lane.b32.xlu0 %v843, 32
    %v864 = vpop.permute.xlu0 %863
    %865 = vrot.lane.b32.xlu0 %v845, 32
    %v866 = vpop.permute.xlu0 %865
    %867 = vrot.lane.b32.xlu0 %v847, 32
    %v868 = vpop.permute.xlu0 %867
    %869 = vrot.lane.b32.xlu0 %v849, 32
    %v870 = vpop.permute.xlu0 %869
    %871 = vrot.lane.b32.xlu0 %v851, 32
    %v872 = vpop.permute.xlu0 %871
    %873 = vrot.lane.b32.xlu0 %v853, 32
    %v874 = vpop.permute.xlu0 %873
    %v882 = vsel %vm365, %v841, %v862
    %v883 = vsel %vm365, %v843, %v864
    %v884 = vsel %vm365, %v845, %v866
    %v885 = vsel %vm365, %v847, %v868
    %v886 = vsel %vm365, %v849, %v870
    %v887 = vsel %vm365, %v851, %v872
    %v888 = vsel %vm365, %v853, %v874
    %v889 = vmul.f32 %v882, %v357
    %v890 = vmul.f32 %v883, %v358
    %v891 = vmul.f32 %v884, %v359
    %v892 = vmul.f32 %v885, %v360
    %v893 = vmul.f32 %v886, %v361
    %v894 = vmul.f32 %v887, %v362
    %v895 = vmul.f32 %v888, %v363
    %vm896 = vcmask 523264
    %v897 = vsel %vm896, %v889, 0.0
    %v898 = vsel %vm896, %v890, 0.0
    %v899 = vadd.f32 %v897, %v898
    %v900 = vsel %vm896, %v891, 0.0
    %v901 = vadd.f32 %v899, %v900
    %v902 = vsel %vm896, %v892, 0.0
    %v903 = vadd.f32 %v901, %v902
    %v904 = vsel %vm896, %v893, 0.0
    %v905 = vadd.f32 %v903, %v904
    %v906 = vsel %vm896, %v894, 0.0
    %v907 = vadd.f32 %v905, %v906
    %v908 = vsel %vm896, %v895, 0.0
    %v909 = vadd.f32 %v907, %v908
    %v910 = vrot.slane %v909, 4
    %v911 = vadd.f32 %v909, %v910
    %v912 = vrot.slane %v911, 2
    %v913 = vadd.f32 %v911, %v912
    %v914 = vrot.slane %v913, 1
    %v915 = vadd.f32 %v913, %v914
    %v916 = vrcp.pop %v915
    %v917 = vmul.f32 %v889, %v916
    %v918 = vmul.f32 %v890, %v916
    %v919 = vmul.f32 %v891, %v916
    %v920 = vmul.f32 %v892, %v916
    %v921 = vmul.f32 %v893, %v916
    %v922 = vmul.f32 %v894, %v916
    %v923 = vmul.f32 %v895, %v916
    %924 = vxpose.xlu0.b32.start [1/16] %v917, 128
    %925 = vxpose.xlu0.b32.cont [2/16] %v918, 128
    %926 = vxpose.xlu0.b32.cont [3/16] %v919, 128
    %927 = vxpose.xlu0.b32.cont [4/16] %v920, 128
    %928 = vxpose.xlu0.b32.cont [5/16] %v921, 128
    %929 = vxpose.xlu0.b32.cont [6/16] %v922, 128
    %930 = vxpose.xlu0.b32.cont [7/16] %v923, 128
    %931 = vxpose.xlu0.b32.cont [8/16] 0.0, 128
    %932 = vxpose.xlu0.b32.cont [9/16] 0.0, 128
    %933 = vxpose.xlu0.b32.cont [10/16] 0.0, 128
    %934 = vxpose.xlu0.b32.cont [11/16] 0.0, 128
    %935 = vxpose.xlu0.b32.cont [12/16] 0.0, 128
    %936 = vxpose.xlu0.b32.cont [13/16] 0.0, 128
    %937 = vxpose.xlu0.b32.cont [14/16] 0.0, 128
    %938 = vxpose.xlu0.b32.cont [15/16] 0.0, 128
    %939 = vxpose.xlu0.b32.end [16/16] 0.0, 128
    %v940 = vpop.trf.xlu0
    %v941 = vpop.trf.xlu0
    %v942 = vpop.trf.xlu0
    %v943 = vpop.trf.xlu0
    %v944 = vpop.trf.xlu0
    %v945 = vpop.trf.xlu0
    %v946 = vpop.trf.xlu0
    %v947 = vpop.trf.xlu0
    %v948 = vpop.trf.xlu0
    %v949 = vpop.trf.xlu0
    %v950 = vpop.trf.xlu0
    %v951 = vpop.trf.xlu0
    %v952 = vpop.trf.xlu0
    %v953 = vpop.trf.xlu0
    %v954 = vpop.trf.xlu0
    %v955 = vpop.trf.xlu0
    %vm956 = vcmask 457728
    %v958 = vsel %vm956, %v940, 0
    %v961 = vsel %vm956, %v941, 0
    %v964 = vsel %vm956, %v942, 0
    %v967 = vsel %vm956, %v943, 0
    %v970 = vsel %vm956, %v944, 0
    %v973 = vsel %vm956, %v945, 0
    %v976 = vsel %vm956, %v946, 0
    %v979 = vsel %vm956, %v947, 0
    %981 = vmatpush.msra.mxu0 0.0
    %982 = vmatpush.msra.mxu0 0.0
    %983 = vmatpush.msra.mxu0 0.0
    %984 = vmatpush.msra.mxu0 0.0
    %985 = vmatpush.msra.mxu0 0.0
    %986 = vmatpush.msra.mxu0 0.0
    %987 = vmatpush.msra.mxu0 0.0
    %988 = vmatpush.msra.mxu0 0.0
    %989 = vmatpush.msra.mxu0 0.0
    %990 = vmatpush.msra.mxu0 %v690
    %991 = vmatpush.msra.mxu0 %v687
    %992 = vmatpush.msra.mxu0 %v684
    %993 = vmatpush.msra.mxu0 %v681
    %994 = vmatpush.msra.mxu0 %v678
    %995 = vmatpush.msra.mxu0 %v675
    %996 = vmatpush.msra.mxu0 %v672
    %997 = vmatmul.f32.gmra.mxu0 %v958
    %v998 = vpop.f32.mrf.mxu0
    %v999 = vadd.f32 0.0, %v998
    %1000 = vmatmul.f32.gmra.mxu0 %v961
    %v1001 = vpop.f32.mrf.mxu0
    %v1002 = vadd.f32 0.0, %v1001
    %1003 = vmatmul.f32.gmra.mxu0 %v964
    %v1004 = vpop.f32.mrf.mxu0
    %v1005 = vadd.f32 0.0, %v1004
    %1006 = vmatmul.f32.gmra.mxu0 %v967
    %v1007 = vpop.f32.mrf.mxu0
    %v1008 = vadd.f32 0.0, %v1007
    %1009 = vmatmul.f32.gmra.mxu0 %v970
    %v1010 = vpop.f32.mrf.mxu0
    %v1011 = vadd.f32 0.0, %v1010
    %1012 = vmatmul.f32.gmra.mxu0 %v973
    %v1013 = vpop.f32.mrf.mxu0
    %v1014 = vadd.f32 0.0, %v1013
    %1015 = vmatmul.f32.gmra.mxu0 %v976
    %v1016 = vpop.f32.mrf.mxu0
    %v1017 = vadd.f32 0.0, %v1016
    %1018 = vmatmul.f32.gmra.mxu0 %v979
    %v1019 = vpop.f32.mrf.mxu0
    %v1020 = vadd.f32 0.0, %v1019
    %1021 = vdwg.mxu0
    %1029 = vrot.lane.b32.xlu0 %v807, 32
    %v1030 = vpop.permute.xlu0 %1029
    %1031 = vrot.lane.b32.xlu0 %v808, 32
    %v1032 = vpop.permute.xlu0 %1031
    %1033 = vrot.lane.b32.xlu0 %v809, 32
    %v1034 = vpop.permute.xlu0 %1033
    %1035 = vrot.lane.b32.xlu0 %v810, 32
    %v1036 = vpop.permute.xlu0 %1035
    %1037 = vrot.lane.b32.xlu0 %v811, 32
    %v1038 = vpop.permute.xlu0 %1037
    %1039 = vrot.lane.b32.xlu0 %v812, 32
    %v1040 = vpop.permute.xlu0 %1039
    %1041 = vrot.lane.b32.xlu0 %v813, 32
    %v1042 = vpop.permute.xlu0 %1041
    %v1050 = vsel %vm365, %v807, %v1030
    %v1051 = vsel %vm365, %v808, %v1032
    %v1052 = vsel %vm365, %v809, %v1034
    %v1053 = vsel %vm365, %v810, %v1036
    %v1054 = vsel %vm365, %v811, %v1038
    %v1055 = vsel %vm365, %v812, %v1040
    %v1056 = vsel %vm365, %v813, %v1042
    %v1057 = vmul.f32 %v1050, %v357
    %v1058 = vmul.f32 %v1051, %v358
    %v1059 = vmul.f32 %v1052, %v359
    %v1060 = vmul.f32 %v1053, %v360
    %v1061 = vmul.f32 %v1054, %v361
    %v1062 = vmul.f32 %v1055, %v362
    %v1063 = vmul.f32 %v1056, %v363
    %v1064 = vmul.f32 %v999, %v349
    %v1065 = vmul.f32 %v1002, %v350
    %v1066 = vmul.f32 %v1005, %v351
    %v1067 = vmul.f32 %v1008, %v352
    %v1068 = vmul.f32 %v1011, %v353
    %v1069 = vmul.f32 %v1014, %v354
    %v1070 = vmul.f32 %v1017, %v355
    %v1071 = vmul.f32 %v1020, %v356
    %v1073 = vsel %vm896, %v1057, 0
    %v1076 = vsel %vm896, %v1058, 0
    %v1079 = vsel %vm896, %v1059, 0
    %v1082 = vsel %vm896, %v1060, 0
    %v1085 = vsel %vm896, %v1061, 0
    %v1088 = vsel %vm896, %v1062, 0
    %v1091 = vsel %vm896, %v1063, 0
    %1093 = vmatpush.msra.mxu0 0.0
    %1094 = vmatpush.msra.mxu0 0.0
    %1095 = vmatpush.msra.mxu0 0.0
    %1096 = vmatpush.msra.mxu0 0.0
    %1097 = vmatpush.msra.mxu0 0.0
    %1098 = vmatpush.msra.mxu0 0.0
    %1099 = vmatpush.msra.mxu0 0.0
    %1100 = vmatpush.msra.mxu0 0.0
    %1101 = vmatpush.msra.mxu0 %v1071
    %1102 = vmatpush.msra.mxu0 %v1070
    %1103 = vmatpush.msra.mxu0 %v1069
    %1104 = vmatpush.msra.mxu0 %v1068
    %1105 = vmatpush.msra.mxu0 %v1067
    %1106 = vmatpush.msra.mxu0 %v1066
    %1107 = vmatpush.msra.mxu0 %v1065
    %1108 = vmatpush.msra.mxu0 %v1064
    %1109 = vmatmul.f32.gmra.mxu0 %v1073
    %v1110 = vpop.f32.mrf.mxu0
    %v1111 = vadd.f32 0.0, %v1110
    %1112 = vmatmul.f32.gmra.mxu0 %v1076
    %v1113 = vpop.f32.mrf.mxu0
    %v1114 = vadd.f32 0.0, %v1113
    %1115 = vmatmul.f32.gmra.mxu0 %v1079
    %v1116 = vpop.f32.mrf.mxu0
    %v1117 = vadd.f32 0.0, %v1116
    %1118 = vmatmul.f32.gmra.mxu0 %v1082
    %v1119 = vpop.f32.mrf.mxu0
    %v1120 = vadd.f32 0.0, %v1119
    %1121 = vmatmul.f32.gmra.mxu0 %v1085
    %v1122 = vpop.f32.mrf.mxu0
    %v1123 = vadd.f32 0.0, %v1122
    %1124 = vmatmul.f32.gmra.mxu0 %v1088
    %v1125 = vpop.f32.mrf.mxu0
    %v1126 = vadd.f32 0.0, %v1125
    %1127 = vmatmul.f32.gmra.mxu0 %v1091
    %v1128 = vpop.f32.mrf.mxu0
    %v1129 = vadd.f32 0.0, %v1128
    %1130 = vdwg.mxu0
    %s1131 = scalar_lea.vmem %s6, 96
    %v1132 = vld [vmem:[%s1131] sm:$0xff]
    %v1133 = vld [vmem:[%s1131 + $0x8] sm:$0xff]
    %v1134 = vld [vmem:[%s1131 + $0x10] sm:$0xff]
    %v1135 = vld [vmem:[%s1131 + $0x18] sm:$0xff]
    %v1136 = vperm.slane %v364, 2
    %v1138 = vsel %vm365, %v1111, 0
    %v1141 = vsel %vm365, %v1114, 0
    %v1144 = vsel %vm365, %v1117, 0
    %v1147 = vsel %vm365, %v1120, 0
    %v1150 = vsel %vm365, %v1123, 0
    %v1153 = vsel %vm365, %v1126, 0
    %v1156 = vsel %vm365, %v1129, 0
    %1158 = vmatpush.msra.mxu0 0.0
    %1159 = vmatpush.msra.mxu0 0.0
    %1160 = vmatpush.msra.mxu0 0.0
    %1161 = vmatpush.msra.mxu0 0.0
    %1162 = vmatpush.msra.mxu0 0.0
    %1163 = vmatpush.msra.mxu0 0.0
    %1164 = vmatpush.msra.mxu0 0.0
    %1165 = vmatpush.msra.mxu0 0.0
    %1166 = vmatpush.msra.mxu0 0.0
    %1167 = vmatpush.msra.mxu0 0.0
    %1168 = vmatpush.msra.mxu0 0.0
    %1169 = vmatpush.msra.mxu0 0.0
    %1170 = vmatpush.msra.mxu0 %v1135
    %1171 = vmatpush.msra.mxu0 %v1134
    %1172 = vmatpush.msra.mxu0 %v1133
    %1173 = vmatpush.msra.mxu0 %v1132
    %1174 = vmatmul.f32.gmra.mxu0 %v1138
    %v1175 = vpop.f32.mrf.mxu0
    %v1176 = vadd.f32 %v1136, %v1175
    %1177 = vmatmul.f32.gmra.mxu0 %v1141
    %v1178 = vpop.f32.mrf.mxu0
    %v1179 = vadd.f32 %v1136, %v1178
    %1180 = vmatmul.f32.gmra.mxu0 %v1144
    %v1181 = vpop.f32.mrf.mxu0
    %v1182 = vadd.f32 %v1136, %v1181
    %1183 = vmatmul.f32.gmra.mxu0 %v1147
    %v1184 = vpop.f32.mrf.mxu0
    %v1185 = vadd.f32 %v1136, %v1184
    %1186 = vmatmul.f32.gmra.mxu0 %v1150
    %v1187 = vpop.f32.mrf.mxu0
    %v1188 = vadd.f32 %v1136, %v1187
    %1189 = vmatmul.f32.gmra.mxu0 %v1153
    %v1190 = vpop.f32.mrf.mxu0
    %v1191 = vadd.f32 %v1136, %v1190
    %1192 = vmatmul.f32.gmra.mxu0 %v1156
    %v1193 = vpop.f32.mrf.mxu0
    %v1194 = vadd.f32 %v1136, %v1193
    %1195 = vdwg.mxu0
    %v1196 = vadd.f32 %v329, %v1176
    %v1197 = vadd.f32 %v332, %v1179
    %v1198 = vadd.f32 %v335, %v1182
    %v1199 = vadd.f32 %v338, %v1185
    %v1200 = vadd.f32 %v341, %v1188
    %v1201 = vadd.f32 %v344, %v1191
    %v1202 = vadd.f32 %v347, %v1194
    %v1203 = vsel %vm365, %v1196, 0.0
    %1204 = vadd.xlane.f32.xlu0 %v1203
    %v1205 = vpop.xlane.xlu0 %1204
    %v1206 = vsel %vm365, %v1197, 0.0
    %1207 = vadd.xlane.f32.xlu0 %v1206
    %v1208 = vpop.xlane.xlu0 %1207
    %v1209 = vsel %vm365, %v1198, 0.0
    %1210 = vadd.xlane.f32.xlu0 %v1209
    %v1211 = vpop.xlane.xlu0 %1210
    %v1212 = vsel %vm365, %v1199, 0.0
    %1213 = vadd.xlane.f32.xlu0 %v1212
    %v1214 = vpop.xlane.xlu0 %1213
    %v1215 = vsel %vm365, %v1200, 0.0
    %1216 = vadd.xlane.f32.xlu0 %v1215
    %v1217 = vpop.xlane.xlu0 %1216
    %v1218 = vsel %vm365, %v1201, 0.0
    %1219 = vadd.xlane.f32.xlu0 %v1218
    %v1220 = vpop.xlane.xlu0 %1219
    %v1221 = vsel %vm365, %v1202, 0.0
    %1222 = vadd.xlane.f32.xlu0 %v1221
    %v1223 = vpop.xlane.xlu0 %1222
    %v1224 = vmul.f32 %v1205, %v393
    %v1225 = vmul.f32 %v1208, %v393
    %v1226 = vmul.f32 %v1211, %v393
    %v1227 = vmul.f32 %v1214, %v393
    %v1228 = vmul.f32 %v1217, %v393
    %v1229 = vmul.f32 %v1220, %v393
    %v1230 = vmul.f32 %v1223, %v393
    %v1231 = vsub.f32 %v1196, %v1224
    %v1232 = vsub.f32 %v1197, %v1225
    %v1233 = vsub.f32 %v1198, %v1226
    %v1234 = vsub.f32 %v1199, %v1227
    %v1235 = vsub.f32 %v1200, %v1228
    %v1236 = vsub.f32 %v1201, %v1229
    %v1237 = vsub.f32 %v1202, %v1230
    %v1238 = vmul.f32 %v1231, %v1231
    %v1239 = vmul.f32 %v1232, %v1232
    %v1240 = vmul.f32 %v1233, %v1233
    %v1241 = vmul.f32 %v1234, %v1234
    %v1242 = vmul.f32 %v1235, %v1235
    %v1243 = vmul.f32 %v1236, %v1236
    %v1244 = vmul.f32 %v1237, %v1237
    %v1245 = vsel %vm365, %v1238, 0.0
    %1246 = vadd.xlane.f32.xlu0 %v1245
    %v1247 = vpop.xlane.xlu0 %1246
    %v1248 = vsel %vm365, %v1239, 0.0
    %1249 = vadd.xlane.f32.xlu0 %v1248
    %v1250 = vpop.xlane.xlu0 %1249
    %v1251 = vsel %vm365, %v1240, 0.0
    %1252 = vadd.xlane.f32.xlu0 %v1251
    %v1253 = vpop.xlane.xlu0 %1252
    %v1254 = vsel %vm365, %v1241, 0.0
    %1255 = vadd.xlane.f32.xlu0 %v1254
    %v1256 = vpop.xlane.xlu0 %1255
    %v1257 = vsel %vm365, %v1242, 0.0
    %1258 = vadd.xlane.f32.xlu0 %v1257
    %v1259 = vpop.xlane.xlu0 %1258
    %v1260 = vsel %vm365, %v1243, 0.0
    %1261 = vadd.xlane.f32.xlu0 %v1260
    %v1262 = vpop.xlane.xlu0 %1261
    %v1263 = vsel %vm365, %v1244, 0.0
    %1264 = vadd.xlane.f32.xlu0 %v1263
    %v1265 = vpop.xlane.xlu0 %1264
    %v1266 = vmul.f32 %v1247, %v393
    %v1267 = vmul.f32 %v1250, %v393
    %v1268 = vmul.f32 %v1253, %v393
    %v1269 = vmul.f32 %v1256, %v393
    %v1270 = vmul.f32 %v1259, %v393
    %v1271 = vmul.f32 %v1262, %v393
    %v1272 = vmul.f32 %v1265, %v393
    %v1273 = vadd.f32 %v1266, 1e-05
    %v1274 = vadd.f32 %v1267, 1e-05
    %v1275 = vadd.f32 %v1268, 1e-05
    %v1276 = vadd.f32 %v1269, 1e-05
    %v1277 = vadd.f32 %v1270, 1e-05
    %v1278 = vadd.f32 %v1271, 1e-05
    %v1279 = vadd.f32 %v1272, 1e-05
    %v1280 = vrsqrt.pop %v1273
    %v1281 = vmul.f32 %v1280, %v1273
    %v1282 = vmul.f32 %v1281, %v1280
    %v1283 = vmul.f32 0.5, %v1282
    %v1284 = vsub.f32 1.5, %v1283
    %v1285 = vmul.f32 %v1280, %v1284
    %vm1286 = vweird.f32 %v1273
    %vm1287 = vweird.f32 %v1280
    %vm1288 = vmor %vm1286, %vm1287
    %v1289 = vsel %vm1288, %v1280, %v1285
    %v1290 = vrsqrt.pop %v1274
    %v1291 = vmul.f32 %v1290, %v1274
    %v1292 = vmul.f32 %v1291, %v1290
    %v1293 = vmul.f32 0.5, %v1292
    %v1294 = vsub.f32 1.5, %v1293
    %v1295 = vmul.f32 %v1290, %v1294
    %vm1296 = vweird.f32 %v1274
    %vm1297 = vweird.f32 %v1290
    %vm1298 = vmor %vm1296, %vm1297
    %v1299 = vsel %vm1298, %v1290, %v1295
    %v1300 = vrsqrt.pop %v1275
    %v1301 = vmul.f32 %v1300, %v1275
    %v1302 = vmul.f32 %v1301, %v1300
    %v1303 = vmul.f32 0.5, %v1302
    %v1304 = vsub.f32 1.5, %v1303
    %v1305 = vmul.f32 %v1300, %v1304
    %vm1306 = vweird.f32 %v1275
    %vm1307 = vweird.f32 %v1300
    %vm1308 = vmor %vm1306, %vm1307
    %v1309 = vsel %vm1308, %v1300, %v1305
    %v1310 = vrsqrt.pop %v1276
    %v1311 = vmul.f32 %v1310, %v1276
    %v1312 = vmul.f32 %v1311, %v1310
    %v1313 = vmul.f32 0.5, %v1312
    %v1314 = vsub.f32 1.5, %v1313
    %v1315 = vmul.f32 %v1310, %v1314
    %vm1316 = vweird.f32 %v1276
    %vm1317 = vweird.f32 %v1310
    %vm1318 = vmor %vm1316, %vm1317
    %v1319 = vsel %vm1318, %v1310, %v1315
    %v1320 = vrsqrt.pop %v1277
    %v1321 = vmul.f32 %v1320, %v1277
    %v1322 = vmul.f32 %v1321, %v1320
    %v1323 = vmul.f32 0.5, %v1322
    %v1324 = vsub.f32 1.5, %v1323
    %v1325 = vmul.f32 %v1320, %v1324
    %vm1326 = vweird.f32 %v1277
    %vm1327 = vweird.f32 %v1320
    %vm1328 = vmor %vm1326, %vm1327
    %v1329 = vsel %vm1328, %v1320, %v1325
    %v1330 = vrsqrt.pop %v1278
    %v1331 = vmul.f32 %v1330, %v1278
    %v1332 = vmul.f32 %v1331, %v1330
    %v1333 = vmul.f32 0.5, %v1332
    %v1334 = vsub.f32 1.5, %v1333
    %v1335 = vmul.f32 %v1330, %v1334
    %vm1336 = vweird.f32 %v1278
    %vm1337 = vweird.f32 %v1330
    %vm1338 = vmor %vm1336, %vm1337
    %v1339 = vsel %vm1338, %v1330, %v1335
    %v1340 = vrsqrt.pop %v1279
    %v1341 = vmul.f32 %v1340, %v1279
    %v1342 = vmul.f32 %v1341, %v1340
    %v1343 = vmul.f32 0.5, %v1342
    %v1344 = vsub.f32 1.5, %v1343
    %v1345 = vmul.f32 %v1340, %v1344
    %vm1346 = vweird.f32 %v1279
    %vm1347 = vweird.f32 %v1340
    %vm1348 = vmor %vm1346, %vm1347
    %v1349 = vsel %vm1348, %v1340, %v1345
    %v1350 = vmul.f32 %v1231, %v1289
    %v1351 = vmul.f32 %v1232, %v1299
    %v1352 = vmul.f32 %v1233, %v1309
    %v1353 = vmul.f32 %v1234, %v1319
    %v1354 = vmul.f32 %v1235, %v1329
    %v1355 = vmul.f32 %v1236, %v1339
    %v1356 = vmul.f32 %v1237, %v1349
    %v1357 = vperm.slane %v364, 3
    %v1358 = vmul.f32 %v1350, %v1357
    %v1359 = vmul.f32 %v1351, %v1357
    %v1360 = vmul.f32 %v1352, %v1357
    %v1361 = vmul.f32 %v1353, %v1357
    %v1362 = vmul.f32 %v1354, %v1357
    %v1363 = vmul.f32 %v1355, %v1357
    %v1364 = vmul.f32 %v1356, %v1357
    %v1365 = vperm.slane %v364, 4
    %v1366 = vadd.f32 %v1358, %v1365
    %v1367 = vadd.f32 %v1359, %v1365
    %v1368 = vadd.f32 %v1360, %v1365
    %v1369 = vadd.f32 %v1361, %v1365
    %v1370 = vadd.f32 %v1362, %v1365
    %v1371 = vadd.f32 %v1363, %v1365
    %v1372 = vadd.f32 %v1364, %v1365
    %v1373 = vld [vmem:[%s7] sm:$0xff]
    %v1374 = vld [vmem:[%s7 + $0x8] sm:$0xff]
    %v1375 = vld [vmem:[%s7 + $0x10] sm:$0xff]
    %v1376 = vld [vmem:[%s7 + $0x18] sm:$0xff]
    %v1377 = vperm.slane %v364, 5
    %v1379 = vsel %vm365, %v1366, 0
    %v1382 = vsel %vm365, %v1367, 0
    %v1385 = vsel %vm365, %v1368, 0
    %v1388 = vsel %vm365, %v1369, 0
    %v1391 = vsel %vm365, %v1370, 0
    %v1394 = vsel %vm365, %v1371, 0
    %v1397 = vsel %vm365, %v1372, 0
    %1399 = vmatpush.msra.mxu0 0.0
    %1400 = vmatpush.msra.mxu0 0.0
    %1401 = vmatpush.msra.mxu0 0.0
    %1402 = vmatpush.msra.mxu0 0.0
    %1403 = vmatpush.msra.mxu0 0.0
    %1404 = vmatpush.msra.mxu0 0.0
    %1405 = vmatpush.msra.mxu0 0.0
    %1406 = vmatpush.msra.mxu0 0.0
    %1407 = vmatpush.msra.mxu0 0.0
    %1408 = vmatpush.msra.mxu0 0.0
    %1409 = vmatpush.msra.mxu0 0.0
    %1410 = vmatpush.msra.mxu0 0.0
    %1411 = vmatpush.msra.mxu0 %v1376
    %1412 = vmatpush.msra.mxu0 %v1375
    %1413 = vmatpush.msra.mxu0 %v1374
    %1414 = vmatpush.msra.mxu0 %v1373
    %1415 = vmatmul.f32.gmra.mxu0 %v1379
    %v1416 = vpop.f32.mrf.mxu0
    %v1417 = vadd.f32 %v1377, %v1416
    %1418 = vmatmul.f32.gmra.mxu0 %v1382
    %v1419 = vpop.f32.mrf.mxu0
    %v1420 = vadd.f32 %v1377, %v1419
    %1421 = vmatmul.f32.gmra.mxu0 %v1385
    %v1422 = vpop.f32.mrf.mxu0
    %v1423 = vadd.f32 %v1377, %v1422
    %1424 = vmatmul.f32.gmra.mxu0 %v1388
    %v1425 = vpop.f32.mrf.mxu0
    %v1426 = vadd.f32 %v1377, %v1425
    %1427 = vmatmul.f32.gmra.mxu0 %v1391
    %v1428 = vpop.f32.mrf.mxu0
    %v1429 = vadd.f32 %v1377, %v1428
    %1430 = vmatmul.f32.gmra.mxu0 %v1394
    %v1431 = vpop.f32.mrf.mxu0
    %v1432 = vadd.f32 %v1377, %v1431
    %1433 = vmatmul.f32.gmra.mxu0 %v1397
    %v1434 = vpop.f32.mrf.mxu0
    %v1435 = vadd.f32 %v1377, %v1434
    %1436 = vdwg.mxu0
    %v1437 = vmul.f32 %v1417, 0.5
    %v1438 = vmul.f32 %v1420, 0.5
    %v1439 = vmul.f32 %v1423, 0.5
    %v1440 = vmul.f32 %v1426, 0.5
    %v1441 = vmul.f32 %v1429, 0.5
    %v1442 = vmul.f32 %v1432, 0.5
    %v1443 = vmul.f32 %v1435, 0.5
    %v1444 = vmul.f32 %v1417, 0.70710677
    %v1445 = vmul.f32 %v1420, 0.70710677
    %v1446 = vmul.f32 %v1423, 0.70710677
    %v1447 = vmul.f32 %v1426, 0.70710677
    %v1448 = vmul.f32 %v1429, 0.70710677
    %v1449 = vmul.f32 %v1432, 0.70710677
    %v1450 = vmul.f32 %v1435, 0.70710677
    %vm1451 = vcmp.ge.f32.partialorder %v1444, 0.0
    %vm1452 = vcmp.ge.f32.partialorder %v1445, 0.0
    %vm1453 = vcmp.ge.f32.partialorder %v1446, 0.0
    %vm1454 = vcmp.ge.f32.partialorder %v1447, 0.0
    %vm1455 = vcmp.ge.f32.partialorder %v1448, 0.0
    %vm1456 = vcmp.ge.f32.partialorder %v1449, 0.0
    %vm1457 = vcmp.ge.f32.partialorder %v1450, 0.0
    %v1458 = vsel %vm1451, 1.0, -1.0
    %v1459 = vsel %vm1452, 1.0, -1.0
    %v1460 = vsel %vm1453, 1.0, -1.0
    %v1461 = vsel %vm1454, 1.0, -1.0
    %v1462 = vsel %vm1455, 1.0, -1.0
    %v1463 = vsel %vm1456, 1.0, -1.0
    %v1464 = vsel %vm1457, 1.0, -1.0
    %v1465 = vand.u32 2147483647, %v1444
    %v1466 = vand.u32 2147483647, %v1445
    %v1467 = vand.u32 2147483647, %v1446
    %v1468 = vand.u32 2147483647, %v1447
    %v1469 = vand.u32 2147483647, %v1448
    %v1470 = vand.u32 2147483647, %v1449
    %v1471 = vand.u32 2147483647, %v1450
    %v1472 = vmul.f32 %v1465, 0.3275911
    %v1473 = vmul.f32 %v1466, 0.3275911
    %v1474 = vmul.f32 %v1467, 0.3275911
    %v1475 = vmul.f32 %v1468, 0.3275911
    %v1476 = vmul.f32 %v1469, 0.3275911
    %v1477 = vmul.f32 %v1470, 0.3275911
    %v1478 = vmul.f32 %v1471, 0.3275911
    %v1479 = vadd.f32 %v1472, 1.0
    %v1480 = vadd.f32 %v1473, 1.0
    %v1481 = vadd.f32 %v1474, 1.0
    %v1482 = vadd.f32 %v1475, 1.0
    %v1483 = vadd.f32 %v1476, 1.0
    %v1484 = vadd.f32 %v1477, 1.0
    %v1485 = vadd.f32 %v1478, 1.0
    %v1486 = vrcp.pop %v1479
    %v1487 = vmul.f32 %v1479, %v1486
    %v1488 = vsub.f32 1.0, %v1487
    %v1489 = vmul.f32 %v1486, %v1488
    %v1490 = vadd.f32 %v1486, %v1489
    %vm1491 = vweird.f32 %v1479
    %vm1492 = vweird.f32 %v1486
    %vm1493 = vmor %vm1491, %vm1492
    %v1494 = vsel %vm1493, %v1486, %v1490
    %v1495 = vand.u32 2147483647, %v1479
    %vm1496 = vcmp.eq.f32.partialorder %v1495, 8.507059e+37
    %v1497 = vand.u32 %v1479, 2147483648
    %v1498 = vor.u32 1.1754944e-38, %v1497
    %v1499 = vsel %vm1496, %v1498, %v1494
    %v1500 = vmul.f32 1.0, %v1499
    %v1501 = vrcp.pop %v1480
    %v1502 = vmul.f32 %v1480, %v1501
    %v1503 = vsub.f32 1.0, %v1502
    %v1504 = vmul.f32 %v1501, %v1503
    %v1505 = vadd.f32 %v1501, %v1504
    %vm1506 = vweird.f32 %v1480
    %vm1507 = vweird.f32 %v1501
    %vm1508 = vmor %vm1506, %vm1507
    %v1509 = vsel %vm1508, %v1501, %v1505
    %v1510 = vand.u32 2147483647, %v1480
    %vm1511 = vcmp.eq.f32.partialorder %v1510, 8.507059e+37
    %v1512 = vand.u32 %v1480, 2147483648
    %v1513 = vor.u32 1.1754944e-38, %v1512
    %v1514 = vsel %vm1511, %v1513, %v1509
    %v1515 = vmul.f32 1.0, %v1514
    %v1516 = vrcp.pop %v1481
    %v1517 = vmul.f32 %v1481, %v1516
    %v1518 = vsub.f32 1.0, %v1517
    %v1519 = vmul.f32 %v1516, %v1518
    %v1520 = vadd.f32 %v1516, %v1519
    %vm1521 = vweird.f32 %v1481
    %vm1522 = vweird.f32 %v1516
    %vm1523 = vmor %vm1521, %vm1522
    %v1524 = vsel %vm1523, %v1516, %v1520
    %v1525 = vand.u32 2147483647, %v1481
    %vm1526 = vcmp.eq.f32.partialorder %v1525, 8.507059e+37
    %v1527 = vand.u32 %v1481, 2147483648
    %v1528 = vor.u32 1.1754944e-38, %v1527
    %v1529 = vsel %vm1526, %v1528, %v1524
    %v1530 = vmul.f32 1.0, %v1529
    %v1531 = vrcp.pop %v1482
    %v1532 = vmul.f32 %v1482, %v1531
    %v1533 = vsub.f32 1.0, %v1532
    %v1534 = vmul.f32 %v1531, %v1533
    %v1535 = vadd.f32 %v1531, %v1534
    %vm1536 = vweird.f32 %v1482
    %vm1537 = vweird.f32 %v1531
    %vm1538 = vmor %vm1536, %vm1537
    %v1539 = vsel %vm1538, %v1531, %v1535
    %v1540 = vand.u32 2147483647, %v1482
    %vm1541 = vcmp.eq.f32.partialorder %v1540, 8.507059e+37
    %v1542 = vand.u32 %v1482, 2147483648
    %v1543 = vor.u32 1.1754944e-38, %v1542
    %v1544 = vsel %vm1541, %v1543, %v1539
    %v1545 = vmul.f32 1.0, %v1544
    %v1546 = vrcp.pop %v1483
    %v1547 = vmul.f32 %v1483, %v1546
    %v1548 = vsub.f32 1.0, %v1547
    %v1549 = vmul.f32 %v1546, %v1548
    %v1550 = vadd.f32 %v1546, %v1549
    %vm1551 = vweird.f32 %v1483
    %vm1552 = vweird.f32 %v1546
    %vm1553 = vmor %vm1551, %vm1552
    %v1554 = vsel %vm1553, %v1546, %v1550
    %v1555 = vand.u32 2147483647, %v1483
    %vm1556 = vcmp.eq.f32.partialorder %v1555, 8.507059e+37
    %v1557 = vand.u32 %v1483, 2147483648
    %v1558 = vor.u32 1.1754944e-38, %v1557
    %v1559 = vsel %vm1556, %v1558, %v1554
    %v1560 = vmul.f32 1.0, %v1559
    %v1561 = vrcp.pop %v1484
    %v1562 = vmul.f32 %v1484, %v1561
    %v1563 = vsub.f32 1.0, %v1562
    %v1564 = vmul.f32 %v1561, %v1563
    %v1565 = vadd.f32 %v1561, %v1564
    %vm1566 = vweird.f32 %v1484
    %vm1567 = vweird.f32 %v1561
    %vm1568 = vmor %vm1566, %vm1567
    %v1569 = vsel %vm1568, %v1561, %v1565
    %v1570 = vand.u32 2147483647, %v1484
    %vm1571 = vcmp.eq.f32.partialorder %v1570, 8.507059e+37
    %v1572 = vand.u32 %v1484, 2147483648
    %v1573 = vor.u32 1.1754944e-38, %v1572
    %v1574 = vsel %vm1571, %v1573, %v1569
    %v1575 = vmul.f32 1.0, %v1574
    %v1576 = vrcp.pop %v1485
    %v1577 = vmul.f32 %v1485, %v1576
    %v1578 = vsub.f32 1.0, %v1577
    %v1579 = vmul.f32 %v1576, %v1578
    %v1580 = vadd.f32 %v1576, %v1579
    %vm1581 = vweird.f32 %v1485
    %vm1582 = vweird.f32 %v1576
    %vm1583 = vmor %vm1581, %vm1582
    %v1584 = vsel %vm1583, %v1576, %v1580
    %v1585 = vand.u32 2147483647, %v1485
    %vm1586 = vcmp.eq.f32.partialorder %v1585, 8.507059e+37
    %v1587 = vand.u32 %v1485, 2147483648
    %v1588 = vor.u32 1.1754944e-38, %v1587
    %v1589 = vsel %vm1586, %v1588, %v1584
    %v1590 = vmul.f32 1.0, %v1589
    %v1591 = vmul.f32 %v1500, 1.0614054
    %v1592 = vmul.f32 %v1515, 1.0614054
    %v1593 = vmul.f32 %v1530, 1.0614054
    %v1594 = vmul.f32 %v1545, 1.0614054
    %v1595 = vmul.f32 %v1560, 1.0614054
    %v1596 = vmul.f32 %v1575, 1.0614054
    %v1597 = vmul.f32 %v1590, 1.0614054
    %v1598 = vadd.f32 %v1591, -1.4531521
    %v1599 = vadd.f32 %v1592, -1.4531521
    %v1600 = vadd.f32 %v1593, -1.4531521
    %v1601 = vadd.f32 %v1594, -1.4531521
    %v1602 = vadd.f32 %v1595, -1.4531521
    %v1603 = vadd.f32 %v1596, -1.4531521
    %v1604 = vadd.f32 %v1597, -1.4531521
    %v1605 = vmul.f32 %v1598, %v1500
    %v1606 = vmul.f32 %v1599, %v1515
    %v1607 = vmul.f32 %v1600, %v1530
    %v1608 = vmul.f32 %v1601, %v1545
    %v1609 = vmul.f32 %v1602, %v1560
    %v1610 = vmul.f32 %v1603, %v1575
    %v1611 = vmul.f32 %v1604, %v1590
    %v1612 = vadd.f32 %v1605, 1.4214138
    %v1613 = vadd.f32 %v1606, 1.4214138
    %v1614 = vadd.f32 %v1607, 1.4214138
    %v1615 = vadd.f32 %v1608, 1.4214138
    %v1616 = vadd.f32 %v1609, 1.4214138
    %v1617 = vadd.f32 %v1610, 1.4214138
    %v1618 = vadd.f32 %v1611, 1.4214138
    %v1619 = vmul.f32 %v1612, %v1500
    %v1620 = vmul.f32 %v1613, %v1515
    %v1621 = vmul.f32 %v1614, %v1530
    %v1622 = vmul.f32 %v1615, %v1545
    %v1623 = vmul.f32 %v1616, %v1560
    %v1624 = vmul.f32 %v1617, %v1575
    %v1625 = vmul.f32 %v1618, %v1590
    %v1626 = vadd.f32 %v1619, -0.28449672
    %v1627 = vadd.f32 %v1620, -0.28449672
    %v1628 = vadd.f32 %v1621, -0.28449672
    %v1629 = vadd.f32 %v1622, -0.28449672
    %v1630 = vadd.f32 %v1623, -0.28449672
    %v1631 = vadd.f32 %v1624, -0.28449672
    %v1632 = vadd.f32 %v1625, -0.28449672
    %v1633 = vmul.f32 %v1626, %v1500
    %v1634 = vmul.f32 %v1627, %v1515
    %v1635 = vmul.f32 %v1628, %v1530
    %v1636 = vmul.f32 %v1629, %v1545
    %v1637 = vmul.f32 %v1630, %v1560
    %v1638 = vmul.f32 %v1631, %v1575
    %v1639 = vmul.f32 %v1632, %v1590
    %v1640 = vadd.f32 %v1633, 0.2548296
    %v1641 = vadd.f32 %v1634, 0.2548296
    %v1642 = vadd.f32 %v1635, 0.2548296
    %v1643 = vadd.f32 %v1636, 0.2548296
    %v1644 = vadd.f32 %v1637, 0.2548296
    %v1645 = vadd.f32 %v1638, 0.2548296
    %v1646 = vadd.f32 %v1639, 0.2548296
    %v1647 = vmul.f32 %v1640, %v1500
    %v1648 = vmul.f32 %v1641, %v1515
    %v1649 = vmul.f32 %v1642, %v1530
    %v1650 = vmul.f32 %v1643, %v1545
    %v1651 = vmul.f32 %v1644, %v1560
    %v1652 = vmul.f32 %v1645, %v1575
    %v1653 = vmul.f32 %v1646, %v1590
    %v1654 = vsub.f32 0.0, %v1465
    %v1655 = vsub.f32 0.0, %v1466
    %v1656 = vsub.f32 0.0, %v1467
    %v1657 = vsub.f32 0.0, %v1468
    %v1658 = vsub.f32 0.0, %v1469
    %v1659 = vsub.f32 0.0, %v1470
    %v1660 = vsub.f32 0.0, %v1471
    %v1661 = vmul.f32 %v1654, %v1465
    %v1662 = vmul.f32 %v1655, %v1466
    %v1663 = vmul.f32 %v1656, %v1467
    %v1664 = vmul.f32 %v1657, %v1468
    %v1665 = vmul.f32 %v1658, %v1469
    %v1666 = vmul.f32 %v1659, %v1470
    %v1667 = vmul.f32 %v1660, %v1471
    %v1668 = vmul.f32 %v1661, 1.442695
    %v1669 = vpow.pop %v1668
    %v1670 = vmul.f32 %v1662, 1.442695
    %v1671 = vpow.pop %v1670
    %v1672 = vmul.f32 %v1663, 1.442695
    %v1673 = vpow.pop %v1672
    %v1674 = vmul.f32 %v1664, 1.442695
    %v1675 = vpow.pop %v1674
    %v1676 = vmul.f32 %v1665, 1.442695
    %v1677 = vpow.pop %v1676
    %v1678 = vmul.f32 %v1666, 1.442695
    %v1679 = vpow.pop %v1678
    %v1680 = vmul.f32 %v1667, 1.442695
    %v1681 = vpow.pop %v1680
    %v1682 = vmul.f32 %v1647, %v1669
    %v1683 = vmul.f32 %v1648, %v1671
    %v1684 = vmul.f32 %v1649, %v1673
    %v1685 = vmul.f32 %v1650, %v1675
    %v1686 = vmul.f32 %v1651, %v1677
    %v1687 = vmul.f32 %v1652, %v1679
    %v1688 = vmul.f32 %v1653, %v1681
    %v1689 = vsub.f32 1.0, %v1682
    %v1690 = vsub.f32 1.0, %v1683
    %v1691 = vsub.f32 1.0, %v1684
    %v1692 = vsub.f32 1.0, %v1685
    %v1693 = vsub.f32 1.0, %v1686
    %v1694 = vsub.f32 1.0, %v1687
    %v1695 = vsub.f32 1.0, %v1688
    %v1696 = vmul.f32 %v1458, %v1689
    %v1697 = vmul.f32 %v1459, %v1690
    %v1698 = vmul.f32 %v1460, %v1691
    %v1699 = vmul.f32 %v1461, %v1692
    %v1700 = vmul.f32 %v1462, %v1693
    %v1701 = vmul.f32 %v1463, %v1694
    %v1702 = vmul.f32 %v1464, %v1695
    %v1703 = vadd.f32 %v1696, 1.0
    %v1704 = vadd.f32 %v1697, 1.0
    %v1705 = vadd.f32 %v1698, 1.0
    %v1706 = vadd.f32 %v1699, 1.0
    %v1707 = vadd.f32 %v1700, 1.0
    %v1708 = vadd.f32 %v1701, 1.0
    %v1709 = vadd.f32 %v1702, 1.0
    %v1710 = vmul.f32 %v1437, %v1703
    %v1711 = vmul.f32 %v1438, %v1704
    %v1712 = vmul.f32 %v1439, %v1705
    %v1713 = vmul.f32 %v1440, %v1706
    %v1714 = vmul.f32 %v1441, %v1707
    %v1715 = vmul.f32 %v1442, %v1708
    %v1716 = vmul.f32 %v1443, %v1709
    %v1717 = vld [vmem:[%s8] sm:$0xff]
    %v1718 = vld [vmem:[%s8 + $0x8] sm:$0xff]
    %v1719 = vld [vmem:[%s8 + $0x10] sm:$0xff]
    %v1720 = vld [vmem:[%s8 + $0x18] sm:$0xff]
    %v1721 = vld [vmem:[%s8 + $0x20] sm:$0xff]
    %v1722 = vld [vmem:[%s8 + $0x28] sm:$0xff]
    %v1723 = vld [vmem:[%s8 + $0x30] sm:$0xff]
    %v1724 = vld [vmem:[%s8 + $0x38] sm:$0xff]
    %v1725 = vld [vmem:[%s8 + $0x40] sm:$0xff]
    %v1726 = vld [vmem:[%s8 + $0x48] sm:$0xff]
    %v1727 = vld [vmem:[%s8 + $0x50] sm:$0xff]
    %v1728 = vld [vmem:[%s8 + $0x58] sm:$0xff]
    %v1729 = vld [vmem:[%s8 + $0x60] sm:$0xff]
    %v1730 = vld [vmem:[%s8 + $0x68] sm:$0xff]
    %v1731 = vld [vmem:[%s8 + $0x70] sm:$0xff]
    %v1732 = vld [vmem:[%s8 + $0x78] sm:$0xff]
    %1733 = vmatpush.msra.mxu0 %v1732
    %1734 = vmatpush.msra.mxu0 %v1731
    %1735 = vmatpush.msra.mxu0 %v1730
    %1736 = vmatpush.msra.mxu0 %v1729
    %1737 = vmatpush.msra.mxu0 %v1728
    %1738 = vmatpush.msra.mxu0 %v1727
    %1739 = vmatpush.msra.mxu0 %v1726
    %1740 = vmatpush.msra.mxu0 %v1725
    %1741 = vmatpush.msra.mxu0 %v1724
    %1742 = vmatpush.msra.mxu0 %v1723
    %1743 = vmatpush.msra.mxu0 %v1722
    %1744 = vmatpush.msra.mxu0 %v1721
    %1745 = vmatpush.msra.mxu0 %v1720
    %1746 = vmatpush.msra.mxu0 %v1719
    %1747 = vmatpush.msra.mxu0 %v1718
    %1748 = vmatpush.msra.mxu0 %v1717
    %1749 = vmatmul.f32.gmra.mxu0 %v1710
    %v1750 = vpop.f32.mrf.mxu0
    %v1751 = vadd.f32 0.0, %v1750
    %1752 = vmatmul.f32.gmra.mxu0 %v1711
    %v1753 = vpop.f32.mrf.mxu0
    %v1754 = vadd.f32 0.0, %v1753
    %1755 = vmatmul.f32.gmra.mxu0 %v1712
    %v1756 = vpop.f32.mrf.mxu0
    %v1757 = vadd.f32 0.0, %v1756
    %1758 = vmatmul.f32.gmra.mxu0 %v1713
    %v1759 = vpop.f32.mrf.mxu0
    %v1760 = vadd.f32 0.0, %v1759
    %1761 = vmatmul.f32.gmra.mxu0 %v1714
    %v1762 = vpop.f32.mrf.mxu0
    %v1763 = vadd.f32 0.0, %v1762
    %1764 = vmatmul.f32.gmra.mxu0 %v1715
    %v1765 = vpop.f32.mrf.mxu0
    %v1766 = vadd.f32 0.0, %v1765
    %1767 = vmatmul.f32.gmra.mxu0 %v1716
    %v1768 = vpop.f32.mrf.mxu0
    %v1769 = vadd.f32 0.0, %v1768
    %1770 = vdwg.mxu0
    %v1771 = vadd.f32 %v1196, %v1751
    %v1772 = vadd.f32 %v1197, %v1754
    %v1773 = vadd.f32 %v1198, %v1757
    %v1774 = vadd.f32 %v1199, %v1760
    %v1775 = vadd.f32 %v1200, %v1763
    %v1776 = vadd.f32 %v1201, %v1766
    %v1777 = vadd.f32 %v1202, %v1769
    %v1778 = vperm.slane %v364, 6
    %v1779 = vadd.f32 %v1771, %v1778
    %v1780 = vadd.f32 %v1772, %v1778
    %v1781 = vadd.f32 %v1773, %v1778
    %v1782 = vadd.f32 %v1774, %v1778
    %v1783 = vadd.f32 %v1775, %v1778
    %v1784 = vadd.f32 %v1776, %v1778
    %v1785 = vadd.f32 %v1777, %v1778
    %s1786 = scalar_lea.vmem %s9, 8
    %v1787 = vld [vmem:[%s1786] sm:$0xff]
    %v1788 = vsel %vm365, %v1779, 0.0
    %1789 = vadd.xlane.f32.xlu0 %v1788
    %v1790 = vpop.xlane.xlu0 %1789
    %v1791 = vsel %vm365, %v1780, 0.0
    %1792 = vadd.xlane.f32.xlu0 %v1791
    %v1793 = vpop.xlane.xlu0 %1792
    %v1794 = vsel %vm365, %v1781, 0.0
    %1795 = vadd.xlane.f32.xlu0 %v1794
    %v1796 = vpop.xlane.xlu0 %1795
    %v1797 = vsel %vm365, %v1782, 0.0
    %1798 = vadd.xlane.f32.xlu0 %v1797
    %v1799 = vpop.xlane.xlu0 %1798
    %v1800 = vsel %vm365, %v1783, 0.0
    %1801 = vadd.xlane.f32.xlu0 %v1800
    %v1802 = vpop.xlane.xlu0 %1801
    %v1803 = vsel %vm365, %v1784, 0.0
    %1804 = vadd.xlane.f32.xlu0 %v1803
    %v1805 = vpop.xlane.xlu0 %1804
    %v1806 = vsel %vm365, %v1785, 0.0
    %1807 = vadd.xlane.f32.xlu0 %v1806
    %v1808 = vpop.xlane.xlu0 %1807
    %v1809 = vmul.f32 %v1790, %v393
    %v1810 = vmul.f32 %v1793, %v393
    %v1811 = vmul.f32 %v1796, %v393
    %v1812 = vmul.f32 %v1799, %v393
    %v1813 = vmul.f32 %v1802, %v393
    %v1814 = vmul.f32 %v1805, %v393
    %v1815 = vmul.f32 %v1808, %v393
    %v1816 = vsub.f32 %v1779, %v1809
    %v1817 = vsub.f32 %v1780, %v1810
    %v1818 = vsub.f32 %v1781, %v1811
    %v1819 = vsub.f32 %v1782, %v1812
    %v1820 = vsub.f32 %v1783, %v1813
    %v1821 = vsub.f32 %v1784, %v1814
    %v1822 = vsub.f32 %v1785, %v1815
    %v1823 = vmul.f32 %v1816, %v1816
    %v1824 = vmul.f32 %v1817, %v1817
    %v1825 = vmul.f32 %v1818, %v1818
    %v1826 = vmul.f32 %v1819, %v1819
    %v1827 = vmul.f32 %v1820, %v1820
    %v1828 = vmul.f32 %v1821, %v1821
    %v1829 = vmul.f32 %v1822, %v1822
    %v1830 = vsel %vm365, %v1823, 0.0
    %1831 = vadd.xlane.f32.xlu0 %v1830
    %v1832 = vpop.xlane.xlu0 %1831
    %v1833 = vsel %vm365, %v1824, 0.0
    %1834 = vadd.xlane.f32.xlu0 %v1833
    %v1835 = vpop.xlane.xlu0 %1834
    %v1836 = vsel %vm365, %v1825, 0.0
    %1837 = vadd.xlane.f32.xlu0 %v1836
    %v1838 = vpop.xlane.xlu0 %1837
    %v1839 = vsel %vm365, %v1826, 0.0
    %1840 = vadd.xlane.f32.xlu0 %v1839
    %v1841 = vpop.xlane.xlu0 %1840
    %v1842 = vsel %vm365, %v1827, 0.0
    %1843 = vadd.xlane.f32.xlu0 %v1842
    %v1844 = vpop.xlane.xlu0 %1843
    %v1845 = vsel %vm365, %v1828, 0.0
    %1846 = vadd.xlane.f32.xlu0 %v1845
    %v1847 = vpop.xlane.xlu0 %1846
    %v1848 = vsel %vm365, %v1829, 0.0
    %1849 = vadd.xlane.f32.xlu0 %v1848
    %v1850 = vpop.xlane.xlu0 %1849
    %v1851 = vmul.f32 %v1832, %v393
    %v1852 = vmul.f32 %v1835, %v393
    %v1853 = vmul.f32 %v1838, %v393
    %v1854 = vmul.f32 %v1841, %v393
    %v1855 = vmul.f32 %v1844, %v393
    %v1856 = vmul.f32 %v1847, %v393
    %v1857 = vmul.f32 %v1850, %v393
    %v1858 = vadd.f32 %v1851, 1e-05
    %v1859 = vadd.f32 %v1852, 1e-05
    %v1860 = vadd.f32 %v1853, 1e-05
    %v1861 = vadd.f32 %v1854, 1e-05
    %v1862 = vadd.f32 %v1855, 1e-05
    %v1863 = vadd.f32 %v1856, 1e-05
    %v1864 = vadd.f32 %v1857, 1e-05
    %v1865 = vrsqrt.pop %v1858
    %v1866 = vmul.f32 %v1865, %v1858
    %v1867 = vmul.f32 %v1866, %v1865
    %v1868 = vmul.f32 0.5, %v1867
    %v1869 = vsub.f32 1.5, %v1868
    %v1870 = vmul.f32 %v1865, %v1869
    %vm1871 = vweird.f32 %v1858
    %vm1872 = vweird.f32 %v1865
    %vm1873 = vmor %vm1871, %vm1872
    %v1874 = vsel %vm1873, %v1865, %v1870
    %v1875 = vrsqrt.pop %v1859
    %v1876 = vmul.f32 %v1875, %v1859
    %v1877 = vmul.f32 %v1876, %v1875
    %v1878 = vmul.f32 0.5, %v1877
    %v1879 = vsub.f32 1.5, %v1878
    %v1880 = vmul.f32 %v1875, %v1879
    %vm1881 = vweird.f32 %v1859
    %vm1882 = vweird.f32 %v1875
    %vm1883 = vmor %vm1881, %vm1882
    %v1884 = vsel %vm1883, %v1875, %v1880
    %v1885 = vrsqrt.pop %v1860
    %v1886 = vmul.f32 %v1885, %v1860
    %v1887 = vmul.f32 %v1886, %v1885
    %v1888 = vmul.f32 0.5, %v1887
    %v1889 = vsub.f32 1.5, %v1888
    %v1890 = vmul.f32 %v1885, %v1889
    %vm1891 = vweird.f32 %v1860
    %vm1892 = vweird.f32 %v1885
    %vm1893 = vmor %vm1891, %vm1892
    %v1894 = vsel %vm1893, %v1885, %v1890
    %v1895 = vrsqrt.pop %v1861
    %v1896 = vmul.f32 %v1895, %v1861
    %v1897 = vmul.f32 %v1896, %v1895
    %v1898 = vmul.f32 0.5, %v1897
    %v1899 = vsub.f32 1.5, %v1898
    %v1900 = vmul.f32 %v1895, %v1899
    %vm1901 = vweird.f32 %v1861
    %vm1902 = vweird.f32 %v1895
    %vm1903 = vmor %vm1901, %vm1902
    %v1904 = vsel %vm1903, %v1895, %v1900
    %v1905 = vrsqrt.pop %v1862
    %v1906 = vmul.f32 %v1905, %v1862
    %v1907 = vmul.f32 %v1906, %v1905
    %v1908 = vmul.f32 0.5, %v1907
    %v1909 = vsub.f32 1.5, %v1908
    %v1910 = vmul.f32 %v1905, %v1909
    %vm1911 = vweird.f32 %v1862
    %vm1912 = vweird.f32 %v1905
    %vm1913 = vmor %vm1911, %vm1912
    %v1914 = vsel %vm1913, %v1905, %v1910
    %v1915 = vrsqrt.pop %v1863
    %v1916 = vmul.f32 %v1915, %v1863
    %v1917 = vmul.f32 %v1916, %v1915
    %v1918 = vmul.f32 0.5, %v1917
    %v1919 = vsub.f32 1.5, %v1918
    %v1920 = vmul.f32 %v1915, %v1919
    %vm1921 = vweird.f32 %v1863
    %vm1922 = vweird.f32 %v1915
    %vm1923 = vmor %vm1921, %vm1922
    %v1924 = vsel %vm1923, %v1915, %v1920
    %v1925 = vrsqrt.pop %v1864
    %v1926 = vmul.f32 %v1925, %v1864
    %v1927 = vmul.f32 %v1926, %v1925
    %v1928 = vmul.f32 0.5, %v1927
    %v1929 = vsub.f32 1.5, %v1928
    %v1930 = vmul.f32 %v1925, %v1929
    %vm1931 = vweird.f32 %v1864
    %vm1932 = vweird.f32 %v1925
    %vm1933 = vmor %vm1931, %vm1932
    %v1934 = vsel %vm1933, %v1925, %v1930
    %v1935 = vmul.f32 %v1816, %v1874
    %v1936 = vmul.f32 %v1817, %v1884
    %v1937 = vmul.f32 %v1818, %v1894
    %v1938 = vmul.f32 %v1819, %v1904
    %v1939 = vmul.f32 %v1820, %v1914
    %v1940 = vmul.f32 %v1821, %v1924
    %v1941 = vmul.f32 %v1822, %v1934
    %v1942 = vperm.slane %v1787, 0
    %v1943 = vmul.f32 %v1935, %v1942
    %v1944 = vmul.f32 %v1936, %v1942
    %v1945 = vmul.f32 %v1937, %v1942
    %v1946 = vmul.f32 %v1938, %v1942
    %v1947 = vmul.f32 %v1939, %v1942
    %v1948 = vmul.f32 %v1940, %v1942
    %v1949 = vmul.f32 %v1941, %v1942
    %v1950 = vperm.slane %v1787, 1
    %v1951 = vadd.f32 %v1943, %v1950
    %v1952 = vadd.f32 %v1944, %v1950
    %v1953 = vadd.f32 %v1945, %v1950
    %v1954 = vadd.f32 %v1946, %v1950
    %v1955 = vadd.f32 %v1947, %v1950
    %v1956 = vadd.f32 %v1948, %v1950
    %v1957 = vadd.f32 %v1949, %v1950
    %s1958 = scalar_lea.vmem %s6, 128
    %v1959 = vld [vmem:[%s1958] sm:$0xff]
    %v1960 = vld [vmem:[%s1958 + $0x8] sm:$0xff]
    %v1961 = vld [vmem:[%s1958 + $0x10] sm:$0xff]
    %v1962 = vld [vmem:[%s1958 + $0x18] sm:$0xff]
    %v1964 = vsel %vm365, %v1951, 0
    %v1967 = vsel %vm365, %v1952, 0
    %v1970 = vsel %vm365, %v1953, 0
    %v1973 = vsel %vm365, %v1954, 0
    %v1976 = vsel %vm365, %v1955, 0
    %v1979 = vsel %vm365, %v1956, 0
    %v1982 = vsel %vm365, %v1957, 0
    %1984 = vmatpush.msra.mxu0 0.0
    %1985 = vmatpush.msra.mxu0 0.0
    %1986 = vmatpush.msra.mxu0 0.0
    %1987 = vmatpush.msra.mxu0 0.0
    %1988 = vmatpush.msra.mxu0 0.0
    %1989 = vmatpush.msra.mxu0 0.0
    %1990 = vmatpush.msra.mxu0 0.0
    %1991 = vmatpush.msra.mxu0 0.0
    %1992 = vmatpush.msra.mxu0 0.0
    %1993 = vmatpush.msra.mxu0 0.0
    %1994 = vmatpush.msra.mxu0 0.0
    %1995 = vmatpush.msra.mxu0 0.0
    %1996 = vmatpush.msra.mxu0 %v1962
    %1997 = vmatpush.msra.mxu0 %v1961
    %1998 = vmatpush.msra.mxu0 %v1960
    %1999 = vmatpush.msra.mxu0 %v1959
    %2000 = vmatmul.f32.gmra.mxu0 %v1964
    %v2001 = vpop.f32.mrf.mxu0
    %v2002 = vadd.f32 0.0, %v2001
    %2003 = vmatmul.f32.gmra.mxu0 %v1967
    %v2004 = vpop.f32.mrf.mxu0
    %v2005 = vadd.f32 0.0, %v2004
    %2006 = vmatmul.f32.gmra.mxu0 %v1970
    %v2007 = vpop.f32.mrf.mxu0
    %v2008 = vadd.f32 0.0, %v2007
    %2009 = vmatmul.f32.gmra.mxu0 %v1973
    %v2010 = vpop.f32.mrf.mxu0
    %v2011 = vadd.f32 0.0, %v2010
    %2012 = vmatmul.f32.gmra.mxu0 %v1976
    %v2013 = vpop.f32.mrf.mxu0
    %v2014 = vadd.f32 0.0, %v2013
    %2015 = vmatmul.f32.gmra.mxu0 %v1979
    %v2016 = vpop.f32.mrf.mxu0
    %v2017 = vadd.f32 0.0, %v2016
    %2018 = vmatmul.f32.gmra.mxu0 %v1982
    %v2019 = vpop.f32.mrf.mxu0
    %v2020 = vadd.f32 0.0, %v2019
    %2021 = vdwg.mxu0
    %s2022 = scalar_lea.vmem %s6, 160
    %v2023 = vld [vmem:[%s2022] sm:$0xff]
    %v2024 = vld [vmem:[%s2022 + $0x8] sm:$0xff]
    %v2025 = vld [vmem:[%s2022 + $0x10] sm:$0xff]
    %v2026 = vld [vmem:[%s2022 + $0x18] sm:$0xff]
    %2027 = vmatpush.msra.mxu0 0.0
    %2028 = vmatpush.msra.mxu0 0.0
    %2029 = vmatpush.msra.mxu0 0.0
    %2030 = vmatpush.msra.mxu0 0.0
    %2031 = vmatpush.msra.mxu0 0.0
    %2032 = vmatpush.msra.mxu0 0.0
    %2033 = vmatpush.msra.mxu0 0.0
    %2034 = vmatpush.msra.mxu0 0.0
    %2035 = vmatpush.msra.mxu0 0.0
    %2036 = vmatpush.msra.mxu0 0.0
    %2037 = vmatpush.msra.mxu0 0.0
    %2038 = vmatpush.msra.mxu0 0.0
    %2039 = vmatpush.msra.mxu0 %v2026
    %2040 = vmatpush.msra.mxu0 %v2025
    %2041 = vmatpush.msra.mxu0 %v2024
    %2042 = vmatpush.msra.mxu0 %v2023
    %2043 = vmatmul.f32.gmra.mxu0 %v1964
    %v2044 = vpop.f32.mrf.mxu0
    %v2045 = vadd.f32 0.0, %v2044
    %2046 = vmatmul.f32.gmra.mxu0 %v1967
    %v2047 = vpop.f32.mrf.mxu0
    %v2048 = vadd.f32 0.0, %v2047
    %2049 = vmatmul.f32.gmra.mxu0 %v1970
    %v2050 = vpop.f32.mrf.mxu0
    %v2051 = vadd.f32 0.0, %v2050
    %2052 = vmatmul.f32.gmra.mxu0 %v1973
    %v2053 = vpop.f32.mrf.mxu0
    %v2054 = vadd.f32 0.0, %v2053
    %2055 = vmatmul.f32.gmra.mxu0 %v1976
    %v2056 = vpop.f32.mrf.mxu0
    %v2057 = vadd.f32 0.0, %v2056
    %2058 = vmatmul.f32.gmra.mxu0 %v1979
    %v2059 = vpop.f32.mrf.mxu0
    %v2060 = vadd.f32 0.0, %v2059
    %2061 = vmatmul.f32.gmra.mxu0 %v1982
    %v2062 = vpop.f32.mrf.mxu0
    %v2063 = vadd.f32 0.0, %v2062
    %2064 = vdwg.mxu0
    %s2065 = scalar_lea.vmem %s6, 192
    %v2066 = vld [vmem:[%s2065] sm:$0xff]
    %v2067 = vld [vmem:[%s2065 + $0x8] sm:$0xff]
    %v2068 = vld [vmem:[%s2065 + $0x10] sm:$0xff]
    %v2069 = vld [vmem:[%s2065 + $0x18] sm:$0xff]
    %2070 = vmatpush.msra.mxu0 0.0
    %2071 = vmatpush.msra.mxu0 0.0
    %2072 = vmatpush.msra.mxu0 0.0
    %2073 = vmatpush.msra.mxu0 0.0
    %2074 = vmatpush.msra.mxu0 0.0
    %2075 = vmatpush.msra.mxu0 0.0
    %2076 = vmatpush.msra.mxu0 0.0
    %2077 = vmatpush.msra.mxu0 0.0
    %2078 = vmatpush.msra.mxu0 0.0
    %2079 = vmatpush.msra.mxu0 0.0
    %2080 = vmatpush.msra.mxu0 0.0
    %2081 = vmatpush.msra.mxu0 0.0
    %2082 = vmatpush.msra.mxu0 %v2069
    %2083 = vmatpush.msra.mxu0 %v2068
    %2084 = vmatpush.msra.mxu0 %v2067
    %2085 = vmatpush.msra.mxu0 %v2066
    %2086 = vmatmul.f32.gmra.mxu0 %v1964
    %v2087 = vpop.f32.mrf.mxu0
    %v2088 = vadd.f32 0.0, %v2087
    %2089 = vmatmul.f32.gmra.mxu0 %v1967
    %v2090 = vpop.f32.mrf.mxu0
    %v2091 = vadd.f32 0.0, %v2090
    %2092 = vmatmul.f32.gmra.mxu0 %v1970
    %v2093 = vpop.f32.mrf.mxu0
    %v2094 = vadd.f32 0.0, %v2093
    %2095 = vmatmul.f32.gmra.mxu0 %v1973
    %v2096 = vpop.f32.mrf.mxu0
    %v2097 = vadd.f32 0.0, %v2096
    %2098 = vmatmul.f32.gmra.mxu0 %v1976
    %v2099 = vpop.f32.mrf.mxu0
    %v2100 = vadd.f32 0.0, %v2099
    %2101 = vmatmul.f32.gmra.mxu0 %v1979
    %v2102 = vpop.f32.mrf.mxu0
    %v2103 = vadd.f32 0.0, %v2102
    %2104 = vmatmul.f32.gmra.mxu0 %v1982
    %v2105 = vpop.f32.mrf.mxu0
    %v2106 = vadd.f32 0.0, %v2105
    %2107 = vdwg.mxu0
    %v2108 = vsel %vm365, %v2002, -inf
    %2109 = vmax.xlane.f32.xlu0 %v2108
    %v2110 = vpop.xlane.xlu0 %2109
    %v2111 = vsel %vm365, %v2005, -inf
    %2112 = vmax.xlane.f32.xlu0 %v2111
    %v2113 = vpop.xlane.xlu0 %2112
    %v2114 = vsel %vm365, %v2008, -inf
    %2115 = vmax.xlane.f32.xlu0 %v2114
    %v2116 = vpop.xlane.xlu0 %2115
    %v2117 = vsel %vm365, %v2011, -inf
    %2118 = vmax.xlane.f32.xlu0 %v2117
    %v2119 = vpop.xlane.xlu0 %2118
    %v2120 = vsel %vm365, %v2014, -inf
    %2121 = vmax.xlane.f32.xlu0 %v2120
    %v2122 = vpop.xlane.xlu0 %2121
    %v2123 = vsel %vm365, %v2017, -inf
    %2124 = vmax.xlane.f32.xlu0 %v2123
    %v2125 = vpop.xlane.xlu0 %2124
    %v2126 = vsel %vm365, %v2020, -inf
    %2127 = vmax.xlane.f32.xlu0 %v2126
    %v2128 = vpop.xlane.xlu0 %2127
    %v2129 = vsub.f32 %v2002, %v2110
    %v2130 = vsub.f32 %v2005, %v2113
    %v2131 = vsub.f32 %v2008, %v2116
    %v2132 = vsub.f32 %v2011, %v2119
    %v2133 = vsub.f32 %v2014, %v2122
    %v2134 = vsub.f32 %v2017, %v2125
    %v2135 = vsub.f32 %v2020, %v2128
    %v2136 = vmul.f32 %v2129, 1.442695
    %v2137 = vpow.pop %v2136
    %v2138 = vmul.f32 %v2130, 1.442695
    %v2139 = vpow.pop %v2138
    %v2140 = vmul.f32 %v2131, 1.442695
    %v2141 = vpow.pop %v2140
    %v2142 = vmul.f32 %v2132, 1.442695
    %v2143 = vpow.pop %v2142
    %v2144 = vmul.f32 %v2133, 1.442695
    %v2145 = vpow.pop %v2144
    %v2146 = vmul.f32 %v2134, 1.442695
    %v2147 = vpow.pop %v2146
    %v2148 = vmul.f32 %v2135, 1.442695
    %v2149 = vpow.pop %v2148
    %v2151 = vsel %vm365, %v2137, 0
    %v2154 = vsel %vm365, %v2139, 0
    %v2157 = vsel %vm365, %v2141, 0
    %v2160 = vsel %vm365, %v2143, 0
    %v2163 = vsel %vm365, %v2145, 0
    %v2166 = vsel %vm365, %v2147, 0
    %v2169 = vsel %vm365, %v2149, 0
    %2171 = vmatpush.msra.mxu0 0.0
    %2172 = vmatpush.msra.mxu0 0.0
    %2173 = vmatpush.msra.mxu0 0.0
    %2174 = vmatpush.msra.mxu0 0.0
    %2175 = vmatpush.msra.mxu0 0.0
    %2176 = vmatpush.msra.mxu0 0.0
    %2177 = vmatpush.msra.mxu0 0.0
    %2178 = vmatpush.msra.mxu0 0.0
    %2179 = vmatpush.msra.mxu0 0.0
    %2180 = vmatpush.msra.mxu0 0.0
    %2181 = vmatpush.msra.mxu0 0.0
    %2182 = vmatpush.msra.mxu0 0.0
    %2183 = vmatpush.msra.mxu0 %v352
    %2184 = vmatpush.msra.mxu0 %v351
    %2185 = vmatpush.msra.mxu0 %v350
    %2186 = vmatpush.msra.mxu0 %v349
    %2187 = vmatmul.f32.gmra.mxu0 %v2151
    %v2188 = vpop.f32.mrf.mxu0
    %v2189 = vadd.f32 0.0, %v2188
    %2190 = vmatmul.f32.gmra.mxu0 %v2154
    %v2191 = vpop.f32.mrf.mxu0
    %v2192 = vadd.f32 0.0, %v2191
    %2193 = vmatmul.f32.gmra.mxu0 %v2157
    %v2194 = vpop.f32.mrf.mxu0
    %v2195 = vadd.f32 0.0, %v2194
    %2196 = vmatmul.f32.gmra.mxu0 %v2160
    %v2197 = vpop.f32.mrf.mxu0
    %v2198 = vadd.f32 0.0, %v2197
    %2199 = vmatmul.f32.gmra.mxu0 %v2163
    %v2200 = vpop.f32.mrf.mxu0
    %v2201 = vadd.f32 0.0, %v2200
    %2202 = vmatmul.f32.gmra.mxu0 %v2166
    %v2203 = vpop.f32.mrf.mxu0
    %v2204 = vadd.f32 0.0, %v2203
    %2205 = vmatmul.f32.gmra.mxu0 %v2169
    %v2206 = vpop.f32.mrf.mxu0
    %v2207 = vadd.f32 0.0, %v2206
    %2208 = vdwg.mxu0
    %v2209 = vrcp.pop %v2189
    %v2210 = vrcp.pop %v2192
    %v2211 = vrcp.pop %v2195
    %v2212 = vrcp.pop %v2198
    %v2213 = vrcp.pop %v2201
    %v2214 = vrcp.pop %v2204
    %v2215 = vrcp.pop %v2207
    %v2216 = vmul.f32 %v2137, %v2209
    %v2217 = vmul.f32 %v2139, %v2210
    %v2218 = vmul.f32 %v2141, %v2211
    %v2219 = vmul.f32 %v2143, %v2212
    %v2220 = vmul.f32 %v2145, %v2213
    %v2221 = vmul.f32 %v2147, %v2214
    %v2222 = vmul.f32 %v2149, %v2215
    %v2223 = vmul.f32 %v2216, 0.35355338
    %v2224 = vmul.f32 %v2217, 0.35355338
    %v2225 = vmul.f32 %v2218, 0.35355338
    %v2226 = vmul.f32 %v2219, 0.35355338
    %v2227 = vmul.f32 %v2220, 0.35355338
    %v2228 = vmul.f32 %v2221, 0.35355338
    %v2229 = vmul.f32 %v2222, 0.35355338
    %v2230 = vsel %vm365, %v2045, -inf
    %v2231 = vsel %vm365, %v2048, -inf
    %v2232 = vsel %vm365, %v2051, -inf
    %v2233 = vsel %vm365, %v2054, -inf
    %v2234 = vsel %vm365, %v2057, -inf
    %v2235 = vmax.f32 %v2230, %v2234
    %v2236 = vsel %vm365, %v2060, -inf
    %v2237 = vmax.f32 %v2231, %v2236
    %v2238 = vsel %vm365, %v2063, -inf
    %v2239 = vmax.f32 %v2232, %v2238
    %v2240 = vmax.f32 %v2235, %v2237
    %v2241 = vmax.f32 %v2239, %v2233
    %v2242 = vmax.f32 %v2240, %v2241
    %v2243 = vrot.slane %v2242, 4
    %v2244 = vmax.f32 %v2242, %v2243
    %v2245 = vrot.slane %v2244, 2
    %v2246 = vmax.f32 %v2244, %v2245
    %v2247 = vrot.slane %v2246, 1
    %v2248 = vmax.f32 %v2246, %v2247
    %v2249 = vsub.f32 %v2045, %v2248
    %v2250 = vsub.f32 %v2048, %v2248
    %v2251 = vsub.f32 %v2051, %v2248
    %v2252 = vsub.f32 %v2054, %v2248
    %v2253 = vsub.f32 %v2057, %v2248
    %v2254 = vsub.f32 %v2060, %v2248
    %v2255 = vsub.f32 %v2063, %v2248
    %v2256 = vmul.f32 %v2249, 1.442695
    %v2257 = vpow.pop %v2256
    %v2258 = vmul.f32 %v2250, 1.442695
    %v2259 = vpow.pop %v2258
    %v2260 = vmul.f32 %v2251, 1.442695
    %v2261 = vpow.pop %v2260
    %v2262 = vmul.f32 %v2252, 1.442695
    %v2263 = vpow.pop %v2262
    %v2264 = vmul.f32 %v2253, 1.442695
    %v2265 = vpow.pop %v2264
    %v2266 = vmul.f32 %v2254, 1.442695
    %v2267 = vpow.pop %v2266
    %v2268 = vmul.f32 %v2255, 1.442695
    %v2269 = vpow.pop %v2268
    %2277 = vrot.lane.b32.xlu0 %v2257, 32
    %v2278 = vpop.permute.xlu0 %2277
    %2279 = vrot.lane.b32.xlu0 %v2259, 32
    %v2280 = vpop.permute.xlu0 %2279
    %2281 = vrot.lane.b32.xlu0 %v2261, 32
    %v2282 = vpop.permute.xlu0 %2281
    %2283 = vrot.lane.b32.xlu0 %v2263, 32
    %v2284 = vpop.permute.xlu0 %2283
    %2285 = vrot.lane.b32.xlu0 %v2265, 32
    %v2286 = vpop.permute.xlu0 %2285
    %2287 = vrot.lane.b32.xlu0 %v2267, 32
    %v2288 = vpop.permute.xlu0 %2287
    %2289 = vrot.lane.b32.xlu0 %v2269, 32
    %v2290 = vpop.permute.xlu0 %2289
    %v2298 = vsel %vm365, %v2257, %v2278
    %v2299 = vsel %vm365, %v2259, %v2280
    %v2300 = vsel %vm365, %v2261, %v2282
    %v2301 = vsel %vm365, %v2263, %v2284
    %v2302 = vsel %vm365, %v2265, %v2286
    %v2303 = vsel %vm365, %v2267, %v2288
    %v2304 = vsel %vm365, %v2269, %v2290
    %v2305 = vmul.f32 %v2298, %v357
    %v2306 = vmul.f32 %v2299, %v358
    %v2307 = vmul.f32 %v2300, %v359
    %v2308 = vmul.f32 %v2301, %v360
    %v2309 = vmul.f32 %v2302, %v361
    %v2310 = vmul.f32 %v2303, %v362
    %v2311 = vmul.f32 %v2304, %v363
    %v2312 = vsel %vm896, %v2305, 0.0
    %v2313 = vsel %vm896, %v2306, 0.0
    %v2314 = vadd.f32 %v2312, %v2313
    %v2315 = vsel %vm896, %v2307, 0.0
    %v2316 = vadd.f32 %v2314, %v2315
    %v2317 = vsel %vm896, %v2308, 0.0
    %v2318 = vadd.f32 %v2316, %v2317
    %v2319 = vsel %vm896, %v2309, 0.0
    %v2320 = vadd.f32 %v2318, %v2319
    %v2321 = vsel %vm896, %v2310, 0.0
    %v2322 = vadd.f32 %v2320, %v2321
    %v2323 = vsel %vm896, %v2311, 0.0
    %v2324 = vadd.f32 %v2322, %v2323
    %v2325 = vrot.slane %v2324, 4
    %v2326 = vadd.f32 %v2324, %v2325
    %v2327 = vrot.slane %v2326, 2
    %v2328 = vadd.f32 %v2326, %v2327
    %v2329 = vrot.slane %v2328, 1
    %v2330 = vadd.f32 %v2328, %v2329
    %v2331 = vrcp.pop %v2330
    %v2332 = vmul.f32 %v2305, %v2331
    %v2333 = vmul.f32 %v2306, %v2331
    %v2334 = vmul.f32 %v2307, %v2331
    %v2335 = vmul.f32 %v2308, %v2331
    %v2336 = vmul.f32 %v2309, %v2331
    %v2337 = vmul.f32 %v2310, %v2331
    %v2338 = vmul.f32 %v2311, %v2331
    %2339 = vxpose.xlu0.b32.start [1/16] %v2332, 128
    %2340 = vxpose.xlu0.b32.cont [2/16] %v2333, 128
    %2341 = vxpose.xlu0.b32.cont [3/16] %v2334, 128
    %2342 = vxpose.xlu0.b32.cont [4/16] %v2335, 128
    %2343 = vxpose.xlu0.b32.cont [5/16] %v2336, 128
    %2344 = vxpose.xlu0.b32.cont [6/16] %v2337, 128
    %2345 = vxpose.xlu0.b32.cont [7/16] %v2338, 128
    %2346 = vxpose.xlu0.b32.cont [8/16] 0.0, 128
    %2347 = vxpose.xlu0.b32.cont [9/16] 0.0, 128
    %2348 = vxpose.xlu0.b32.cont [10/16] 0.0, 128
    %2349 = vxpose.xlu0.b32.cont [11/16] 0.0, 128
    %2350 = vxpose.xlu0.b32.cont [12/16] 0.0, 128
    %2351 = vxpose.xlu0.b32.cont [13/16] 0.0, 128
    %2352 = vxpose.xlu0.b32.cont [14/16] 0.0, 128
    %2353 = vxpose.xlu0.b32.cont [15/16] 0.0, 128
    %2354 = vxpose.xlu0.b32.end [16/16] 0.0, 128
    %v2355 = vpop.trf.xlu0
    %v2356 = vpop.trf.xlu0
    %v2357 = vpop.trf.xlu0
    %v2358 = vpop.trf.xlu0
    %v2359 = vpop.trf.xlu0
    %v2360 = vpop.trf.xlu0
    %v2361 = vpop.trf.xlu0
    %v2362 = vpop.trf.xlu0
    %v2363 = vpop.trf.xlu0
    %v2364 = vpop.trf.xlu0
    %v2365 = vpop.trf.xlu0
    %v2366 = vpop.trf.xlu0
    %v2367 = vpop.trf.xlu0
    %v2368 = vpop.trf.xlu0
    %v2369 = vpop.trf.xlu0
    %v2370 = vpop.trf.xlu0
    %v2372 = vsel %vm956, %v2355, 0
    %v2375 = vsel %vm956, %v2356, 0
    %v2378 = vsel %vm956, %v2357, 0
    %v2381 = vsel %vm956, %v2358, 0
    %v2384 = vsel %vm956, %v2359, 0
    %v2387 = vsel %vm956, %v2360, 0
    %v2390 = vsel %vm956, %v2361, 0
    %v2393 = vsel %vm956, %v2362, 0
    %2395 = vmatpush.msra.mxu0 0.0
    %2396 = vmatpush.msra.mxu0 0.0
    %2397 = vmatpush.msra.mxu0 0.0
    %2398 = vmatpush.msra.mxu0 0.0
    %2399 = vmatpush.msra.mxu0 0.0
    %2400 = vmatpush.msra.mxu0 0.0
    %2401 = vmatpush.msra.mxu0 0.0
    %2402 = vmatpush.msra.mxu0 0.0
    %2403 = vmatpush.msra.mxu0 0.0
    %2404 = vmatpush.msra.mxu0 %v2106
    %2405 = vmatpush.msra.mxu0 %v2103
    %2406 = vmatpush.msra.mxu0 %v2100
    %2407 = vmatpush.msra.mxu0 %v2097
    %2408 = vmatpush.msra.mxu0 %v2094
    %2409 = vmatpush.msra.mxu0 %v2091
    %2410 = vmatpush.msra.mxu0 %v2088
    %2411 = vmatmul.f32.gmra.mxu0 %v2372
    %v2412 = vpop.f32.mrf.mxu0
    %v2413 = vadd.f32 0.0, %v2412
    %2414 = vmatmul.f32.gmra.mxu0 %v2375
    %v2415 = vpop.f32.mrf.mxu0
    %v2416 = vadd.f32 0.0, %v2415
    %2417 = vmatmul.f32.gmra.mxu0 %v2378
    %v2418 = vpop.f32.mrf.mxu0
    %v2419 = vadd.f32 0.0, %v2418
    %2420 = vmatmul.f32.gmra.mxu0 %v2381
    %v2421 = vpop.f32.mrf.mxu0
    %v2422 = vadd.f32 0.0, %v2421
    %2423 = vmatmul.f32.gmra.mxu0 %v2384
    %v2424 = vpop.f32.mrf.mxu0
    %v2425 = vadd.f32 0.0, %v2424
    %2426 = vmatmul.f32.gmra.mxu0 %v2387
    %v2427 = vpop.f32.mrf.mxu0
    %v2428 = vadd.f32 0.0, %v2427
    %2429 = vmatmul.f32.gmra.mxu0 %v2390
    %v2430 = vpop.f32.mrf.mxu0
    %v2431 = vadd.f32 0.0, %v2430
    %2432 = vmatmul.f32.gmra.mxu0 %v2393
    %v2433 = vpop.f32.mrf.mxu0
    %v2434 = vadd.f32 0.0, %v2433
    %2435 = vdwg.mxu0
    %2443 = vrot.lane.b32.xlu0 %v2223, 32
    %v2444 = vpop.permute.xlu0 %2443
    %2445 = vrot.lane.b32.xlu0 %v2224, 32
    %v2446 = vpop.permute.xlu0 %2445
    %2447 = vrot.lane.b32.xlu0 %v2225, 32
    %v2448 = vpop.permute.xlu0 %2447
    %2449 = vrot.lane.b32.xlu0 %v2226, 32
    %v2450 = vpop.permute.xlu0 %2449
    %2451 = vrot.lane.b32.xlu0 %v2227, 32
    %v2452 = vpop.permute.xlu0 %2451
    %2453 = vrot.lane.b32.xlu0 %v2228, 32
    %v2454 = vpop.permute.xlu0 %2453
    %2455 = vrot.lane.b32.xlu0 %v2229, 32
    %v2456 = vpop.permute.xlu0 %2455
    %v2464 = vsel %vm365, %v2223, %v2444
    %v2465 = vsel %vm365, %v2224, %v2446
    %v2466 = vsel %vm365, %v2225, %v2448
    %v2467 = vsel %vm365, %v2226, %v2450
    %v2468 = vsel %vm365, %v2227, %v2452
    %v2469 = vsel %vm365, %v2228, %v2454
    %v2470 = vsel %vm365, %v2229, %v2456
    %v2471 = vmul.f32 %v2464, %v357
    %v2472 = vmul.f32 %v2465, %v358
    %v2473 = vmul.f32 %v2466, %v359
    %v2474 = vmul.f32 %v2467, %v360
    %v2475 = vmul.f32 %v2468, %v361
    %v2476 = vmul.f32 %v2469, %v362
    %v2477 = vmul.f32 %v2470, %v363
    %v2478 = vmul.f32 %v2413, %v349
    %v2479 = vmul.f32 %v2416, %v350
    %v2480 = vmul.f32 %v2419, %v351
    %v2481 = vmul.f32 %v2422, %v352
    %v2482 = vmul.f32 %v2425, %v353
    %v2483 = vmul.f32 %v2428, %v354
    %v2484 = vmul.f32 %v2431, %v355
    %v2485 = vmul.f32 %v2434, %v356
    %v2487 = vsel %vm896, %v2471, 0
    %v2490 = vsel %vm896, %v2472, 0
    %v2493 = vsel %vm896, %v2473, 0
    %v2496 = vsel %vm896, %v2474, 0
    %v2499 = vsel %vm896, %v2475, 0
    %v2502 = vsel %vm896, %v2476, 0
    %v2505 = vsel %vm896, %v2477, 0
    %2507 = vmatpush.msra.mxu0 0.0
    %2508 = vmatpush.msra.mxu0 0.0
    %2509 = vmatpush.msra.mxu0 0.0
    %2510 = vmatpush.msra.mxu0 0.0
    %2511 = vmatpush.msra.mxu0 0.0
    %2512 = vmatpush.msra.mxu0 0.0
    %2513 = vmatpush.msra.mxu0 0.0
    %2514 = vmatpush.msra.mxu0 0.0
    %2515 = vmatpush.msra.mxu0 %v2485
    %2516 = vmatpush.msra.mxu0 %v2484
    %2517 = vmatpush.msra.mxu0 %v2483
    %2518 = vmatpush.msra.mxu0 %v2482
    %2519 = vmatpush.msra.mxu0 %v2481
    %2520 = vmatpush.msra.mxu0 %v2480
    %2521 = vmatpush.msra.mxu0 %v2479
    %2522 = vmatpush.msra.mxu0 %v2478
    %2523 = vmatmul.f32.gmra.mxu0 %v2487
    %v2524 = vpop.f32.mrf.mxu0
    %v2525 = vadd.f32 0.0, %v2524
    %2526 = vmatmul.f32.gmra.mxu0 %v2490
    %v2527 = vpop.f32.mrf.mxu0
    %v2528 = vadd.f32 0.0, %v2527
    %2529 = vmatmul.f32.gmra.mxu0 %v2493
    %v2530 = vpop.f32.mrf.mxu0
    %v2531 = vadd.f32 0.0, %v2530
    %2532 = vmatmul.f32.gmra.mxu0 %v2496
    %v2533 = vpop.f32.mrf.mxu0
    %v2534 = vadd.f32 0.0, %v2533
    %2535 = vmatmul.f32.gmra.mxu0 %v2499
    %v2536 = vpop.f32.mrf.mxu0
    %v2537 = vadd.f32 0.0, %v2536
    %2538 = vmatmul.f32.gmra.mxu0 %v2502
    %v2539 = vpop.f32.mrf.mxu0
    %v2540 = vadd.f32 0.0, %v2539
    %2541 = vmatmul.f32.gmra.mxu0 %v2505
    %v2542 = vpop.f32.mrf.mxu0
    %v2543 = vadd.f32 0.0, %v2542
    %2544 = vdwg.mxu0
    %s2545 = scalar_lea.vmem %s6, 224
    %v2546 = vld [vmem:[%s2545] sm:$0xff]
    %v2547 = vld [vmem:[%s2545 + $0x8] sm:$0xff]
    %v2548 = vld [vmem:[%s2545 + $0x10] sm:$0xff]
    %v2549 = vld [vmem:[%s2545 + $0x18] sm:$0xff]
    %v2550 = vperm.slane %v1787, 2
    %v2552 = vsel %vm365, %v2525, 0
    %v2555 = vsel %vm365, %v2528, 0
    %v2558 = vsel %vm365, %v2531, 0
    %v2561 = vsel %vm365, %v2534, 0
    %v2564 = vsel %vm365, %v2537, 0
    %v2567 = vsel %vm365, %v2540, 0
    %v2570 = vsel %vm365, %v2543, 0
    %2572 = vmatpush.msra.mxu0 0.0
    %2573 = vmatpush.msra.mxu0 0.0
    %2574 = vmatpush.msra.mxu0 0.0
    %2575 = vmatpush.msra.mxu0 0.0
    %2576 = vmatpush.msra.mxu0 0.0
    %2577 = vmatpush.msra.mxu0 0.0
    %2578 = vmatpush.msra.mxu0 0.0
    %2579 = vmatpush.msra.mxu0 0.0
    %2580 = vmatpush.msra.mxu0 0.0
    %2581 = vmatpush.msra.mxu0 0.0
    %2582 = vmatpush.msra.mxu0 0.0
    %2583 = vmatpush.msra.mxu0 0.0
    %2584 = vmatpush.msra.mxu0 %v2549
    %2585 = vmatpush.msra.mxu0 %v2548
    %2586 = vmatpush.msra.mxu0 %v2547
    %2587 = vmatpush.msra.mxu0 %v2546
    %2588 = vmatmul.f32.gmra.mxu0 %v2552
    %v2589 = vpop.f32.mrf.mxu0
    %v2590 = vadd.f32 %v2550, %v2589
    %2591 = vmatmul.f32.gmra.mxu0 %v2555
    %v2592 = vpop.f32.mrf.mxu0
    %v2593 = vadd.f32 %v2550, %v2592
    %2594 = vmatmul.f32.gmra.mxu0 %v2558
    %v2595 = vpop.f32.mrf.mxu0
    %v2596 = vadd.f32 %v2550, %v2595
    %2597 = vmatmul.f32.gmra.mxu0 %v2561
    %v2598 = vpop.f32.mrf.mxu0
    %v2599 = vadd.f32 %v2550, %v2598
    %2600 = vmatmul.f32.gmra.mxu0 %v2564
    %v2601 = vpop.f32.mrf.mxu0
    %v2602 = vadd.f32 %v2550, %v2601
    %2603 = vmatmul.f32.gmra.mxu0 %v2567
    %v2604 = vpop.f32.mrf.mxu0
    %v2605 = vadd.f32 %v2550, %v2604
    %2606 = vmatmul.f32.gmra.mxu0 %v2570
    %v2607 = vpop.f32.mrf.mxu0
    %v2608 = vadd.f32 %v2550, %v2607
    %2609 = vdwg.mxu0
    %v2610 = vadd.f32 %v1779, %v2590
    %v2611 = vadd.f32 %v1780, %v2593
    %v2612 = vadd.f32 %v1781, %v2596
    %v2613 = vadd.f32 %v1782, %v2599
    %v2614 = vadd.f32 %v1783, %v2602
    %v2615 = vadd.f32 %v1784, %v2605
    %v2616 = vadd.f32 %v1785, %v2608
    %v2617 = vsel %vm365, %v2610, 0.0
    %2618 = vadd.xlane.f32.xlu0 %v2617
    %v2619 = vpop.xlane.xlu0 %2618
    %v2620 = vsel %vm365, %v2611, 0.0
    %2621 = vadd.xlane.f32.xlu0 %v2620
    %v2622 = vpop.xlane.xlu0 %2621
    %v2623 = vsel %vm365, %v2612, 0.0
    %2624 = vadd.xlane.f32.xlu0 %v2623
    %v2625 = vpop.xlane.xlu0 %2624
    %v2626 = vsel %vm365, %v2613, 0.0
    %2627 = vadd.xlane.f32.xlu0 %v2626
    %v2628 = vpop.xlane.xlu0 %2627
    %v2629 = vsel %vm365, %v2614, 0.0
    %2630 = vadd.xlane.f32.xlu0 %v2629
    %v2631 = vpop.xlane.xlu0 %2630
    %v2632 = vsel %vm365, %v2615, 0.0
    %2633 = vadd.xlane.f32.xlu0 %v2632
    %v2634 = vpop.xlane.xlu0 %2633
    %v2635 = vsel %vm365, %v2616, 0.0
    %2636 = vadd.xlane.f32.xlu0 %v2635
    %v2637 = vpop.xlane.xlu0 %2636
    %v2638 = vmul.f32 %v2619, %v393
    %v2639 = vmul.f32 %v2622, %v393
    %v2640 = vmul.f32 %v2625, %v393
    %v2641 = vmul.f32 %v2628, %v393
    %v2642 = vmul.f32 %v2631, %v393
    %v2643 = vmul.f32 %v2634, %v393
    %v2644 = vmul.f32 %v2637, %v393
    %v2645 = vsub.f32 %v2610, %v2638
    %v2646 = vsub.f32 %v2611, %v2639
    %v2647 = vsub.f32 %v2612, %v2640
    %v2648 = vsub.f32 %v2613, %v2641
    %v2649 = vsub.f32 %v2614, %v2642
    %v2650 = vsub.f32 %v2615, %v2643
    %v2651 = vsub.f32 %v2616, %v2644
    %v2652 = vmul.f32 %v2645, %v2645
    %v2653 = vmul.f32 %v2646, %v2646
    %v2654 = vmul.f32 %v2647, %v2647
    %v2655 = vmul.f32 %v2648, %v2648
    %v2656 = vmul.f32 %v2649, %v2649
    %v2657 = vmul.f32 %v2650, %v2650
    %v2658 = vmul.f32 %v2651, %v2651
    %v2659 = vsel %vm365, %v2652, 0.0
    %2660 = vadd.xlane.f32.xlu0 %v2659
    %v2661 = vpop.xlane.xlu0 %2660
    %v2662 = vsel %vm365, %v2653, 0.0
    %2663 = vadd.xlane.f32.xlu0 %v2662
    %v2664 = vpop.xlane.xlu0 %2663
    %v2665 = vsel %vm365, %v2654, 0.0
    %2666 = vadd.xlane.f32.xlu0 %v2665
    %v2667 = vpop.xlane.xlu0 %2666
    %v2668 = vsel %vm365, %v2655, 0.0
    %2669 = vadd.xlane.f32.xlu0 %v2668
    %v2670 = vpop.xlane.xlu0 %2669
    %v2671 = vsel %vm365, %v2656, 0.0
    %2672 = vadd.xlane.f32.xlu0 %v2671
    %v2673 = vpop.xlane.xlu0 %2672
    %v2674 = vsel %vm365, %v2657, 0.0
    %2675 = vadd.xlane.f32.xlu0 %v2674
    %v2676 = vpop.xlane.xlu0 %2675
    %v2677 = vsel %vm365, %v2658, 0.0
    %2678 = vadd.xlane.f32.xlu0 %v2677
    %v2679 = vpop.xlane.xlu0 %2678
    %v2680 = vmul.f32 %v2661, %v393
    %v2681 = vmul.f32 %v2664, %v393
    %v2682 = vmul.f32 %v2667, %v393
    %v2683 = vmul.f32 %v2670, %v393
    %v2684 = vmul.f32 %v2673, %v393
    %v2685 = vmul.f32 %v2676, %v393
    %v2686 = vmul.f32 %v2679, %v393
    %v2687 = vadd.f32 %v2680, 1e-05
    %v2688 = vadd.f32 %v2681, 1e-05
    %v2689 = vadd.f32 %v2682, 1e-05
    %v2690 = vadd.f32 %v2683, 1e-05
    %v2691 = vadd.f32 %v2684, 1e-05
    %v2692 = vadd.f32 %v2685, 1e-05
    %v2693 = vadd.f32 %v2686, 1e-05
    %v2694 = vrsqrt.pop %v2687
    %v2695 = vmul.f32 %v2694, %v2687
    %v2696 = vmul.f32 %v2695, %v2694
    %v2697 = vmul.f32 0.5, %v2696
    %v2698 = vsub.f32 1.5, %v2697
    %v2699 = vmul.f32 %v2694, %v2698
    %vm2700 = vweird.f32 %v2687
    %vm2701 = vweird.f32 %v2694
    %vm2702 = vmor %vm2700, %vm2701
    %v2703 = vsel %vm2702, %v2694, %v2699
    %v2704 = vrsqrt.pop %v2688
    %v2705 = vmul.f32 %v2704, %v2688
    %v2706 = vmul.f32 %v2705, %v2704
    %v2707 = vmul.f32 0.5, %v2706
    %v2708 = vsub.f32 1.5, %v2707
    %v2709 = vmul.f32 %v2704, %v2708
    %vm2710 = vweird.f32 %v2688
    %vm2711 = vweird.f32 %v2704
    %vm2712 = vmor %vm2710, %vm2711
    %v2713 = vsel %vm2712, %v2704, %v2709
    %v2714 = vrsqrt.pop %v2689
    %v2715 = vmul.f32 %v2714, %v2689
    %v2716 = vmul.f32 %v2715, %v2714
    %v2717 = vmul.f32 0.5, %v2716
    %v2718 = vsub.f32 1.5, %v2717
    %v2719 = vmul.f32 %v2714, %v2718
    %vm2720 = vweird.f32 %v2689
    %vm2721 = vweird.f32 %v2714
    %vm2722 = vmor %vm2720, %vm2721
    %v2723 = vsel %vm2722, %v2714, %v2719
    %v2724 = vrsqrt.pop %v2690
    %v2725 = vmul.f32 %v2724, %v2690
    %v2726 = vmul.f32 %v2725, %v2724
    %v2727 = vmul.f32 0.5, %v2726
    %v2728 = vsub.f32 1.5, %v2727
    %v2729 = vmul.f32 %v2724, %v2728
    %vm2730 = vweird.f32 %v2690
    %vm2731 = vweird.f32 %v2724
    %vm2732 = vmor %vm2730, %vm2731
    %v2733 = vsel %vm2732, %v2724, %v2729
    %v2734 = vrsqrt.pop %v2691
    %v2735 = vmul.f32 %v2734, %v2691
    %v2736 = vmul.f32 %v2735, %v2734
    %v2737 = vmul.f32 0.5, %v2736
    %v2738 = vsub.f32 1.5, %v2737
    %v2739 = vmul.f32 %v2734, %v2738
    %vm2740 = vweird.f32 %v2691
    %vm2741 = vweird.f32 %v2734
    %vm2742 = vmor %vm2740, %vm2741
    %v2743 = vsel %vm2742, %v2734, %v2739
    %v2744 = vrsqrt.pop %v2692
    %v2745 = vmul.f32 %v2744, %v2692
    %v2746 = vmul.f32 %v2745, %v2744
    %v2747 = vmul.f32 0.5, %v2746
    %v2748 = vsub.f32 1.5, %v2747
    %v2749 = vmul.f32 %v2744, %v2748
    %vm2750 = vweird.f32 %v2692
    %vm2751 = vweird.f32 %v2744
    %vm2752 = vmor %vm2750, %vm2751
    %v2753 = vsel %vm2752, %v2744, %v2749
    %v2754 = vrsqrt.pop %v2693
    %v2755 = vmul.f32 %v2754, %v2693
    %v2756 = vmul.f32 %v2755, %v2754
    %v2757 = vmul.f32 0.5, %v2756
    %v2758 = vsub.f32 1.5, %v2757
    %v2759 = vmul.f32 %v2754, %v2758
    %vm2760 = vweird.f32 %v2693
    %vm2761 = vweird.f32 %v2754
    %vm2762 = vmor %vm2760, %vm2761
    %v2763 = vsel %vm2762, %v2754, %v2759
    %v2764 = vmul.f32 %v2645, %v2703
    %v2765 = vmul.f32 %v2646, %v2713
    %v2766 = vmul.f32 %v2647, %v2723
    %v2767 = vmul.f32 %v2648, %v2733
    %v2768 = vmul.f32 %v2649, %v2743
    %v2769 = vmul.f32 %v2650, %v2753
    %v2770 = vmul.f32 %v2651, %v2763
    %v2771 = vperm.slane %v1787, 3
    %v2772 = vmul.f32 %v2764, %v2771
    %v2773 = vmul.f32 %v2765, %v2771
    %v2774 = vmul.f32 %v2766, %v2771
    %v2775 = vmul.f32 %v2767, %v2771
    %v2776 = vmul.f32 %v2768, %v2771
    %v2777 = vmul.f32 %v2769, %v2771
    %v2778 = vmul.f32 %v2770, %v2771
    %v2779 = vperm.slane %v1787, 4
    %v2780 = vadd.f32 %v2772, %v2779
    %v2781 = vadd.f32 %v2773, %v2779
    %v2782 = vadd.f32 %v2774, %v2779
    %v2783 = vadd.f32 %v2775, %v2779
    %v2784 = vadd.f32 %v2776, %v2779
    %v2785 = vadd.f32 %v2777, %v2779
    %v2786 = vadd.f32 %v2778, %v2779
    %s2787 = scalar_lea.vmem %s7, 32
    %v2788 = vld [vmem:[%s2787] sm:$0xff]
    %v2789 = vld [vmem:[%s2787 + $0x8] sm:$0xff]
    %v2790 = vld [vmem:[%s2787 + $0x10] sm:$0xff]
    %v2791 = vld [vmem:[%s2787 + $0x18] sm:$0xff]
    %v2792 = vperm.slane %v1787, 5
    %v2794 = vsel %vm365, %v2780, 0
    %v2797 = vsel %vm365, %v2781, 0
    %v2800 = vsel %vm365, %v2782, 0
    %v2803 = vsel %vm365, %v2783, 0
    %v2806 = vsel %vm365, %v2784, 0
    %v2809 = vsel %vm365, %v2785, 0
    %v2812 = vsel %vm365, %v2786, 0
    %2814 = vmatpush.msra.mxu0 0.0
    %2815 = vmatpush.msra.mxu0 0.0
    %2816 = vmatpush.msra.mxu0 0.0
    %2817 = vmatpush.msra.mxu0 0.0
    %2818 = vmatpush.msra.mxu0 0.0
    %2819 = vmatpush.msra.mxu0 0.0
    %2820 = vmatpush.msra.mxu0 0.0
    %2821 = vmatpush.msra.mxu0 0.0
    %2822 = vmatpush.msra.mxu0 0.0
    %2823 = vmatpush.msra.mxu0 0.0
    %2824 = vmatpush.msra.mxu0 0.0
    %2825 = vmatpush.msra.mxu0 0.0
    %2826 = vmatpush.msra.mxu0 %v2791
    %2827 = vmatpush.msra.mxu0 %v2790
    %2828 = vmatpush.msra.mxu0 %v2789
    %2829 = vmatpush.msra.mxu0 %v2788
    %2830 = vmatmul.f32.gmra.mxu0 %v2794
    %v2831 = vpop.f32.mrf.mxu0
    %v2832 = vadd.f32 %v2792, %v2831
    %2833 = vmatmul.f32.gmra.mxu0 %v2797
    %v2834 = vpop.f32.mrf.mxu0
    %v2835 = vadd.f32 %v2792, %v2834
    %2836 = vmatmul.f32.gmra.mxu0 %v2800
    %v2837 = vpop.f32.mrf.mxu0
    %v2838 = vadd.f32 %v2792, %v2837
    %2839 = vmatmul.f32.gmra.mxu0 %v2803
    %v2840 = vpop.f32.mrf.mxu0
    %v2841 = vadd.f32 %v2792, %v2840
    %2842 = vmatmul.f32.gmra.mxu0 %v2806
    %v2843 = vpop.f32.mrf.mxu0
    %v2844 = vadd.f32 %v2792, %v2843
    %2845 = vmatmul.f32.gmra.mxu0 %v2809
    %v2846 = vpop.f32.mrf.mxu0
    %v2847 = vadd.f32 %v2792, %v2846
    %2848 = vmatmul.f32.gmra.mxu0 %v2812
    %v2849 = vpop.f32.mrf.mxu0
    %v2850 = vadd.f32 %v2792, %v2849
    %2851 = vdwg.mxu0
    %v2852 = vmul.f32 %v2832, 0.5
    %v2853 = vmul.f32 %v2835, 0.5
    %v2854 = vmul.f32 %v2838, 0.5
    %v2855 = vmul.f32 %v2841, 0.5
    %v2856 = vmul.f32 %v2844, 0.5
    %v2857 = vmul.f32 %v2847, 0.5
    %v2858 = vmul.f32 %v2850, 0.5
    %v2859 = vmul.f32 %v2832, 0.70710677
    %v2860 = vmul.f32 %v2835, 0.70710677
    %v2861 = vmul.f32 %v2838, 0.70710677
    %v2862 = vmul.f32 %v2841, 0.70710677
    %v2863 = vmul.f32 %v2844, 0.70710677
    %v2864 = vmul.f32 %v2847, 0.70710677
    %v2865 = vmul.f32 %v2850, 0.70710677
    %vm2866 = vcmp.ge.f32.partialorder %v2859, 0.0
    %vm2867 = vcmp.ge.f32.partialorder %v2860, 0.0
    %vm2868 = vcmp.ge.f32.partialorder %v2861, 0.0
    %vm2869 = vcmp.ge.f32.partialorder %v2862, 0.0
    %vm2870 = vcmp.ge.f32.partialorder %v2863, 0.0
    %vm2871 = vcmp.ge.f32.partialorder %v2864, 0.0
    %vm2872 = vcmp.ge.f32.partialorder %v2865, 0.0
    %v2873 = vsel %vm2866, 1.0, -1.0
    %v2874 = vsel %vm2867, 1.0, -1.0
    %v2875 = vsel %vm2868, 1.0, -1.0
    %v2876 = vsel %vm2869, 1.0, -1.0
    %v2877 = vsel %vm2870, 1.0, -1.0
    %v2878 = vsel %vm2871, 1.0, -1.0
    %v2879 = vsel %vm2872, 1.0, -1.0
    %v2880 = vand.u32 2147483647, %v2859
    %v2881 = vand.u32 2147483647, %v2860
    %v2882 = vand.u32 2147483647, %v2861
    %v2883 = vand.u32 2147483647, %v2862
    %v2884 = vand.u32 2147483647, %v2863
    %v2885 = vand.u32 2147483647, %v2864
    %v2886 = vand.u32 2147483647, %v2865
    %v2887 = vmul.f32 %v2880, 0.3275911
    %v2888 = vmul.f32 %v2881, 0.3275911
    %v2889 = vmul.f32 %v2882, 0.3275911
    %v2890 = vmul.f32 %v2883, 0.3275911
    %v2891 = vmul.f32 %v2884, 0.3275911
    %v2892 = vmul.f32 %v2885, 0.3275911
    %v2893 = vmul.f32 %v2886, 0.3275911
    %v2894 = vadd.f32 %v2887, 1.0
    %v2895 = vadd.f32 %v2888, 1.0
    %v2896 = vadd.f32 %v2889, 1.0
    %v2897 = vadd.f32 %v2890, 1.0
    %v2898 = vadd.f32 %v2891, 1.0
    %v2899 = vadd.f32 %v2892, 1.0
    %v2900 = vadd.f32 %v2893, 1.0
    %v2901 = vrcp.pop %v2894
    %v2902 = vmul.f32 %v2894, %v2901
    %v2903 = vsub.f32 1.0, %v2902
    %v2904 = vmul.f32 %v2901, %v2903
    %v2905 = vadd.f32 %v2901, %v2904
    %vm2906 = vweird.f32 %v2894
    %vm2907 = vweird.f32 %v2901
    %vm2908 = vmor %vm2906, %vm2907
    %v2909 = vsel %vm2908, %v2901, %v2905
    %v2910 = vand.u32 2147483647, %v2894
    %vm2911 = vcmp.eq.f32.partialorder %v2910, 8.507059e+37
    %v2912 = vand.u32 %v2894, 2147483648
    %v2913 = vor.u32 1.1754944e-38, %v2912
    %v2914 = vsel %vm2911, %v2913, %v2909
    %v2915 = vmul.f32 1.0, %v2914
    %v2916 = vrcp.pop %v2895
    %v2917 = vmul.f32 %v2895, %v2916
    %v2918 = vsub.f32 1.0, %v2917
    %v2919 = vmul.f32 %v2916, %v2918
    %v2920 = vadd.f32 %v2916, %v2919
    %vm2921 = vweird.f32 %v2895
    %vm2922 = vweird.f32 %v2916
    %vm2923 = vmor %vm2921, %vm2922
    %v2924 = vsel %vm2923, %v2916, %v2920
    %v2925 = vand.u32 2147483647, %v2895
    %vm2926 = vcmp.eq.f32.partialorder %v2925, 8.507059e+37
    %v2927 = vand.u32 %v2895, 2147483648
    %v2928 = vor.u32 1.1754944e-38, %v2927
    %v2929 = vsel %vm2926, %v2928, %v2924
    %v2930 = vmul.f32 1.0, %v2929
    %v2931 = vrcp.pop %v2896
    %v2932 = vmul.f32 %v2896, %v2931
    %v2933 = vsub.f32 1.0, %v2932
    %v2934 = vmul.f32 %v2931, %v2933
    %v2935 = vadd.f32 %v2931, %v2934
    %vm2936 = vweird.f32 %v2896
    %vm2937 = vweird.f32 %v2931
    %vm2938 = vmor %vm2936, %vm2937
    %v2939 = vsel %vm2938, %v2931, %v2935
    %v2940 = vand.u32 2147483647, %v2896
    %vm2941 = vcmp.eq.f32.partialorder %v2940, 8.507059e+37
    %v2942 = vand.u32 %v2896, 2147483648
    %v2943 = vor.u32 1.1754944e-38, %v2942
    %v2944 = vsel %vm2941, %v2943, %v2939
    %v2945 = vmul.f32 1.0, %v2944
    %v2946 = vrcp.pop %v2897
    %v2947 = vmul.f32 %v2897, %v2946
    %v2948 = vsub.f32 1.0, %v2947
    %v2949 = vmul.f32 %v2946, %v2948
    %v2950 = vadd.f32 %v2946, %v2949
    %vm2951 = vweird.f32 %v2897
    %vm2952 = vweird.f32 %v2946
    %vm2953 = vmor %vm2951, %vm2952
    %v2954 = vsel %vm2953, %v2946, %v2950
    %v2955 = vand.u32 2147483647, %v2897
    %vm2956 = vcmp.eq.f32.partialorder %v2955, 8.507059e+37
    %v2957 = vand.u32 %v2897, 2147483648
    %v2958 = vor.u32 1.1754944e-38, %v2957
    %v2959 = vsel %vm2956, %v2958, %v2954
    %v2960 = vmul.f32 1.0, %v2959
    %v2961 = vrcp.pop %v2898
    %v2962 = vmul.f32 %v2898, %v2961
    %v2963 = vsub.f32 1.0, %v2962
    %v2964 = vmul.f32 %v2961, %v2963
    %v2965 = vadd.f32 %v2961, %v2964
    %vm2966 = vweird.f32 %v2898
    %vm2967 = vweird.f32 %v2961
    %vm2968 = vmor %vm2966, %vm2967
    %v2969 = vsel %vm2968, %v2961, %v2965
    %v2970 = vand.u32 2147483647, %v2898
    %vm2971 = vcmp.eq.f32.partialorder %v2970, 8.507059e+37
    %v2972 = vand.u32 %v2898, 2147483648
    %v2973 = vor.u32 1.1754944e-38, %v2972
    %v2974 = vsel %vm2971, %v2973, %v2969
    %v2975 = vmul.f32 1.0, %v2974
    %v2976 = vrcp.pop %v2899
    %v2977 = vmul.f32 %v2899, %v2976
    %v2978 = vsub.f32 1.0, %v2977
    %v2979 = vmul.f32 %v2976, %v2978
    %v2980 = vadd.f32 %v2976, %v2979
    %vm2981 = vweird.f32 %v2899
    %vm2982 = vweird.f32 %v2976
    %vm2983 = vmor %vm2981, %vm2982
    %v2984 = vsel %vm2983, %v2976, %v2980
    %v2985 = vand.u32 2147483647, %v2899
    %vm2986 = vcmp.eq.f32.partialorder %v2985, 8.507059e+37
    %v2987 = vand.u32 %v2899, 2147483648
    %v2988 = vor.u32 1.1754944e-38, %v2987
    %v2989 = vsel %vm2986, %v2988, %v2984
    %v2990 = vmul.f32 1.0, %v2989
    %v2991 = vrcp.pop %v2900
    %v2992 = vmul.f32 %v2900, %v2991
    %v2993 = vsub.f32 1.0, %v2992
    %v2994 = vmul.f32 %v2991, %v2993
    %v2995 = vadd.f32 %v2991, %v2994
    %vm2996 = vweird.f32 %v2900
    %vm2997 = vweird.f32 %v2991
    %vm2998 = vmor %vm2996, %vm2997
    %v2999 = vsel %vm2998, %v2991, %v2995
    %v3000 = vand.u32 2147483647, %v2900
    %vm3001 = vcmp.eq.f32.partialorder %v3000, 8.507059e+37
    %v3002 = vand.u32 %v2900, 2147483648
    %v3003 = vor.u32 1.1754944e-38, %v3002
    %v3004 = vsel %vm3001, %v3003, %v2999
    %v3005 = vmul.f32 1.0, %v3004
    %v3006 = vmul.f32 %v2915, 1.0614054
    %v3007 = vmul.f32 %v2930, 1.0614054
    %v3008 = vmul.f32 %v2945, 1.0614054
    %v3009 = vmul.f32 %v2960, 1.0614054
    %v3010 = vmul.f32 %v2975, 1.0614054
    %v3011 = vmul.f32 %v2990, 1.0614054
    %v3012 = vmul.f32 %v3005, 1.0614054
    %v3013 = vadd.f32 %v3006, -1.4531521
    %v3014 = vadd.f32 %v3007, -1.4531521
    %v3015 = vadd.f32 %v3008, -1.4531521
    %v3016 = vadd.f32 %v3009, -1.4531521
    %v3017 = vadd.f32 %v3010, -1.4531521
    %v3018 = vadd.f32 %v3011, -1.4531521
    %v3019 = vadd.f32 %v3012, -1.4531521
    %v3020 = vmul.f32 %v3013, %v2915
    %v3021 = vmul.f32 %v3014, %v2930
    %v3022 = vmul.f32 %v3015, %v2945
    %v3023 = vmul.f32 %v3016, %v2960
    %v3024 = vmul.f32 %v3017, %v2975
    %v3025 = vmul.f32 %v3018, %v2990
    %v3026 = vmul.f32 %v3019, %v3005
    %v3027 = vadd.f32 %v3020, 1.4214138
    %v3028 = vadd.f32 %v3021, 1.4214138
    %v3029 = vadd.f32 %v3022, 1.4214138
    %v3030 = vadd.f32 %v3023, 1.4214138
    %v3031 = vadd.f32 %v3024, 1.4214138
    %v3032 = vadd.f32 %v3025, 1.4214138
    %v3033 = vadd.f32 %v3026, 1.4214138
    %v3034 = vmul.f32 %v3027, %v2915
    %v3035 = vmul.f32 %v3028, %v2930
    %v3036 = vmul.f32 %v3029, %v2945
    %v3037 = vmul.f32 %v3030, %v2960
    %v3038 = vmul.f32 %v3031, %v2975
    %v3039 = vmul.f32 %v3032, %v2990
    %v3040 = vmul.f32 %v3033, %v3005
    %v3041 = vadd.f32 %v3034, -0.28449672
    %v3042 = vadd.f32 %v3035, -0.28449672
    %v3043 = vadd.f32 %v3036, -0.28449672
    %v3044 = vadd.f32 %v3037, -0.28449672
    %v3045 = vadd.f32 %v3038, -0.28449672
    %v3046 = vadd.f32 %v3039, -0.28449672
    %v3047 = vadd.f32 %v3040, -0.28449672
    %v3048 = vmul.f32 %v3041, %v2915
    %v3049 = vmul.f32 %v3042, %v2930
    %v3050 = vmul.f32 %v3043, %v2945
    %v3051 = vmul.f32 %v3044, %v2960
    %v3052 = vmul.f32 %v3045, %v2975
    %v3053 = vmul.f32 %v3046, %v2990
    %v3054 = vmul.f32 %v3047, %v3005
    %v3055 = vadd.f32 %v3048, 0.2548296
    %v3056 = vadd.f32 %v3049, 0.2548296
    %v3057 = vadd.f32 %v3050, 0.2548296
    %v3058 = vadd.f32 %v3051, 0.2548296
    %v3059 = vadd.f32 %v3052, 0.2548296
    %v3060 = vadd.f32 %v3053, 0.2548296
    %v3061 = vadd.f32 %v3054, 0.2548296
    %v3062 = vmul.f32 %v3055, %v2915
    %v3063 = vmul.f32 %v3056, %v2930
    %v3064 = vmul.f32 %v3057, %v2945
    %v3065 = vmul.f32 %v3058, %v2960
    %v3066 = vmul.f32 %v3059, %v2975
    %v3067 = vmul.f32 %v3060, %v2990
    %v3068 = vmul.f32 %v3061, %v3005
    %v3069 = vsub.f32 0.0, %v2880
    %v3070 = vsub.f32 0.0, %v2881
    %v3071 = vsub.f32 0.0, %v2882
    %v3072 = vsub.f32 0.0, %v2883
    %v3073 = vsub.f32 0.0, %v2884
    %v3074 = vsub.f32 0.0, %v2885
    %v3075 = vsub.f32 0.0, %v2886
    %v3076 = vmul.f32 %v3069, %v2880
    %v3077 = vmul.f32 %v3070, %v2881
    %v3078 = vmul.f32 %v3071, %v2882
    %v3079 = vmul.f32 %v3072, %v2883
    %v3080 = vmul.f32 %v3073, %v2884
    %v3081 = vmul.f32 %v3074, %v2885
    %v3082 = vmul.f32 %v3075, %v2886
    %v3083 = vmul.f32 %v3076, 1.442695
    %v3084 = vpow.pop %v3083
    %v3085 = vmul.f32 %v3077, 1.442695
    %v3086 = vpow.pop %v3085
    %v3087 = vmul.f32 %v3078, 1.442695
    %v3088 = vpow.pop %v3087
    %v3089 = vmul.f32 %v3079, 1.442695
    %v3090 = vpow.pop %v3089
    %v3091 = vmul.f32 %v3080, 1.442695
    %v3092 = vpow.pop %v3091
    %v3093 = vmul.f32 %v3081, 1.442695
    %v3094 = vpow.pop %v3093
    %v3095 = vmul.f32 %v3082, 1.442695
    %v3096 = vpow.pop %v3095
    %v3097 = vmul.f32 %v3062, %v3084
    %v3098 = vmul.f32 %v3063, %v3086
    %v3099 = vmul.f32 %v3064, %v3088
    %v3100 = vmul.f32 %v3065, %v3090
    %v3101 = vmul.f32 %v3066, %v3092
    %v3102 = vmul.f32 %v3067, %v3094
    %v3103 = vmul.f32 %v3068, %v3096
    %v3104 = vsub.f32 1.0, %v3097
    %v3105 = vsub.f32 1.0, %v3098
    %v3106 = vsub.f32 1.0, %v3099
    %v3107 = vsub.f32 1.0, %v3100
    %v3108 = vsub.f32 1.0, %v3101
    %v3109 = vsub.f32 1.0, %v3102
    %v3110 = vsub.f32 1.0, %v3103
    %v3111 = vmul.f32 %v2873, %v3104
    %v3112 = vmul.f32 %v2874, %v3105
    %v3113 = vmul.f32 %v2875, %v3106
    %v3114 = vmul.f32 %v2876, %v3107
    %v3115 = vmul.f32 %v2877, %v3108
    %v3116 = vmul.f32 %v2878, %v3109
    %v3117 = vmul.f32 %v2879, %v3110
    %v3118 = vadd.f32 %v3111, 1.0
    %v3119 = vadd.f32 %v3112, 1.0
    %v3120 = vadd.f32 %v3113, 1.0
    %v3121 = vadd.f32 %v3114, 1.0
    %v3122 = vadd.f32 %v3115, 1.0
    %v3123 = vadd.f32 %v3116, 1.0
    %v3124 = vadd.f32 %v3117, 1.0
    %v3125 = vmul.f32 %v2852, %v3118
    %v3126 = vmul.f32 %v2853, %v3119
    %v3127 = vmul.f32 %v2854, %v3120
    %v3128 = vmul.f32 %v2855, %v3121
    %v3129 = vmul.f32 %v2856, %v3122
    %v3130 = vmul.f32 %v2857, %v3123
    %v3131 = vmul.f32 %v2858, %v3124
    %s3132 = scalar_lea.vmem %s8, 128
    %v3133 = vld [vmem:[%s3132] sm:$0xff]
    %v3134 = vld [vmem:[%s3132 + $0x8] sm:$0xff]
    %v3135 = vld [vmem:[%s3132 + $0x10] sm:$0xff]
    %v3136 = vld [vmem:[%s3132 + $0x18] sm:$0xff]
    %v3137 = vld [vmem:[%s3132 + $0x20] sm:$0xff]
    %v3138 = vld [vmem:[%s3132 + $0x28] sm:$0xff]
    %v3139 = vld [vmem:[%s3132 + $0x30] sm:$0xff]
    %v3140 = vld [vmem:[%s3132 + $0x38] sm:$0xff]
    %v3141 = vld [vmem:[%s3132 + $0x40] sm:$0xff]
    %v3142 = vld [vmem:[%s3132 + $0x48] sm:$0xff]
    %v3143 = vld [vmem:[%s3132 + $0x50] sm:$0xff]
    %v3144 = vld [vmem:[%s3132 + $0x58] sm:$0xff]
    %v3145 = vld [vmem:[%s3132 + $0x60] sm:$0xff]
    %v3146 = vld [vmem:[%s3132 + $0x68] sm:$0xff]
    %v3147 = vld [vmem:[%s3132 + $0x70] sm:$0xff]
    %v3148 = vld [vmem:[%s3132 + $0x78] sm:$0xff]
    %3149 = vmatpush.msra.mxu0 %v3148
    %3150 = vmatpush.msra.mxu0 %v3147
    %3151 = vmatpush.msra.mxu0 %v3146
    %3152 = vmatpush.msra.mxu0 %v3145
    %3153 = vmatpush.msra.mxu0 %v3144
    %3154 = vmatpush.msra.mxu0 %v3143
    %3155 = vmatpush.msra.mxu0 %v3142
    %3156 = vmatpush.msra.mxu0 %v3141
    %3157 = vmatpush.msra.mxu0 %v3140
    %3158 = vmatpush.msra.mxu0 %v3139
    %3159 = vmatpush.msra.mxu0 %v3138
    %3160 = vmatpush.msra.mxu0 %v3137
    %3161 = vmatpush.msra.mxu0 %v3136
    %3162 = vmatpush.msra.mxu0 %v3135
    %3163 = vmatpush.msra.mxu0 %v3134
    %3164 = vmatpush.msra.mxu0 %v3133
    %3165 = vmatmul.f32.gmra.mxu0 %v3125
    %v3166 = vpop.f32.mrf.mxu0
    %v3167 = vadd.f32 0.0, %v3166
    %3168 = vmatmul.f32.gmra.mxu0 %v3126
    %v3169 = vpop.f32.mrf.mxu0
    %v3170 = vadd.f32 0.0, %v3169
    %3171 = vmatmul.f32.gmra.mxu0 %v3127
    %v3172 = vpop.f32.mrf.mxu0
    %v3173 = vadd.f32 0.0, %v3172
    %3174 = vmatmul.f32.gmra.mxu0 %v3128
    %v3175 = vpop.f32.mrf.mxu0
    %v3176 = vadd.f32 0.0, %v3175
    %3177 = vmatmul.f32.gmra.mxu0 %v3129
    %v3178 = vpop.f32.mrf.mxu0
    %v3179 = vadd.f32 0.0, %v3178
    %3180 = vmatmul.f32.gmra.mxu0 %v3130
    %v3181 = vpop.f32.mrf.mxu0
    %v3182 = vadd.f32 0.0, %v3181
    %3183 = vmatmul.f32.gmra.mxu0 %v3131
    %v3184 = vpop.f32.mrf.mxu0
    %v3185 = vadd.f32 0.0, %v3184
    %3186 = vdwg.mxu0
    %v3187 = vadd.f32 %v2610, %v3167
    %v3188 = vadd.f32 %v2611, %v3170
    %v3189 = vadd.f32 %v2612, %v3173
    %v3190 = vadd.f32 %v2613, %v3176
    %v3191 = vadd.f32 %v2614, %v3179
    %v3192 = vadd.f32 %v2615, %v3182
    %v3193 = vadd.f32 %v2616, %v3185
    %v3194 = vperm.slane %v1787, 6
    %v3195 = vadd.f32 %v3187, %v3194
    %v3196 = vadd.f32 %v3188, %v3194
    %v3197 = vadd.f32 %v3189, %v3194
    %v3198 = vadd.f32 %v3190, %v3194
    %v3199 = vadd.f32 %v3191, %v3194
    %v3200 = vadd.f32 %v3192, %v3194
    %v3201 = vadd.f32 %v3193, %v3194
    %v3202 = vld [vmem:[%s5] sm:$0x3]
    %v3204 = vsel %vm956, %v3202, 0
    %3206 = vmatpush.msra.mxu0 0.0
    %3207 = vmatpush.msra.mxu0 0.0
    %3208 = vmatpush.msra.mxu0 0.0
    %3209 = vmatpush.msra.mxu0 0.0
    %3210 = vmatpush.msra.mxu0 0.0
    %3211 = vmatpush.msra.mxu0 0.0
    %3212 = vmatpush.msra.mxu0 0.0
    %3213 = vmatpush.msra.mxu0 0.0
    %3214 = vmatpush.msra.mxu0 0.0
    %3215 = vmatpush.msra.mxu0 %v3201
    %3216 = vmatpush.msra.mxu0 %v3200
    %3217 = vmatpush.msra.mxu0 %v3199
    %3218 = vmatpush.msra.mxu0 %v3198
    %3219 = vmatpush.msra.mxu0 %v3197
    %3220 = vmatpush.msra.mxu0 %v3196
    %3221 = vmatpush.msra.mxu0 %v3195
    %3222 = vmatmul.f32.gmra.mxu0 %v3204
    %v3223 = vpop.f32.mrf.mxu0
    %v3224 = vadd.f32 0.0, %v3223
    %3225 = vdwg.mxu0
    %vm3226 = vcmp.gt.f32.partialorder %v3224, 0.0
    %v3227 = vmin.f32 %v3224, 0.0
    %v3228 = vmul.f32 %v3227, 1.442695
    %v3229 = vpow.pop %v3228
    %v3230 = vsub.f32 %v3229, 1.0
    %v3231 = vsel %vm3226, %v3224, %v3230
    %v3232 = vld [vmem:[%s2 + $0xc0] sm:$0xff]
    %v3233 = vld [vmem:[%s2 + $0xc8] sm:$0xff]
    %v3234 = vld [vmem:[%s2 + $0xd0] sm:$0xff]
    %v3235 = vld [vmem:[%s2 + $0xd8] sm:$0xff]
    %v3237 = vsel %vm365, %v3231, 0
    %3239 = vmatpush.msra.mxu0 0.0
    %3240 = vmatpush.msra.mxu0 0.0
    %3241 = vmatpush.msra.mxu0 0.0
    %3242 = vmatpush.msra.mxu0 0.0
    %3243 = vmatpush.msra.mxu0 0.0
    %3244 = vmatpush.msra.mxu0 0.0
    %3245 = vmatpush.msra.mxu0 0.0
    %3246 = vmatpush.msra.mxu0 0.0
    %3247 = vmatpush.msra.mxu0 0.0
    %3248 = vmatpush.msra.mxu0 0.0
    %3249 = vmatpush.msra.mxu0 0.0
    %3250 = vmatpush.msra.mxu0 0.0
    %3251 = vmatpush.msra.mxu0 %v3235
    %3252 = vmatpush.msra.mxu0 %v3234
    %3253 = vmatpush.msra.mxu0 %v3233
    %3254 = vmatpush.msra.mxu0 %v3232
    %3255 = vmatmul.f32.gmra.mxu0 %v3237
    %v3256 = vpop.f32.mrf.mxu0
    %v3257 = vadd.f32 0.0, %v3256
    %3258 = vdwg.mxu0
    %v3259 = vperm.slane %v364, 7
    %v3260 = vadd.f32 %v3257, %v3259
    %vm3261 = vcmask 41984
    %3262 = vst.msk [vmem:[#allocation3] sm:$0x3] %vm3261, %v3260
    // Predicated region
    $region42: #{biot_classifier.1} parent=1 // pred_check
      _
    $region43: #{biot_classifier.1} parent=1 // pred_check_branch
      %3264 = sbr.rel (0) target = $region45
    $region44: #{biot_classifier.1} parent=1 // pred_region
      %3266 = vsyncadd [#allocation4], 0
      %s3268 = sshll.u32 [#allocation3], 4
      %s3269 = int_to_ptr.vmem [resolvable:$true] %s3268
      %s3270 = sshll.u32 %s10, 4
      %s3271 = int_to_ptr.hbm [resolvable:$true] %s3270
      %3273 = dma.vmem_to_hbm [thread:$0]  %s3269, 32, %s3271, [#allocation4]
    $region45: #{biot_classifier.1} parent=1 // pred_fallthru
      _
    // Predicated region
    $region46: #{biot_classifier.1} parent=1 // pred_check
      _
    $region47: #{biot_classifier.1} parent=1 // pred_check_branch
      %3275 = sbr.rel (0) target = $region49
    $region48: #{biot_classifier.1} parent=1 // pred_region
      %3277 = dma.done [#allocation4], 32
    $region49: #{biot_classifier.1} parent=1 // pred_fallthru
      _
    %3278 = vsyncpa [#allocation4], 1

</llo_original>
